<compile_context>
chip_gen: v7x
topology: tpu7x:2x2x1
jax: 0.10.0
libtpu: 0.0.40
codegen_flags: <defaults>
</compile_context>

<pallas_src>
import functools

import jax
import jax.numpy as jnp
from jax.experimental import pallas as pl
from jax.experimental.pallas import tpu as pltpu


# ----------------------------- config (small) -------------------------------
class SmallGemmaConfig:
    def __init__(self):
        self.vocab_size = 128
        self.max_position_embeddings = 16
        self.num_hidden_layers = 2
        self.num_attention_heads = 4
        self.num_key_value_heads = 4
        self.hidden_size = 32            # = num_heads * head_dim
        self.intermediate_size = 64
        self.head_dim = 8
        self.rms_norm_eps = 1e-6
        self.rope_theta = 10000.0


# ----------------------------- Pallas kernels --------------------------------
def _stack_kernel(eps, nh, hd, nb, seq,
                  h0_ref, ln1_ref, wqkv_ref, cos_ref, sin_ref, p_ref,
                  maskg_ref, wo_ref, ln2_ref, wg_ref, wu_ref, wd_ref,
                  out_ref):
    """All decoder layers; one grid step per layer, h resident in VMEM.

    out_ref / h0_ref: (B*S, H).  Weights are layer-stacked; this step's slice
    is selected by the BlockSpec index_map, so refs carry a leading dim of 1.
    """
    BS, H = out_ref.shape

    @pl.when(pl.program_id(0) == 0)
    def _init():
        out_ref[...] = h0_ref[...]

    h = out_ref[...]                                          # (BS, H)

    # ---- RMSNorm 1 (reference: x * rsqrt(mean(x^2)+eps) * w, raw weight) ----
    xn = h * jax.lax.rsqrt(jnp.mean(h * h, axis=-1, keepdims=True) + eps)
    xn = xn * ln1_ref[0]                                      # (1, H) broadcast

    # ---- fused head-major QKV projection: (3*nh, BS, hd) --------------------
    # 1/sqrt(hd) is already folded into the Q weight heads at init time.
    xb = jnp.broadcast_to(xn[None], (3 * nh, BS, H))
    qkv = jnp.einsum('gsk,gkd->gsd', xb, wqkv_ref[0],
                     preferred_element_type=jnp.float32)

    # ---- RoPE on q and k in one shot (interleaved even/odd pairs) -----------
    # rope(x) = x * cos + (x @ P_swap) * sin  with P_swap the signed pair-swap.
    qk = qkv[:2 * nh]                                         # (2nh, BS, hd)
    rot = jnp.dot(qk.reshape(2 * nh * BS, hd), p_ref[...],
                  preferred_element_type=jnp.float32).reshape(2 * nh, BS, hd)
    qk = qk * cos_ref[...][None] + rot * sin_ref[...][None]

    # ---- attention: one batched contraction over (head, batch) groups -------
    q = qk[:nh].reshape(nh * nb, seq, hd)                     # (G, S, hd)
    k = qk[nh:].reshape(nh * nb, seq, hd)
    v = qkv[2 * nh:].reshape(nh * nb, seq, hd)
    scores = jnp.einsum('gqd,gkd->gqk', q, k,
                        preferred_element_type=jnp.float32) + maskg_ref[...]
    m = jnp.max(scores, axis=-1, keepdims=True)
    p = jnp.exp(scores - m)
    p = p * pl.reciprocal(jnp.sum(p, axis=-1, keepdims=True), approx=True)
    ctx = jnp.einsum('gqk,gkd->gqd', p, v,
                     preferred_element_type=jnp.float32)      # (G, S, hd)

    # ---- o-proj with head-major weights + sum over heads (no lane concat) ---
    ctx = ctx.reshape(nh, BS, hd)
    attn = jnp.einsum('hsd,hdk->hsk', ctx, wo_ref[0],
                      preferred_element_type=jnp.float32)     # (nh, BS, H)
    h = h + jnp.sum(attn, axis=0)

    # ---- RMSNorm 2 + MLP (gelu-tanh gate * up -> down) + residual -----------
    x2 = h * jax.lax.rsqrt(jnp.mean(h * h, axis=-1, keepdims=True) + eps)
    x2 = x2 * ln2_ref[0]
    gate = jax.nn.gelu(jnp.dot(x2, wg_ref[0], preferred_element_type=jnp.float32),
                       approximate=True)
    up = jnp.dot(x2, wu_ref[0], preferred_element_type=jnp.float32)
    h = h + jnp.dot(gate * up, wd_ref[0], preferred_element_type=jnp.float32)

    out_ref[...] = h


def decoder_stack(h0, stack, cos_bs, sin_bs, rope_p, mask_g, cfg, nb, seq):
    """Run all decoder layers in a single pallas_call (grid over layers)."""
    BS, H = h0.shape
    nh, hd = cfg.num_attention_heads, cfg.head_dim
    I = cfg.intermediate_size
    L = cfg.num_hidden_layers
    G = nh * nb

    def inv(*shape):           # grid-invariant block (fetched once)
        return pl.BlockSpec(shape, lambda l: (0,) * len(shape))

    def per_layer(*rest):      # layer-stacked weight, pick slice l
        return pl.BlockSpec((1,) + rest, lambda l: (l,) + (0,) * len(rest))

    flops_layer = (2 * BS * H * 3 * H                 # qkv
                   + 2 * (2 * nh * BS) * hd * hd      # rope pair-swap matmul
                   + 2 * G * seq * seq * hd * 2       # scores + ctx
                   + 2 * nh * BS * hd * H             # o-proj
                   + 2 * BS * H * I * 2               # gate + up
                   + 2 * BS * I * H)                  # down
    trans_layer = G * seq * seq + BS * I + 2 * BS
    bytes_layer = 4 * (3 * nh * H * hd + nh * hd * H + 2 * H * I + I * H + 2 * H)

    kern = functools.partial(_stack_kernel, cfg.rms_norm_eps, nh, hd, nb, seq)

    return pl.pallas_call(
        kern,
        out_shape=jax.ShapeDtypeStruct((BS, H), jnp.float32),
        grid=(L,),
        in_specs=[
            inv(BS, H),                       # h0 (read only at layer 0)
            per_layer(1, H),                  # ln1      (L, 1, H)
            per_layer(3 * nh, H, hd),         # w_qkv    (L, 3nh, H, hd), head-major
            inv(BS, hd), inv(BS, hd),         # rope cos / sin, per token row
            inv(hd, hd),                      # rope signed pair-swap matrix
            inv(G, seq, seq),                 # additive mask per (head, batch)
            per_layer(nh, hd, H),             # w_o      (L, nh, hd, H), head-major
            per_layer(1, H),                  # ln2
            per_layer(H, I), per_layer(H, I), per_layer(I, H),   # gate / up / down
        ],
        out_specs=pl.BlockSpec((BS, H), lambda l: (0, 0)),     # resident across layers
        input_output_aliases={0: 0},
        compiler_params=pltpu.CompilerParams(
            dimension_semantics=("arbitrary",)),
        cost_estimate=pl.CostEstimate(
            flops=L * flops_layer,
            transcendentals=L * trans_layer,
            bytes_accessed=4 * (2 * BS * H + 2 * BS * hd + hd * hd + G * seq * seq)
                           + L * bytes_layer),
    )(h0, stack["ln1"], stack["wqkv"], cos_bs, sin_bs, rope_p, mask_g,
      stack["wo"], stack["ln2"], stack["wg"], stack["wu"], stack["wd"])


def _final_kernel(eps, h_ref, w_ref, embt_ref, o_ref):
    h = h_ref[...]                                            # (M, H)
    hn = h * jax.lax.rsqrt(jnp.mean(h * h, axis=-1, keepdims=True) + eps)
    hn = hn * w_ref[...]
    # Embedding was pre-transposed outside to (H, V): natural (K, N) MXU RHS,
    # lane-dense (multiple-of-128) output stores.
    o_ref[...] = jnp.dot(hn, embt_ref[...], preferred_element_type=jnp.float32)


def final_norm_logits(h2d, w, emb_t, eps):
    M, H = h2d.shape
    V = emb_t.shape[1]
    return pl.pallas_call(
        functools.partial(_final_kernel, eps),
        out_shape=jax.ShapeDtypeStruct((M, V), jnp.float32),
        grid=(1,),
        in_specs=[pl.BlockSpec((M, H), lambda i: (0, 0)),
                  pl.BlockSpec((1, H), lambda i: (0, 0)),
                  pl.BlockSpec((H, V), lambda i: (0, 0))],
        out_specs=pl.BlockSpec((M, V), lambda i: (0, 0)),
        cost_estimate=pl.CostEstimate(
            flops=2 * M * H * V, transcendentals=M,
            bytes_accessed=4 * (M * H + H * V + M * V + H)),
    )(h2d, w.reshape(1, H), emb_t)


# ----------------------------- forward (JAX glue) -----------------------------
def gemma_forward(params, input_ids, mask, cfg):
    B, S = input_ids.shape
    H = cfg.hidden_size
    nh, hd = cfg.num_attention_heads, cfg.head_dim
    V = cfg.vocab_size

    emb = params["embed"]
    # TODO(synk): token-id embedding gather stays in plain JAX (data-dependent
    # row gather has no clean rectangular-BlockSpec Pallas equivalent here).
    h = jnp.take(emb, input_ids, axis=0) * (float(H) ** 0.5)       # (B, S, H)
    h = h.reshape(B * S, H)

    # RoPE tables expanded per token row (row = b*S + s), small & layer-invariant.
    cos_bs = jnp.tile(params["rope_cos"][:S], (B, 1))               # (B*S, hd)
    sin_bs = jnp.tile(params["rope_sin"][:S], (B, 1))

    # Additive mask broadcast to per-(head, batch) groups, matching the kernel's
    # (nh*B, S, S) score layout.  Honors per-example masks if provided.
    mask4 = jnp.broadcast_to(mask.astype(jnp.float32), (B, nh, S, S))
    mask_g = jnp.transpose(mask4, (1, 0, 2, 3)).reshape(nh * B, S, S)

    h = decoder_stack(h, params["stack"], cos_bs, sin_bs, params["rope_p"],
                      mask_g, cfg, B, S)

    logits = final_norm_logits(h, params["final_norm"], emb.T, cfg.rms_norm_eps)
    return logits.reshape(B, S, V)


# ----------------------------- parameter init --------------------------------
def init_params(cfg, key):
    H, I = cfg.hidden_size, cfg.intermediate_size
    V = cfg.vocab_size
    nh, hd, L = cfg.num_attention_heads, cfg.head_dim, cfg.num_hidden_layers

    def nrm(k, shape, std=0.02):
        return jax.random.normal(k, shape, dtype=jnp.float32) * std

    k_emb, k_layers = jax.random.split(key)
    params = {
        "embed": nrm(k_emb, (V, H)),
        "final_norm": jnp.ones((H,), jnp.float32),
    }

    # Rotary tables (interleaved-pair convention).  The reference rounds
    # cos/sin to float16 -> reproduce that rounding, then compute in f32.
    end = cfg.max_position_embeddings * 2
    inv_freq = 1.0 / (cfg.rope_theta ** (jnp.arange(0, hd, 2, dtype=jnp.float32) / hd))
    t = jnp.arange(end, dtype=jnp.float32)
    f = jnp.outer(t, inv_freq)                                      # (end, hd//2)
    fr = jnp.cos(f).astype(jnp.float16).astype(jnp.float32)
    fi = jnp.sin(f).astype(jnp.float16).astype(jnp.float32)
    params["rope_cos"] = jnp.repeat(fr, 2, axis=-1)                 # (end, hd)
    params["rope_sin"] = jnp.repeat(fi, 2, axis=-1)
    # Signed pair-swap matrix: (x @ P)[2i] = -x[2i+1], (x @ P)[2i+1] = x[2i].
    P = jnp.zeros((hd, hd), jnp.float32)
    ev = jnp.arange(0, hd, 2)
    od = ev + 1
    P = P.at[od, ev].set(-1.0).at[ev, od].set(1.0)
    params["rope_p"] = P

    scale = float(hd) ** -0.5
    ln1, ln2, wqkv, wo, wg, wu, wd = [], [], [], [], [], [], []
    keys = jax.random.split(k_layers, L)
    for li in range(L):
        lk = jax.random.split(keys[li], 5)
        # stored as (in, out) == torch weight.T so every proj is x @ w
        w_qkv = nrm(lk[0], (H, 3 * H))
        # head-major (3*nh, H, hd) with group index = qkv*nh + head;
        # fold the 1/sqrt(hd) attention scale into the Q heads.
        wq_h = w_qkv.reshape(H, 3, nh, hd).transpose(1, 2, 0, 3).reshape(3 * nh, H, hd)
        wq_h = wq_h.at[:nh].multiply(scale)
        w_o = nrm(lk[1], (H, H))                                    # (in, out)
        wo_h = w_o.reshape(nh, hd, H)                               # head-major
        wqkv.append(wq_h)
        wo.append(wo_h)
        wg.append(nrm(lk[2], (H, I)))
        wu.append(nrm(lk[3], (H, I)))
        wd.append(nrm(lk[4], (I, H)))
        ln1.append(jnp.ones((1, H), jnp.float32))
        ln2.append(jnp.ones((1, H), jnp.float32))

    params["stack"] = {
        "ln1": jnp.stack(ln1), "ln2": jnp.stack(ln2),
        "wqkv": jnp.stack(wqkv), "wo": jnp.stack(wo),
        "wg": jnp.stack(wg), "wu": jnp.stack(wu), "wd": jnp.stack(wd),
    }
    return params


# ----------------------------------- main -------------------------------------
if __name__ == "__main__":
    cfg = SmallGemmaConfig()
    B, S = 2, 8

    key = jax.random.PRNGKey(0)
    k_param, k_ids = jax.random.split(key)
    params = init_params(cfg, k_param)

    input_ids = jax.random.randint(k_ids, (B, S), 0, cfg.vocab_size,
                                   dtype=jnp.int32)
    # causal additive mask (1, 1, S, S): 0 on/below diagonal, -1e9 above
    causal = jnp.tril(jnp.ones((S, S), dtype=bool))
    mask = jnp.where(causal, 0.0, -1e9).astype(jnp.float32)[None, None]

    @jax.jit
    def fwd(params, input_ids, mask):
        return gemma_forward(params, input_ids, mask, cfg)

    logits = fwd(params, input_ids, mask)
    jax.block_until_ready(logits)
    assert logits.shape == (B, S, cfg.vocab_size)
    assert bool(jnp.all(jnp.isfinite(logits)))
    print("KERNEL_OK")
</pallas_src>

<mosaic_0001>
module attributes {stable_mosaic.version = 11 : i64} {
  func.func @_final_kernel(%arg0: i32, %arg1: memref<16x32xf32, #tpu.memory_space<vmem>>, %arg2: memref<1x32xf32, #tpu.memory_space<vmem>>, %arg3: memref<32x128xf32, #tpu.memory_space<vmem>>, %arg4: memref<16x128xf32, #tpu.memory_space<vmem>>) attributes {dimension_semantics = [#tpu.dimension_semantics<arbitrary>], iteration_bounds = array<i64: 1>, scalar_prefetch = 0 : i64, scratch_operands = 0 : i64, tpu.core_type = #tpu.core_type<tc>, window_params = [{pipeline_mode = #tpu.pipeline_mode<synchronous>, transform_indices = @transform_0, window_bounds = array<i64: 16, 32>}, {pipeline_mode = #tpu.pipeline_mode<synchronous>, transform_indices = @transform_1, window_bounds = array<i64: 1, 32>}, {pipeline_mode = #tpu.pipeline_mode<synchronous>, transform_indices = @transform_2, window_bounds = array<i64: 32, 128>}, {pipeline_mode = #tpu.pipeline_mode<synchronous>, transform_indices = @transform_3, window_bounds = array<i64: 16, 128>}]} {
    %c0 = arith.constant 0 : index
    %c0_0 = arith.constant 0 : index
    %0 = vector.load %arg1[%c0, %c0_0] : memref<16x32xf32, #tpu.memory_space<vmem>>, vector<16x32xf32>
    %1 = arith.mulf %0, %0 : vector<16x32xf32>
    %cst = arith.constant dense<0.000000e+00> : vector<16xf32>
    %2 = vector.multi_reduction <add>, %1, %cst [1] : vector<16x32xf32> to vector<16xf32>
    %3 = vector.shape_cast %2 : vector<16xf32> to vector<16x1xf32>
    %cst_1 = arith.constant 3.200000e+01 : f32
    %4 = vector.broadcast %cst_1 : f32 to vector<16x1xf32>
    %5 = arith.divf %3, %4 : vector<16x1xf32>
    %cst_2 = arith.constant 9.99999997E-7 : f32
    %6 = vector.broadcast %cst_2 : f32 to vector<16x1xf32>
    %7 = arith.addf %5, %6 : vector<16x1xf32>
    %8 = math.rsqrt %7 : vector<16x1xf32>
    %9 = vector.broadcast %8 : vector<16x1xf32> to vector<16x32xf32>
    %10 = arith.mulf %0, %9 : vector<16x32xf32>
    %c0_3 = arith.constant 0 : index
    %c0_4 = arith.constant 0 : index
    %11 = vector.load %arg2[%c0_3, %c0_4] : memref<1x32xf32, #tpu.memory_space<vmem>>, vector<1x32xf32>
    %12 = vector.broadcast %11 : vector<1x32xf32> to vector<16x32xf32>
    %13 = arith.mulf %10, %12 : vector<16x32xf32>
    %c0_5 = arith.constant 0 : index
    %c0_6 = arith.constant 0 : index
    %14 = vector.load %arg3[%c0_5, %c0_6] : memref<32x128xf32, #tpu.memory_space<vmem>>, vector<32x128xf32>
    %cst_7 = arith.constant dense<0.000000e+00> : vector<16x128xf32>
    %15 = tpu.matmul %13, %14, %cst_7 {dimension_numbers = #tpu.dot_dimension_numbers<[1], [0], [0], [1], [0, 0, 1, 1], [], []>} : vector<16x32xf32>, vector<32x128xf32>, vector<16x128xf32> -> vector<16x128xf32>
    %c0_8 = arith.constant 0 : index
    %c0_9 = arith.constant 0 : index
    %16 = vector.load %arg4[%c0_8, %c0_9] : memref<16x128xf32, #tpu.memory_space<vmem>>, vector<16x128xf32>
    tpu.vector_store %arg4[%c0_8, %c0_9], %15 {strides = array<i32>} : memref<16x128xf32, #tpu.memory_space<vmem>>, vector<16x128xf32>,
    return
  }
  func.func @transform_0(%arg0: i32) -> (i32, i32) {
    %c0_i32 = arith.constant 0 : i32
    %c0_i32_0 = arith.constant 0 : i32
    %c0_i32_1 = arith.constant 0 : i32
    return %c0_i32, %c0_i32_0 : i32, i32
  }
  func.func @transform_1(%arg0: i32) -> (i32, i32) {
    %c0_i32 = arith.constant 0 : i32
    %c0_i32_0 = arith.constant 0 : i32
    %c0_i32_1 = arith.constant 0 : i32
    return %c0_i32, %c0_i32_0 : i32, i32
  }
  func.func @transform_2(%arg0: i32) -> (i32, i32) {
    %c0_i32 = arith.constant 0 : i32
    %c0_i32_0 = arith.constant 0 : i32
    %c0_i32_1 = arith.constant 0 : i32
    return %c0_i32, %c0_i32_0 : i32, i32
  }
  func.func @transform_3(%arg0: i32) -> (i32, i32) {
    %c0_i32 = arith.constant 0 : i32
    %c0_i32_0 = arith.constant 0 : i32
    %c0_i32_1 = arith.constant 0 : i32
    return %c0_i32, %c0_i32_0 : i32, i32
  }
}

module attributes {stable_mosaic.version = 11 : i64} {
  func.func @_stack_kernel(%arg0: i32, %arg1: memref<16x32xf32, #tpu.memory_space<vmem>>, %arg2: memref<1x1x32xf32, #tpu.memory_space<vmem>>, %arg3: memref<1x12x32x8xf32, #tpu.memory_space<vmem>>, %arg4: memref<16x8xf32, #tpu.memory_space<vmem>>, %arg5: memref<16x8xf32, #tpu.memory_space<vmem>>, %arg6: memref<8x8xf32, #tpu.memory_space<vmem>>, %arg7: memref<8x8x8xf32, #tpu.memory_space<vmem>>, %arg8: memref<1x4x8x32xf32, #tpu.memory_space<vmem>>, %arg9: memref<1x1x32xf32, #tpu.memory_space<vmem>>, %arg10: memref<1x32x64xf32, #tpu.memory_space<vmem>>, %arg11: memref<1x32x64xf32, #tpu.memory_space<vmem>>, %arg12: memref<1x64x32xf32, #tpu.memory_space<vmem>>, %arg13: memref<16x32xf32, #tpu.memory_space<vmem>>) attributes {dimension_semantics = [#tpu.dimension_semantics<arbitrary>], iteration_bounds = array<i64: 2>, scalar_prefetch = 0 : i64, scratch_operands = 0 : i64, tpu.core_type = #tpu.core_type<tc>, window_params = [{pipeline_mode = #tpu.pipeline_mode<synchronous>, transform_indices = @transform_0, window_bounds = array<i64: 16, 32>}, {transform_indices = @transform_1, window_bounds = array<i64: 1, 1, 32>}, {transform_indices = @transform_2, window_bounds = array<i64: 1, 12, 32, 8>}, {pipeline_mode = #tpu.pipeline_mode<synchronous>, transform_indices = @transform_3, window_bounds = array<i64: 16, 8>}, {pipeline_mode = #tpu.pipeline_mode<synchronous>, transform_indices = @transform_4, window_bounds = array<i64: 16, 8>}, {pipeline_mode = #tpu.pipeline_mode<synchronous>, transform_indices = @transform_5, window_bounds = array<i64: 8, 8>}, {pipeline_mode = #tpu.pipeline_mode<synchronous>, transform_indices = @transform_6, window_bounds = array<i64: 8, 8, 8>}, {transform_indices = @transform_7, window_bounds = array<i64: 1, 4, 8, 32>}, {transform_indices = @transform_8, window_bounds = array<i64: 1, 1, 32>}, {transform_indices = @transform_9, window_bounds = array<i64: 1, 32, 64>}, {transform_indices = @transform_10, window_bounds = array<i64: 1, 32, 64>}, {transform_indices = @transform_11, window_bounds = array<i64: 1, 64, 32>}, {pipeline_mode = #tpu.pipeline_mode<synchronous>, transform_indices = @transform_12, window_bounds = array<i64: 16, 32>}]} {
    %c0_i32 = arith.constant 0 : i32
    %0 = arith.cmpi eq, %arg0, %c0_i32 : i32
    %1 = arith.extui %0 : i1 to i32
    %c0_i32_0 = arith.constant 0 : i32
    %2 = arith.cmpi ne, %1, %c0_i32_0 : i32
    scf.if %2 {
      %c0_56 = arith.constant 0 : index
      %c0_57 = arith.constant 0 : index
      %103 = vector.load %arg1[%c0_56, %c0_57] : memref<16x32xf32, #tpu.memory_space<vmem>>, vector<16x32xf32>
      %c0_58 = arith.constant 0 : index
      %c0_59 = arith.constant 0 : index
      %104 = vector.load %arg13[%c0_58, %c0_59] : memref<16x32xf32, #tpu.memory_space<vmem>>, vector<16x32xf32>
      tpu.vector_store %arg13[%c0_58, %c0_59], %103 {strides = array<i32>} : memref<16x32xf32, #tpu.memory_space<vmem>>, vector<16x32xf32>,
    } else {
    }
    %c0 = arith.constant 0 : index
    %c0_1 = arith.constant 0 : index
    %3 = vector.load %arg13[%c0, %c0_1] : memref<16x32xf32, #tpu.memory_space<vmem>>, vector<16x32xf32>
    %4 = arith.mulf %3, %3 : vector<16x32xf32>
    %cst = arith.constant dense<0.000000e+00> : vector<16xf32>
    %5 = vector.multi_reduction <add>, %4, %cst [1] : vector<16x32xf32> to vector<16xf32>
    %6 = vector.shape_cast %5 : vector<16xf32> to vector<16x1xf32>
    %cst_2 = arith.constant 3.200000e+01 : f32
    %7 = vector.broadcast %cst_2 : f32 to vector<16x1xf32>
    %8 = arith.divf %6, %7 : vector<16x1xf32>
    %cst_3 = arith.constant 9.99999997E-7 : f32
    %9 = vector.broadcast %cst_3 : f32 to vector<16x1xf32>
    %10 = arith.addf %8, %9 : vector<16x1xf32>
    %11 = math.rsqrt %10 : vector<16x1xf32>
    %12 = vector.broadcast %11 : vector<16x1xf32> to vector<16x32xf32>
    %13 = arith.mulf %3, %12 : vector<16x32xf32>
    %c0_4 = arith.constant 0 : index
    %c0_5 = arith.constant 0 : index
    %c0_6 = arith.constant 0 : index
    %14 = vector.load %arg2[%c0_4, %c0_5, %c0_6] : memref<1x1x32xf32, #tpu.memory_space<vmem>>, vector<1x1x32xf32>
    %15 = vector.shape_cast %14 : vector<1x1x32xf32> to vector<1x32xf32>
    %16 = vector.broadcast %15 : vector<1x32xf32> to vector<16x32xf32>
    %17 = arith.mulf %13, %16 : vector<16x32xf32>
    %18 = vector.shape_cast %17 : vector<16x32xf32> to vector<1x16x32xf32>
    %19 = vector.shape_cast %18 : vector<1x16x32xf32> to vector<1x16x32xf32>
    %20 = vector.broadcast %19 : vector<1x16x32xf32> to vector<12x16x32xf32>
    %c0_7 = arith.constant 0 : index
    %c0_8 = arith.constant 0 : index
    %c0_9 = arith.constant 0 : index
    %c0_10 = arith.constant 0 : index
    %21 = vector.load %arg3[%c0_7, %c0_8, %c0_9, %c0_10] : memref<1x12x32x8xf32, #tpu.memory_space<vmem>>, vector<1x12x32x8xf32>
    %22 = vector.shape_cast %21 : vector<1x12x32x8xf32> to vector<12x32x8xf32>
    "tpu.trace_start"() <{level = 10 : i32, message = "gsk,gkd->gsd"}> : () -> ()
    %cst_11 = arith.constant dense<0.000000e+00> : vector<12x16x8xf32>
    %23 = tpu.matmul %20, %22, %cst_11 {dimension_numbers = #tpu.dot_dimension_numbers<[2], [1], [1], [2], [0, 0, 0, 1, 1, 2], [0], [0]>} : vector<12x16x32xf32>, vector<12x32x8xf32>, vector<12x16x8xf32> -> vector<12x16x8xf32>
    "tpu.trace_stop"() : () -> ()
    %24 = vector.extract_strided_slice %23 {offsets = [0, 0, 0], sizes = [8, 16, 8], strides = [1, 1, 1]} : vector<12x16x8xf32> to vector<8x16x8xf32>
    %25 = vector.shape_cast %24 : vector<8x16x8xf32> to vector<128x8xf32>
    %c0_12 = arith.constant 0 : index
    %c0_13 = arith.constant 0 : index
    %26 = vector.load %arg6[%c0_12, %c0_13] : memref<8x8xf32, #tpu.memory_space<vmem>>, vector<8x8xf32>
    %cst_14 = arith.constant dense<0.000000e+00> : vector<128x8xf32>
    %27 = tpu.matmul %25, %26, %cst_14 {dimension_numbers = #tpu.dot_dimension_numbers<[1], [0], [0], [1], [0, 0, 1, 1], [], []>} : vector<128x8xf32>, vector<8x8xf32>, vector<128x8xf32> -> vector<128x8xf32>
    %28 = vector.shape_cast %27 : vector<128x8xf32> to vector<8x16x8xf32>
    %c0_15 = arith.constant 0 : index
    %c0_16 = arith.constant 0 : index
    %29 = vector.load %arg4[%c0_15, %c0_16] : memref<16x8xf32, #tpu.memory_space<vmem>>, vector<16x8xf32>
    %30 = vector.shape_cast %29 : vector<16x8xf32> to vector<1x16x8xf32>
    %31 = vector.broadcast %30 : vector<1x16x8xf32> to vector<8x16x8xf32>
    %32 = arith.mulf %24, %31 : vector<8x16x8xf32>
    %c0_17 = arith.constant 0 : index
    %c0_18 = arith.constant 0 : index
    %33 = vector.load %arg5[%c0_17, %c0_18] : memref<16x8xf32, #tpu.memory_space<vmem>>, vector<16x8xf32>
    %34 = vector.shape_cast %33 : vector<16x8xf32> to vector<1x16x8xf32>
    %35 = vector.broadcast %34 : vector<1x16x8xf32> to vector<8x16x8xf32>
    %36 = arith.mulf %28, %35 : vector<8x16x8xf32>
    %37 = arith.addf %32, %36 : vector<8x16x8xf32>
    %38 = vector.extract_strided_slice %37 {offsets = [0, 0, 0], sizes = [4, 16, 8], strides = [1, 1, 1]} : vector<8x16x8xf32> to vector<4x16x8xf32>
    %39 = vector.shape_cast %38 : vector<4x16x8xf32> to vector<8x8x8xf32>
    %40 = vector.extract_strided_slice %37 {offsets = [4, 0, 0], sizes = [4, 16, 8], strides = [1, 1, 1]} : vector<8x16x8xf32> to vector<4x16x8xf32>
    %41 = vector.shape_cast %40 : vector<4x16x8xf32> to vector<8x8x8xf32>
    %42 = vector.extract_strided_slice %23 {offsets = [8, 0, 0], sizes = [4, 16, 8], strides = [1, 1, 1]} : vector<12x16x8xf32> to vector<4x16x8xf32>
    %43 = vector.shape_cast %42 : vector<4x16x8xf32> to vector<8x8x8xf32>
    "tpu.trace_start"() <{level = 10 : i32, message = "gqd,gkd->gqk"}> : () -> ()
    %cst_19 = arith.constant dense<0.000000e+00> : vector<8x8x8xf32>
    %44 = tpu.matmul %39, %41, %cst_19 {dimension_numbers = #tpu.dot_dimension_numbers<[2], [2], [1], [1], [0, 0, 0, 1, 1, 1], [0], [0]>} : vector<8x8x8xf32>, vector<8x8x8xf32>, vector<8x8x8xf32> -> vector<8x8x8xf32>
    "tpu.trace_stop"() : () -> ()
    %c0_20 = arith.constant 0 : index
    %c0_21 = arith.constant 0 : index
    %c0_22 = arith.constant 0 : index
    %45 = vector.load %arg7[%c0_20, %c0_21, %c0_22] : memref<8x8x8xf32, #tpu.memory_space<vmem>>, vector<8x8x8xf32>
    %46 = arith.addf %44, %45 : vector<8x8x8xf32>
    %cst_23 = arith.constant dense<0xFF800000> : vector<8x8xf32>
    %47 = vector.multi_reduction <maximumf>, %46, %cst_23 [2] : vector<8x8x8xf32> to vector<8x8xf32>
    %48 = vector.shape_cast %47 : vector<8x8xf32> to vector<8x8x1xf32>
    %49 = vector.broadcast %48 : vector<8x8x1xf32> to vector<8x8x8xf32>
    %50 = arith.subf %46, %49 : vector<8x8x8xf32>
    %51 = math.exp %50 : vector<8x8x8xf32>
    %cst_24 = arith.constant dense<0.000000e+00> : vector<8x8xf32>
    %52 = vector.multi_reduction <add>, %51, %cst_24 [2] : vector<8x8x8xf32> to vector<8x8xf32>
    %53 = vector.shape_cast %52 : vector<8x8xf32> to vector<8x8x1xf32>
    %54 = tpu.reciprocal %53 {approx = true} : vector<8x8x1xf32> -> vector<8x8x1xf32>
    %55 = vector.broadcast %54 : vector<8x8x1xf32> to vector<8x8x8xf32>
    %56 = arith.mulf %51, %55 : vector<8x8x8xf32>
    "tpu.trace_start"() <{level = 10 : i32, message = "gqk,gkd->gqd"}> : () -> ()
    %cst_25 = arith.constant dense<0.000000e+00> : vector<8x8x8xf32>
    %57 = tpu.matmul %56, %43, %cst_25 {dimension_numbers = #tpu.dot_dimension_numbers<[2], [1], [1], [2], [0, 0, 0, 1, 1, 2], [0], [0]>} : vector<8x8x8xf32>, vector<8x8x8xf32>, vector<8x8x8xf32> -> vector<8x8x8xf32>
    "tpu.trace_stop"() : () -> ()
    %58 = vector.shape_cast %57 : vector<8x8x8xf32> to vector<4x16x8xf32>
    %c0_26 = arith.constant 0 : index
    %c0_27 = arith.constant 0 : index
    %c0_28 = arith.constant 0 : index
    %c0_29 = arith.constant 0 : index
    %59 = vector.load %arg8[%c0_26, %c0_27, %c0_28, %c0_29] : memref<1x4x8x32xf32, #tpu.memory_space<vmem>>, vector<1x4x8x32xf32>
    %60 = vector.shape_cast %59 : vector<1x4x8x32xf32> to vector<4x8x32xf32>
    "tpu.trace_start"() <{level = 10 : i32, message = "hsd,hdk->hsk"}> : () -> ()
    %cst_30 = arith.constant dense<0.000000e+00> : vector<4x16x32xf32>
    %61 = tpu.matmul %58, %60, %cst_30 {dimension_numbers = #tpu.dot_dimension_numbers<[2], [1], [1], [2], [0, 0, 0, 1, 1, 2], [0], [0]>} : vector<4x16x8xf32>, vector<4x8x32xf32>, vector<4x16x32xf32> -> vector<4x16x32xf32>
    "tpu.trace_stop"() : () -> ()
    %cst_31 = arith.constant dense<0.000000e+00> : vector<16x32xf32>
    %62 = vector.multi_reduction <add>, %61, %cst_31 [0] : vector<4x16x32xf32> to vector<16x32xf32>
    %63 = arith.addf %3, %62 : vector<16x32xf32>
    %64 = arith.mulf %63, %63 : vector<16x32xf32>
    %cst_32 = arith.constant dense<0.000000e+00> : vector<16xf32>
    %65 = vector.multi_reduction <add>, %64, %cst_32 [1] : vector<16x32xf32> to vector<16xf32>
    %66 = vector.shape_cast %65 : vector<16xf32> to vector<16x1xf32>
    %cst_33 = arith.constant 3.200000e+01 : f32
    %67 = vector.broadcast %cst_33 : f32 to vector<16x1xf32>
    %68 = arith.divf %66, %67 : vector<16x1xf32>
    %cst_34 = arith.constant 9.99999997E-7 : f32
    %69 = vector.broadcast %cst_34 : f32 to vector<16x1xf32>
    %70 = arith.addf %68, %69 : vector<16x1xf32>
    %71 = math.rsqrt %70 : vector<16x1xf32>
    %72 = vector.broadcast %71 : vector<16x1xf32> to vector<16x32xf32>
    %73 = arith.mulf %63, %72 : vector<16x32xf32>
    %c0_35 = arith.constant 0 : index
    %c0_36 = arith.constant 0 : index
    %c0_37 = arith.constant 0 : index
    %74 = vector.load %arg9[%c0_35, %c0_36, %c0_37] : memref<1x1x32xf32, #tpu.memory_space<vmem>>, vector<1x1x32xf32>
    %75 = vector.shape_cast %74 : vector<1x1x32xf32> to vector<1x32xf32>
    %76 = vector.broadcast %75 : vector<1x32xf32> to vector<16x32xf32>
    %77 = arith.mulf %73, %76 : vector<16x32xf32>
    %c0_38 = arith.constant 0 : index
    %c0_39 = arith.constant 0 : index
    %c0_40 = arith.constant 0 : index
    %78 = vector.load %arg10[%c0_38, %c0_39, %c0_40] : memref<1x32x64xf32, #tpu.memory_space<vmem>>, vector<1x32x64xf32>
    %79 = vector.shape_cast %78 : vector<1x32x64xf32> to vector<32x64xf32>
    %cst_41 = arith.constant dense<0.000000e+00> : vector<16x64xf32>
    %80 = tpu.matmul %77, %79, %cst_41 {dimension_numbers = #tpu.dot_dimension_numbers<[1], [0], [0], [1], [0, 0, 1, 1], [], []>} : vector<16x32xf32>, vector<32x64xf32>, vector<16x64xf32> -> vector<16x64xf32>
    %81 = arith.mulf %80, %80 : vector<16x64xf32>
    %82 = arith.mulf %80, %81 : vector<16x64xf32>
    %cst_42 = arith.constant 4.471500e-02 : f32
    %83 = vector.broadcast %cst_42 : f32 to vector<16x64xf32>
    %84 = arith.mulf %83, %82 : vector<16x64xf32>
    %85 = arith.addf %80, %84 : vector<16x64xf32>
    %cst_43 = arith.constant 0.797884583 : f32
    %86 = vector.broadcast %cst_43 : f32 to vector<16x64xf32>
    %87 = arith.mulf %86, %85 : vector<16x64xf32>
    %88 = math.tanh %87 : vector<16x64xf32>
    %cst_44 = arith.constant 1.000000e+00 : f32
    %89 = vector.broadcast %cst_44 : f32 to vector<16x64xf32>
    %90 = arith.addf %89, %88 : vector<16x64xf32>
    %cst_45 = arith.constant 5.000000e-01 : f32
    %91 = vector.broadcast %cst_45 : f32 to vector<16x64xf32>
    %92 = arith.mulf %91, %90 : vector<16x64xf32>
    %93 = arith.mulf %80, %92 : vector<16x64xf32>
    %c0_46 = arith.constant 0 : index
    %c0_47 = arith.constant 0 : index
    %c0_48 = arith.constant 0 : index
    %94 = vector.load %arg11[%c0_46, %c0_47, %c0_48] : memref<1x32x64xf32, #tpu.memory_space<vmem>>, vector<1x32x64xf32>
    %95 = vector.shape_cast %94 : vector<1x32x64xf32> to vector<32x64xf32>
    %cst_49 = arith.constant dense<0.000000e+00> : vector<16x64xf32>
    %96 = tpu.matmul %77, %95, %cst_49 {dimension_numbers = #tpu.dot_dimension_numbers<[1], [0], [0], [1], [0, 0, 1, 1], [], []>} : vector<16x32xf32>, vector<32x64xf32>, vector<16x64xf32> -> vector<16x64xf32>
    %97 = arith.mulf %93, %96 : vector<16x64xf32>
    %c0_50 = arith.constant 0 : index
    %c0_51 = arith.constant 0 : index
    %c0_52 = arith.constant 0 : index
    %98 = vector.load %arg12[%c0_50, %c0_51, %c0_52] : memref<1x64x32xf32, #tpu.memory_space<vmem>>, vector<1x64x32xf32>
    %99 = vector.shape_cast %98 : vector<1x64x32xf32> to vector<64x32xf32>
    %cst_53 = arith.constant dense<0.000000e+00> : vector<16x32xf32>
    %100 = tpu.matmul %97, %99, %cst_53 {dimension_numbers = #tpu.dot_dimension_numbers<[1], [0], [0], [1], [0, 0, 1, 1], [], []>} : vector<16x64xf32>, vector<64x32xf32>, vector<16x32xf32> -> vector<16x32xf32>
    %101 = arith.addf %63, %100 : vector<16x32xf32>
    %c0_54 = arith.constant 0 : index
    %c0_55 = arith.constant 0 : index
    %102 = vector.load %arg13[%c0_54, %c0_55] : memref<16x32xf32, #tpu.memory_space<vmem>>, vector<16x32xf32>
    tpu.vector_store %arg13[%c0_54, %c0_55], %101 {strides = array<i32>} : memref<16x32xf32, #tpu.memory_space<vmem>>, vector<16x32xf32>,
    return
  }
  func.func @transform_0(%arg0: i32) -> (i32, i32) {
    %c0_i32 = arith.constant 0 : i32
    %c0_i32_0 = arith.constant 0 : i32
    %c0_i32_1 = arith.constant 0 : i32
    return %c0_i32, %c0_i32_0 : i32, i32
  }
  func.func @transform_1(%arg0: i32) -> (i32, i32, i32) {
    %c0_i32 = arith.constant 0 : i32
    %c0_i32_0 = arith.constant 0 : i32
    %c0_i32_1 = arith.constant 0 : i32
    return %arg0, %c0_i32, %c0_i32_0 : i32, i32, i32
  }
  func.func @transform_2(%arg0: i32) -> (i32, i32, i32, i32) {
    %c0_i32 = arith.constant 0 : i32
    %c0_i32_0 = arith.constant 0 : i32
    %c0_i32_1 = arith.constant 0 : i32
    %c0_i32_2 = arith.constant 0 : i32
    return %arg0, %c0_i32, %c0_i32_0, %c0_i32_1 : i32, i32, i32, i32
  }
  func.func @transform_3(%arg0: i32) -> (i32, i32) {
    %c0_i32 = arith.constant 0 : i32
    %c0_i32_0 = arith.constant 0 : i32
    %c0_i32_1 = arith.constant 0 : i32
    return %c0_i32, %c0_i32_0 : i32, i32
  }
  func.func @transform_4(%arg0: i32) -> (i32, i32) {
    %c0_i32 = arith.constant 0 : i32
    %c0_i32_0 = arith.constant 0 : i32
    %c0_i32_1 = arith.constant 0 : i32
    return %c0_i32, %c0_i32_0 : i32, i32
  }
  func.func @transform_5(%arg0: i32) -> (i32, i32) {
    %c0_i32 = arith.constant 0 : i32
    %c0_i32_0 = arith.constant 0 : i32
    %c0_i32_1 = arith.constant 0 : i32
    return %c0_i32, %c0_i32_0 : i32, i32
  }
  func.func @transform_6(%arg0: i32) -> (i32, i32, i32) {
    %c0_i32 = arith.constant 0 : i32
    %c0_i32_0 = arith.constant 0 : i32
    %c0_i32_1 = arith.constant 0 : i32
    %c0_i32_2 = arith.constant 0 : i32
    return %c0_i32, %c0_i32_0, %c0_i32_1 : i32, i32, i32
  }
  func.func @transform_7(%arg0: i32) -> (i32, i32, i32, i32) {
    %c0_i32 = arith.constant 0 : i32
    %c0_i32_0 = arith.constant 0 : i32
    %c0_i32_1 = arith.constant 0 : i32
    %c0_i32_2 = arith.constant 0 : i32
    return %arg0, %c0_i32, %c0_i32_0, %c0_i32_1 : i32, i32, i32, i32
  }
  func.func @transform_8(%arg0: i32) -> (i32, i32, i32) {
    %c0_i32 = arith.constant 0 : i32
    %c0_i32_0 = arith.constant 0 : i32
    %c0_i32_1 = arith.constant 0 : i32
    return %arg0, %c0_i32, %c0_i32_0 : i32, i32, i32
  }
  func.func @transform_9(%arg0: i32) -> (i32, i32, i32) {
    %c0_i32 = arith.constant 0 : i32
    %c0_i32_0 = arith.constant 0 : i32
    %c0_i32_1 = arith.constant 0 : i32
    return %arg0, %c0_i32, %c0_i32_0 : i32, i32, i32
  }
  func.func @transform_10(%arg0: i32) -> (i32, i32, i32) {
    %c0_i32 = arith.constant 0 : i32
    %c0_i32_0 = arith.constant 0 : i32
    %c0_i32_1 = arith.constant 0 : i32
    return %arg0, %c0_i32, %c0_i32_0 : i32, i32, i32
  }
  func.func @transform_11(%arg0: i32) -> (i32, i32, i32) {
    %c0_i32 = arith.constant 0 : i32
    %c0_i32_0 = arith.constant 0 : i32
    %c0_i32_1 = arith.constant 0 : i32
    return %arg0, %c0_i32, %c0_i32_0 : i32, i32, i32
  }
  func.func @transform_12(%arg0: i32) -> (i32, i32) {
    %c0_i32 = arith.constant 0 : i32
    %c0_i32_0 = arith.constant 0 : i32
    %c0_i32_1 = arith.constant 0 : i32
    return %c0_i32, %c0_i32_0 : i32, i32
  }
}

</mosaic_0001>

<llo_original>
// kernel: fwd.3
$region0: #{fwd.3}
  #allocation0 [shape = 'u32[]', space=smem, size = 0x4, offset = 0x4, fixed_abs, tag = 'smem constant byte address 0x4 - core index']
  #allocation1 [shape = 'u32[144,128]{1,0:T(1,128)}', space=vmem, size = 0x12000, scoped, tag = 'internal scratch']
  %s0 = inlined_call_operand.vmem [shape: f32[16,32], index: 0, kind: input, shape index: {}]
  %s1 = inlined_call_operand.vmem [shape: f32[1,32], index: 1, kind: input, shape index: {}]
  %s2 = inlined_call_operand.vmem [shape: f32[32,128], index: 2, kind: input, shape index: {}]
  %s3 = inlined_call_operand.hbm [shape: f32[16,128], index: 3, kind: output, shape index: {}]
  %s4 = sld [smem:[#allocation0]]
  $region22: #{fwd.3} parent=0
    _
  %s6 = ssub.s32 1, %s4
  %s7 = scalar_select 0, %s6, %s4
  $region1: #{fwd.3} parent=0
    #allocation2 [shape = 'u8[8192]{0}', space=vmem, size = 0x2000, scoped, tag = 'output window, operand 0, single buffered']
    #allocation3 [shape = 's32[1]{0}', space=sflag, size = 0x4, scoped, tag = 'scoped memory for fwd.3']
    %8 = vsyncpa [#allocation3], 0
    // Predicated region
    $region2: #{fwd.3} parent=1 // pred_check
      _
    $region3: #{fwd.3} parent=1 // pred_check_branch
      %10 = sbr.rel (0) target = $region5
    $region4: #{fwd.3} parent=1 // pred_region
      _
    $region5: #{fwd.3} parent=1 // pred_fallthru
      _
    // Predicated region
    $region6: #{fwd.3} parent=1 // pred_check
      _
    $region7: #{fwd.3} parent=1 // pred_check_branch
      %12 = sbr.rel (0) target = $region9
    $region8: #{fwd.3} parent=1 // pred_region
      _
    $region9: #{fwd.3} parent=1 // pred_fallthru
      _
    // Predicated region
    $region10: #{fwd.3} parent=1 // pred_check
      _
    $region11: #{fwd.3} parent=1 // pred_check_branch
      %14 = sbr.rel (0) target = $region13
    $region12: #{fwd.3} parent=1 // pred_region
      _
    $region13: #{fwd.3} parent=1 // pred_fallthru
      _
    %v15 = vld [vmem:[%s0] sm:$0xff]
    %v16 = vld [vmem:[%s0 + $0x8] sm:$0xff]
    %v17 = vmul.f32 %v15, %v15
    %v18 = vmul.f32 %v16, %v16
    %vm19 = vcmask 261120
    %v20 = vsel %vm19, %v17, 0.0
    %21 = vadd.xlane.f32.xlu0 %v20
    %v22 = vpop.xlane.xlu0 %21
    %v23 = vsel %vm19, %v18, 0.0
    %24 = vadd.xlane.f32.xlu0 %v23
    %v25 = vpop.xlane.xlu0 %24
    %v26 = vrcp.pop 32.0
    %v27 = vmul.f32 %v22, %v26
    %v28 = vmul.f32 %v25, %v26
    %v29 = vadd.f32 %v27, 1e-06
    %v30 = vadd.f32 %v28, 1e-06
    %v31 = vrsqrt.pop %v29
    %v32 = vrsqrt.pop %v30
    %v33 = vmul.f32 %v15, %v31
    %v34 = vmul.f32 %v16, %v32
    %v35 = vld [vmem:[%s1] sm:$0x1]
    %v37 = vlaneseq
    %v38 = vshrl.u32 %v37, 7
    %v39 = vsub.s32 0, %v38
    %v40 = vrot.slane %v35, %v39
    %v42 = vmul.f32 %v33, %v40
    %v43 = vmul.f32 %v34, %v40
    %v44 = vld [vmem:[%s2] sm:$0xff]
    %v45 = vld [vmem:[%s2 + $0x8] sm:$0xff]
    %v46 = vld [vmem:[%s2 + $0x10] sm:$0xff]
    %v47 = vld [vmem:[%s2 + $0x18] sm:$0xff]
    %v49 = vsel %vm19, %v42, 0
    %v52 = vsel %vm19, %v43, 0
    %54 = vmatprep.subr.mxu0 0.0
    %55 = vmatpush1.msra.mxu0 %v44
    %56 = vmatprep.subr.mxu0 0.0
    %57 = vmatpush1.msra.mxu0 %v45
    %58 = vmatprep.subr.mxu0 0.0
    %59 = vmatpush1.msra.mxu0 %v46
    %60 = vmatprep.subr.mxu0 0.0
    %61 = vmatpush1.msra.mxu0 %v47
    %62 = vmatprep.subr.mxu0 0.0
    %63 = vmatpush1.msra.mxu0 0.0
    %64 = vmatprep.subr.mxu0 0.0
    %65 = vmatpush1.msra.mxu0 0.0
    %66 = vmatprep.subr.mxu0 0.0
    %67 = vmatpush1.msra.mxu0 0.0
    %68 = vmatprep.subr.mxu0 0.0
    %69 = vmatpush1.msra.mxu0 0.0
    %70 = vmatprep.subr.mxu0 0.0
    %71 = vmatpush1.msra.mxu0 0.0
    %72 = vmatprep.subr.mxu0 0.0
    %73 = vmatpush1.msra.mxu0 0.0
    %74 = vmatprep.subr.mxu0 0.0
    %75 = vmatpush1.msra.mxu0 0.0
    %76 = vmatprep.subr.mxu0 0.0
    %77 = vmatpush1.msra.mxu0 0.0
    %78 = vmatprep.subr.mxu0 0.0
    %79 = vmatpush1.msra.mxu0 0.0
    %80 = vmatprep.subr.mxu0 0.0
    %81 = vmatpush1.msra.mxu0 0.0
    %82 = vmatprep.subr.mxu0 0.0
    %83 = vmatpush1.msra.mxu0 0.0
    %84 = vmatprep.subr.mxu0 0.0
    %85 = vmatpush1.msra.mxu0 0.0
    %86 = vmatprep.subr.mxu0 0.0
    %87 = vmatpush1.msra.mxu0 0.0
    %88 = vmatprep.subr.mxu0 0.0
    %89 = vmatpush1.msra.mxu0 0.0
    %90 = vmatprep.subr.mxu0 0.0
    %91 = vmatpush1.msra.mxu0 0.0
    %92 = vmatprep.subr.mxu0 0.0
    %93 = vmatpush1.msra.mxu0 0.0
    %94 = vmatprep.subr.mxu0 0.0
    %95 = vmatpush1.msra.mxu0 0.0
    %96 = vmatprep.subr.mxu0 0.0
    %97 = vmatpush1.msra.mxu0 0.0
    %98 = vmatprep.subr.mxu0 0.0
    %99 = vmatpush1.msra.mxu0 0.0
    %100 = vmatprep.subr.mxu0 0.0
    %101 = vmatpush1.msra.mxu0 0.0
    %102 = vmatprep.subr.mxu0 0.0
    %103 = vmatpush1.msra.mxu0 0.0
    %104 = vmatprep.subr.mxu0 0.0
    %105 = vmatpush1.msra.mxu0 0.0
    %106 = vmatprep.subr.mxu0 0.0
    %107 = vmatpush1.msra.mxu0 0.0
    %108 = vmatprep.subr.mxu0 0.0
    %109 = vmatpush1.msra.mxu0 0.0
    %110 = vmatprep.subr.mxu0 0.0
    %111 = vmatpush1.msra.mxu0 0.0
    %112 = vmatprep.subr.mxu0 0.0
    %113 = vmatpush1.msra.mxu0 0.0
    %114 = vmatprep.subr.mxu0 0.0
    %115 = vmatpush1.msra.mxu0 0.0
    %116 = vmatprep.subr.mxu0 0.0
    %117 = vmatpush1.msra.mxu0 0.0
    %118 = vmatprep.mubr.f32.mxu0 0.0
    %119 = vmatmul.mubr.f32.gmra.mrb[0].mxu0 %v49
    %v120 = vpop.f32.mrb[0].mxu0
    %v121 = vadd.f32 0.0, %v120
    %v122 = vpop.f32.mrb[0].mxu0
    %123 = vmatprep.mubr.f32.mxu0 0.0
    %124 = vmatmul.mubr.f32.gmra.mrb[0].mxu0 %v52
    %v125 = vpop.f32.mrb[0].mxu0
    %v126 = vadd.f32 0.0, %v125
    %v127 = vpop.f32.mrb[0].mxu0
    %128 = vdwg.mxu0
    %129 = vst [vmem:[#allocation2] sm:$0xff] %v121
    %130 = vst [vmem:[#allocation2 + $0x8] sm:$0xff] %v126
    // Predicated region
    $region14: #{fwd.3} parent=1 // pred_check
      _
    $region15: #{fwd.3} parent=1 // pred_check_branch
      %132 = sbr.rel (0) target = $region17
    $region16: #{fwd.3} parent=1 // pred_region
      %s134 = ssub.s32 256, 256
      %135 = vsyncadd [#allocation3], %s134
      %s136 = sshll.u32 [#allocation2], 4
      %s137 = int_to_ptr.vmem [resolvable:$true] %s136
      %142 = dma.vmem_to_hbm [thread:$0]  %s137, 256, %s3, [#allocation3], 128, 128, 8
    $region17: #{fwd.3} parent=1 // pred_fallthru
      _
    // Predicated region
    $region18: #{fwd.3} parent=1 // pred_check
      _
    $region19: #{fwd.3} parent=1 // pred_check_branch
      %144 = sbr.rel (0) target = $region21
    $region20: #{fwd.3} parent=1 // pred_region
      %145 = dma.done [#allocation3], 256
    $region21: #{fwd.3} parent=1 // pred_fallthru
      _
    %146 = vsyncpa [#allocation3], 1

// kernel: fwd.2
$region0: #{fwd.2}
  #allocation0 [shape = 'u32[]', space=smem, size = 0x4, offset = 0x4, fixed_abs, tag = 'smem constant byte address 0x4 - core index']
  #allocation1 [shape = 'u32[144,128]{1,0:T(1,128)}', space=vmem, size = 0x12000, scoped, tag = 'internal scratch']
  %s0 = inlined_call_operand.vmem [shape: f32[16,32], index: 0, kind: input, shape index: {}, may-alias: {0,12}]
  %s1 = inlined_call_operand.vmem [shape: f32[2,1,32], index: 1, kind: input, shape index: {}]
  %s2 = inlined_call_operand.vmem [shape: f32[2,12,32,8], index: 2, kind: input, shape index: {}]
  %s3 = inlined_call_operand.vmem [shape: f32[16,8], index: 3, kind: input, shape index: {}]
  %s4 = inlined_call_operand.vmem [shape: f32[16,8], index: 4, kind: input, shape index: {}]
  %s5 = inlined_call_operand.vmem [shape: f32[8,8], index: 5, kind: input, shape index: {}]
  %s6 = inlined_call_operand.vmem [shape: f32[8,8,8], index: 6, kind: input, shape index: {}]
  %s7 = inlined_call_operand.vmem [shape: f32[2,4,8,32], index: 7, kind: input, shape index: {}]
  %s8 = inlined_call_operand.vmem [shape: f32[2,1,32], index: 8, kind: input, shape index: {}]
  %s9 = inlined_call_operand.vmem [shape: f32[2,32,64], index: 9, kind: input, shape index: {}]
  %s10 = inlined_call_operand.vmem [shape: f32[2,32,64], index: 10, kind: input, shape index: {}]
  %s11 = inlined_call_operand.vmem [shape: f32[2,64,32], index: 11, kind: input, shape index: {}]
  %s12 = inlined_call_operand.vmem [shape: f32[16,32], index: 12, kind: output, shape index: {}, may-alias: {0,12}]
  %s13 = sld [smem:[#allocation0]]
  $region85: #{fwd.2} parent=0
    _
  %s15 = ssub.s32 1, %s13
  %s16 = scalar_select 0, %s15, %s13
  loop: start=0, step=1, limit=4
  $region2: #{fwd.2} parent=0 // loop_pre_header
    _
  $region3: #{fwd.2} parent=0 // loop_header
    %s18 = sphi 0, %s22
    %p19 = scmp.ge.s32.totalorder %s18, 4
    %s26 = sphi 0, %s26
    %s28 = sphi 0, %s26
    %s29 = sphi 0, %s28
    %s43 = sphi 0, %s29
    %s49 = sphi 0, %s51
    %s52 = sphi 0, %s49
    %s53 = sphi 0, %s52
    %s69 = sphi 0, %s53
    %s75 = sphi 0, %s77
    %s78 = sphi 0, %s75
    %s79 = sphi 0, %s78
    %s95 = sphi 0, %s79
    %s99 = sphi 0, %s99
    %s101 = sphi 0, %s99
    %s102 = sphi 0, %s101
    %s116 = sphi 0, %s102
    %s120 = sphi 0, %s120
    %s122 = sphi 0, %s120
    %s123 = sphi 0, %s122
    %s137 = sphi 0, %s123
    %s141 = sphi 0, %s141
    %s143 = sphi 0, %s141
    %s144 = sphi 0, %s143
    %s158 = sphi 0, %s144
    %s162 = sphi 0, %s162
    %s164 = sphi 0, %s162
    %s165 = sphi 0, %s164
    %s179 = sphi 0, %s165
    %s185 = sphi 0, %s187
    %s188 = sphi 0, %s185
    %s189 = sphi 0, %s188
    %s205 = sphi 0, %s189
    %s211 = sphi 0, %s213
    %s214 = sphi 0, %s211
    %s215 = sphi 0, %s214
    %s231 = sphi 0, %s215
    %s237 = sphi 0, %s239
    %s240 = sphi 0, %s237
    %s241 = sphi 0, %s240
    %s257 = sphi 0, %s241
    %s263 = sphi 0, %s265
    %s266 = sphi 0, %s263
    %s267 = sphi 0, %s266
    %s283 = sphi 0, %s267
    %s289 = sphi 0, %s291
    %s292 = sphi 0, %s289
    %s293 = sphi 0, %s292
    %s309 = sphi 0, %s293
    %s313 = sphi 0, %s313
    %s315 = sphi 0, %s313
    %s316 = sphi 0, %s315
    %s330 = sphi 0, %s316
  $region4: #{fwd.2} parent=0 // loop_header_branch
    %21 = sbr.rel (%p19) target = $region8
  $region5: #{fwd.2} parent=0 // loop_body
    %s23 = ssub.s32 %s18, 1
    %s24 = ssub.s32 %s18, 2
    %s25 = sadd.s32 %s18, 1
    %s27 = sadd.s32 %s26, 1
    %p30 = scmp.eq.s32.totalorder %s18, 1
    %p31 = scmp.ne.s32.totalorder %s26, %s28
    %p32 = scmp.eq.s32.totalorder %s18, 0
    %p33 = por %p31, %p32
    %p34 = scmp.ne.s32.totalorder %s26, %s28
    %p35 = scmp.eq.s32.totalorder %s23, 1
    %p36 = por %p34, %p35
    %p37 = scmp.ne.s32.totalorder %s28, %s29
    %p38 = scmp.eq.s32.totalorder %s23, 0
    %p39 = por %p37, %p38
    %p40 = scmp.ne.s32.totalorder %s28, %s29
    %p41 = scmp.eq.s32.totalorder %s24, 1
    %p42 = por %p40, %p41
    %p44 = scmp.ne.s32.totalorder %s29, %s43
    %p45 = scmp.eq.s32.totalorder %s24, 0
    %p46 = por %p44, %p45
    %s47 = ssub.s32 %s18, %s25
    %p48 = scmp.eq.s32.totalorder %s47, 0
    %s50 = sadd.s32 %s49, 1
    %s51 = scalar_select %p48, %s49, %s50
    %p54 = pneg %p48
    %p55 = scmp.eq.s32.totalorder %s18, 1
    %p56 = por %p54, %p55
    %p57 = scmp.ne.s32.totalorder %s49, %s52
    %p58 = scmp.eq.s32.totalorder %s18, 0
    %p59 = por %p57, %p58
    %p60 = scmp.ne.s32.totalorder %s49, %s52
    %p61 = scmp.eq.s32.totalorder %s23, 1
    %p62 = por %p60, %p61
    %p63 = scmp.ne.s32.totalorder %s52, %s53
    %p64 = scmp.eq.s32.totalorder %s23, 0
    %p65 = por %p63, %p64
    %p66 = scmp.ne.s32.totalorder %s52, %s53
    %p67 = scmp.eq.s32.totalorder %s24, 1
    %p68 = por %p66, %p67
    %p70 = scmp.ne.s32.totalorder %s53, %s69
    %p71 = scmp.eq.s32.totalorder %s24, 0
    %p72 = por %p70, %p71
    %s73 = ssub.s32 %s18, %s25
    %p74 = scmp.eq.s32.totalorder %s73, 0
    %s76 = sadd.s32 %s75, 1
    %s77 = scalar_select %p74, %s75, %s76
    %p80 = pneg %p74
    %p81 = scmp.eq.s32.totalorder %s18, 1
    %p82 = por %p80, %p81
    %p83 = scmp.ne.s32.totalorder %s75, %s78
    %p84 = scmp.eq.s32.totalorder %s18, 0
    %p85 = por %p83, %p84
    %p86 = scmp.ne.s32.totalorder %s75, %s78
    %p87 = scmp.eq.s32.totalorder %s23, 1
    %p88 = por %p86, %p87
    %p89 = scmp.ne.s32.totalorder %s78, %s79
    %p90 = scmp.eq.s32.totalorder %s23, 0
    %p91 = por %p89, %p90
    %p92 = scmp.ne.s32.totalorder %s78, %s79
    %p93 = scmp.eq.s32.totalorder %s24, 1
    %p94 = por %p92, %p93
    %p96 = scmp.ne.s32.totalorder %s79, %s95
    %p97 = scmp.eq.s32.totalorder %s24, 0
    %p98 = por %p96, %p97
    %s100 = sadd.s32 %s99, 1
    %p103 = scmp.eq.s32.totalorder %s18, 1
    %p104 = scmp.ne.s32.totalorder %s99, %s101
    %p105 = scmp.eq.s32.totalorder %s18, 0
    %p106 = por %p104, %p105
    %p107 = scmp.ne.s32.totalorder %s99, %s101
    %p108 = scmp.eq.s32.totalorder %s23, 1
    %p109 = por %p107, %p108
    %p110 = scmp.ne.s32.totalorder %s101, %s102
    %p111 = scmp.eq.s32.totalorder %s23, 0
    %p112 = por %p110, %p111
    %p113 = scmp.ne.s32.totalorder %s101, %s102
    %p114 = scmp.eq.s32.totalorder %s24, 1
    %p115 = por %p113, %p114
    %p117 = scmp.ne.s32.totalorder %s102, %s116
    %p118 = scmp.eq.s32.totalorder %s24, 0
    %p119 = por %p117, %p118
    %s121 = sadd.s32 %s120, 1
    %p124 = scmp.eq.s32.totalorder %s18, 1
    %p125 = scmp.ne.s32.totalorder %s120, %s122
    %p126 = scmp.eq.s32.totalorder %s18, 0
    %p127 = por %p125, %p126
    %p128 = scmp.ne.s32.totalorder %s120, %s122
    %p129 = scmp.eq.s32.totalorder %s23, 1
    %p130 = por %p128, %p129
    %p131 = scmp.ne.s32.totalorder %s122, %s123
    %p132 = scmp.eq.s32.totalorder %s23, 0
    %p133 = por %p131, %p132
    %p134 = scmp.ne.s32.totalorder %s122, %s123
    %p135 = scmp.eq.s32.totalorder %s24, 1
    %p136 = por %p134, %p135
    %p138 = scmp.ne.s32.totalorder %s123, %s137
    %p139 = scmp.eq.s32.totalorder %s24, 0
    %p140 = por %p138, %p139
    %s142 = sadd.s32 %s141, 1
    %p145 = scmp.eq.s32.totalorder %s18, 1
    %p146 = scmp.ne.s32.totalorder %s141, %s143
    %p147 = scmp.eq.s32.totalorder %s18, 0
    %p148 = por %p146, %p147
    %p149 = scmp.ne.s32.totalorder %s141, %s143
    %p150 = scmp.eq.s32.totalorder %s23, 1
    %p151 = por %p149, %p150
    %p152 = scmp.ne.s32.totalorder %s143, %s144
    %p153 = scmp.eq.s32.totalorder %s23, 0
    %p154 = por %p152, %p153
    %p155 = scmp.ne.s32.totalorder %s143, %s144
    %p156 = scmp.eq.s32.totalorder %s24, 1
    %p157 = por %p155, %p156
    %p159 = scmp.ne.s32.totalorder %s144, %s158
    %p160 = scmp.eq.s32.totalorder %s24, 0
    %p161 = por %p159, %p160
    %s163 = sadd.s32 %s162, 1
    %p166 = scmp.eq.s32.totalorder %s18, 1
    %p167 = scmp.ne.s32.totalorder %s162, %s164
    %p168 = scmp.eq.s32.totalorder %s18, 0
    %p169 = por %p167, %p168
    %p170 = scmp.ne.s32.totalorder %s162, %s164
    %p171 = scmp.eq.s32.totalorder %s23, 1
    %p172 = por %p170, %p171
    %p173 = scmp.ne.s32.totalorder %s164, %s165
    %p174 = scmp.eq.s32.totalorder %s23, 0
    %p175 = por %p173, %p174
    %p176 = scmp.ne.s32.totalorder %s164, %s165
    %p177 = scmp.eq.s32.totalorder %s24, 1
    %p178 = por %p176, %p177
    %p180 = scmp.ne.s32.totalorder %s165, %s179
    %p181 = scmp.eq.s32.totalorder %s24, 0
    %p182 = por %p180, %p181
    %s183 = ssub.s32 %s18, %s25
    %p184 = scmp.eq.s32.totalorder %s183, 0
    %s186 = sadd.s32 %s185, 1
    %s187 = scalar_select %p184, %s185, %s186
    %p190 = pneg %p184
    %p191 = scmp.eq.s32.totalorder %s18, 1
    %p192 = por %p190, %p191
    %p193 = scmp.ne.s32.totalorder %s185, %s188
    %p194 = scmp.eq.s32.totalorder %s18, 0
    %p195 = por %p193, %p194
    %p196 = scmp.ne.s32.totalorder %s185, %s188
    %p197 = scmp.eq.s32.totalorder %s23, 1
    %p198 = por %p196, %p197
    %p199 = scmp.ne.s32.totalorder %s188, %s189
    %p200 = scmp.eq.s32.totalorder %s23, 0
    %p201 = por %p199, %p200
    %p202 = scmp.ne.s32.totalorder %s188, %s189
    %p203 = scmp.eq.s32.totalorder %s24, 1
    %p204 = por %p202, %p203
    %p206 = scmp.ne.s32.totalorder %s189, %s205
    %p207 = scmp.eq.s32.totalorder %s24, 0
    %p208 = por %p206, %p207
    %s209 = ssub.s32 %s18, %s25
    %p210 = scmp.eq.s32.totalorder %s209, 0
    %s212 = sadd.s32 %s211, 1
    %s213 = scalar_select %p210, %s211, %s212
    %p216 = pneg %p210
    %p217 = scmp.eq.s32.totalorder %s18, 1
    %p218 = por %p216, %p217
    %p219 = scmp.ne.s32.totalorder %s211, %s214
    %p220 = scmp.eq.s32.totalorder %s18, 0
    %p221 = por %p219, %p220
    %p222 = scmp.ne.s32.totalorder %s211, %s214
    %p223 = scmp.eq.s32.totalorder %s23, 1
    %p224 = por %p222, %p223
    %p225 = scmp.ne.s32.totalorder %s214, %s215
    %p226 = scmp.eq.s32.totalorder %s23, 0
    %p227 = por %p225, %p226
    %p228 = scmp.ne.s32.totalorder %s214, %s215
    %p229 = scmp.eq.s32.totalorder %s24, 1
    %p230 = por %p228, %p229
    %p232 = scmp.ne.s32.totalorder %s215, %s231
    %p233 = scmp.eq.s32.totalorder %s24, 0
    %p234 = por %p232, %p233
    %s235 = ssub.s32 %s18, %s25
    %p236 = scmp.eq.s32.totalorder %s235, 0
    %s238 = sadd.s32 %s237, 1
    %s239 = scalar_select %p236, %s237, %s238
    %p242 = pneg %p236
    %p243 = scmp.eq.s32.totalorder %s18, 1
    %p244 = por %p242, %p243
    %p245 = scmp.ne.s32.totalorder %s237, %s240
    %p246 = scmp.eq.s32.totalorder %s18, 0
    %p247 = por %p245, %p246
    %p248 = scmp.ne.s32.totalorder %s237, %s240
    %p249 = scmp.eq.s32.totalorder %s23, 1
    %p250 = por %p248, %p249
    %p251 = scmp.ne.s32.totalorder %s240, %s241
    %p252 = scmp.eq.s32.totalorder %s23, 0
    %p253 = por %p251, %p252
    %p254 = scmp.ne.s32.totalorder %s240, %s241
    %p255 = scmp.eq.s32.totalorder %s24, 1
    %p256 = por %p254, %p255
    %p258 = scmp.ne.s32.totalorder %s241, %s257
    %p259 = scmp.eq.s32.totalorder %s24, 0
    %p260 = por %p258, %p259
    %s261 = ssub.s32 %s18, %s25
    %p262 = scmp.eq.s32.totalorder %s261, 0
    %s264 = sadd.s32 %s263, 1
    %s265 = scalar_select %p262, %s263, %s264
    %p268 = pneg %p262
    %p269 = scmp.eq.s32.totalorder %s18, 1
    %p270 = por %p268, %p269
    %p271 = scmp.ne.s32.totalorder %s263, %s266
    %p272 = scmp.eq.s32.totalorder %s18, 0
    %p273 = por %p271, %p272
    %p274 = scmp.ne.s32.totalorder %s263, %s266
    %p275 = scmp.eq.s32.totalorder %s23, 1
    %p276 = por %p274, %p275
    %p277 = scmp.ne.s32.totalorder %s266, %s267
    %p278 = scmp.eq.s32.totalorder %s23, 0
    %p279 = por %p277, %p278
    %p280 = scmp.ne.s32.totalorder %s266, %s267
    %p281 = scmp.eq.s32.totalorder %s24, 1
    %p282 = por %p280, %p281
    %p284 = scmp.ne.s32.totalorder %s267, %s283
    %p285 = scmp.eq.s32.totalorder %s24, 0
    %p286 = por %p284, %p285
    %s287 = ssub.s32 %s18, %s25
    %p288 = scmp.eq.s32.totalorder %s287, 0
    %s290 = sadd.s32 %s289, 1
    %s291 = scalar_select %p288, %s289, %s290
    %p294 = pneg %p288
    %p295 = scmp.eq.s32.totalorder %s18, 1
    %p296 = por %p294, %p295
    %p297 = scmp.ne.s32.totalorder %s289, %s292
    %p298 = scmp.eq.s32.totalorder %s18, 0
    %p299 = por %p297, %p298
    %p300 = scmp.ne.s32.totalorder %s289, %s292
    %p301 = scmp.eq.s32.totalorder %s23, 1
    %p302 = por %p300, %p301
    %p303 = scmp.ne.s32.totalorder %s292, %s293
    %p304 = scmp.eq.s32.totalorder %s23, 0
    %p305 = por %p303, %p304
    %p306 = scmp.ne.s32.totalorder %s292, %s293
    %p307 = scmp.eq.s32.totalorder %s24, 1
    %p308 = por %p306, %p307
    %p310 = scmp.ne.s32.totalorder %s293, %s309
    %p311 = scmp.eq.s32.totalorder %s24, 0
    %p312 = por %p310, %p311
    %s314 = sadd.s32 %s313, 1
    %p317 = scmp.eq.s32.totalorder %s18, 1
    %p318 = scmp.ne.s32.totalorder %s313, %s315
    %p319 = scmp.eq.s32.totalorder %s18, 0
    %p320 = por %p318, %p319
    %p321 = scmp.ne.s32.totalorder %s313, %s315
    %p322 = scmp.eq.s32.totalorder %s23, 1
    %p323 = por %p321, %p322
    %p324 = scmp.ne.s32.totalorder %s315, %s316
    %p325 = scmp.eq.s32.totalorder %s23, 0
    %p326 = por %p324, %p325
    %p327 = scmp.ne.s32.totalorder %s315, %s316
    %p328 = scmp.eq.s32.totalorder %s24, 1
    %p329 = por %p327, %p328
    %p331 = scmp.ne.s32.totalorder %s316, %s330
    %p332 = scmp.eq.s32.totalorder %s24, 0
    %p333 = por %p331, %p332
    %p334 = scmp.le.s32.totalorder 1, %s18
    %p335 = scmp.lt.s32.totalorder %s18, 3
    %p336 = pnand %p334, %p335
    %p337 = pneg %p336
    // Predicated region
    $region9: #{fwd.2} parent=5 // pred_check
      _
    $region10: #{fwd.2} parent=5 // pred_check_branch
      %339 = sbr.rel (%p336) target = $region12
    $region11: #{fwd.2} parent=5 // pred_region
      %s340 = ssub.s32 %s18, 1
      // Predicated region
      $region13: #{fwd.2} parent=11 // pred_check
        %p341 = pneg %p39
      $region14: #{fwd.2} parent=11 // pred_check_branch
        %343 = sbr.rel (%p341) target = $region16
      $region15: #{fwd.2} parent=11 // pred_region
        _
      $region16: #{fwd.2} parent=11 // pred_fallthru
        _
      // Predicated region
      $region17: #{fwd.2} parent=11 // pred_check
        %p344 = pneg %p112
      $region18: #{fwd.2} parent=11 // pred_check_branch
        %346 = sbr.rel (%p344) target = $region20
      $region19: #{fwd.2} parent=11 // pred_region
        _
      $region20: #{fwd.2} parent=11 // pred_fallthru
        _
      // Predicated region
      $region21: #{fwd.2} parent=11 // pred_check
        %p347 = pneg %p133
      $region22: #{fwd.2} parent=11 // pred_check_branch
        %349 = sbr.rel (%p347) target = $region24
      $region23: #{fwd.2} parent=11 // pred_region
        _
      $region24: #{fwd.2} parent=11 // pred_fallthru
        _
      // Predicated region
      $region25: #{fwd.2} parent=11 // pred_check
        %p350 = pneg %p154
      $region26: #{fwd.2} parent=11 // pred_check_branch
        %352 = sbr.rel (%p350) target = $region28
      $region27: #{fwd.2} parent=11 // pred_region
        _
      $region28: #{fwd.2} parent=11 // pred_fallthru
        _
      // Predicated region
      $region29: #{fwd.2} parent=11 // pred_check
        %p353 = pneg %p175
      $region30: #{fwd.2} parent=11 // pred_check_branch
        %355 = sbr.rel (%p353) target = $region32
      $region31: #{fwd.2} parent=11 // pred_region
        _
      $region32: #{fwd.2} parent=11 // pred_fallthru
        _
    $region12: #{fwd.2} parent=5 // pred_fallthru
      _
    %p356 = scmp.lt.s32.totalorder %s18, 2
    // Predicated region
    $region33: #{fwd.2} parent=5 // pred_check
      %p357 = pneg %p356
    $region34: #{fwd.2} parent=5 // pred_check_branch
      %359 = sbr.rel (%p357) target = $region36
    $region35: #{fwd.2} parent=5 // pred_region
      // Predicated region
      $region37: #{fwd.2} parent=35 // pred_check
        %p360 = pneg %p59
      $region38: #{fwd.2} parent=35 // pred_check_branch
        %362 = sbr.rel (%p360) target = $region40
      $region39: #{fwd.2} parent=35 // pred_region
        %p363 = scmp.lt.s32.totalorder %s18, 1
        %s364 = scalar_select %p363, %s18, 1
        %s365 = scalar_lea.vmem %s1, %s364
      $region40: #{fwd.2} parent=35 // pred_fallthru
        _
      // Predicated region
      $region41: #{fwd.2} parent=35 // pred_check
        %p366 = pneg %p85
      $region42: #{fwd.2} parent=35 // pred_check_branch
        %368 = sbr.rel (%p366) target = $region44
      $region43: #{fwd.2} parent=35 // pred_region
        %p369 = scmp.lt.s32.totalorder %s18, 1
        %s370 = scalar_select %p369, %s18, 1
        %s371 = smul.addr %s370, 48
        %s372 = smul.addr %s371, 8
        %s373 = scalar_lea.vmem %s2, %s372
      $region44: #{fwd.2} parent=35 // pred_fallthru
        _
      // Predicated region
      $region45: #{fwd.2} parent=35 // pred_check
        %p374 = pneg %p195
      $region46: #{fwd.2} parent=35 // pred_check_branch
        %376 = sbr.rel (%p374) target = $region48
      $region47: #{fwd.2} parent=35 // pred_region
        %p377 = scmp.lt.s32.totalorder %s18, 1
        %s378 = scalar_select %p377, %s18, 1
        %s379 = smul.addr %s378, 4
        %s380 = smul.addr %s379, 8
        %s381 = scalar_lea.vmem %s7, %s380
      $region48: #{fwd.2} parent=35 // pred_fallthru
        _
      // Predicated region
      $region49: #{fwd.2} parent=35 // pred_check
        %p382 = pneg %p221
      $region50: #{fwd.2} parent=35 // pred_check_branch
        %384 = sbr.rel (%p382) target = $region52
      $region51: #{fwd.2} parent=35 // pred_region
        %p385 = scmp.lt.s32.totalorder %s18, 1
        %s386 = scalar_select %p385, %s18, 1
        %s387 = scalar_lea.vmem %s8, %s386
      $region52: #{fwd.2} parent=35 // pred_fallthru
        _
      // Predicated region
      $region53: #{fwd.2} parent=35 // pred_check
        %p388 = pneg %p247
      $region54: #{fwd.2} parent=35 // pred_check_branch
        %390 = sbr.rel (%p388) target = $region56
      $region55: #{fwd.2} parent=35 // pred_region
        %p391 = scmp.lt.s32.totalorder %s18, 1
        %s392 = scalar_select %p391, %s18, 1
        %s393 = smul.addr %s392, 4
        %s394 = smul.addr %s393, 8
        %s395 = scalar_lea.vmem %s9, %s394
      $region56: #{fwd.2} parent=35 // pred_fallthru
        _
      // Predicated region
      $region57: #{fwd.2} parent=35 // pred_check
        %p396 = pneg %p273
      $region58: #{fwd.2} parent=35 // pred_check_branch
        %398 = sbr.rel (%p396) target = $region60
      $region59: #{fwd.2} parent=35 // pred_region
        %p399 = scmp.lt.s32.totalorder %s18, 1
        %s400 = scalar_select %p399, %s18, 1
        %s401 = smul.addr %s400, 4
        %s402 = smul.addr %s401, 8
        %s403 = scalar_lea.vmem %s10, %s402
      $region60: #{fwd.2} parent=35 // pred_fallthru
        _
      // Predicated region
      $region61: #{fwd.2} parent=35 // pred_check
        %p404 = pneg %p299
      $region62: #{fwd.2} parent=35 // pred_check_branch
        %406 = sbr.rel (%p404) target = $region64
      $region63: #{fwd.2} parent=35 // pred_region
        %p407 = scmp.lt.s32.totalorder %s18, 1
        %s408 = scalar_select %p407, %s18, 1
        %s409 = smul.addr %s408, 8
        %s410 = smul.addr %s409, 8
        %s411 = scalar_lea.vmem %s11, %s410
      $region64: #{fwd.2} parent=35 // pred_fallthru
        _
    $region36: #{fwd.2} parent=5 // pred_fallthru
      _
    %p412 = scmp.le.s32.totalorder 1, %s18
    %p413 = scmp.lt.s32.totalorder %s18, 3
    %p414 = pnand %p412, %p413
    %p415 = pneg %p414
    // Predicated region
    $region65: #{fwd.2} parent=5 // pred_check
      _
    $region66: #{fwd.2} parent=5 // pred_check_branch
      %417 = sbr.rel (%p414) target = $region68
    $region67: #{fwd.2} parent=5 // pred_region
      %s418 = ssub.s32 %s18, 1
      %p419 = pneg %p39
      %p420 = pneg %p36
      %p421 = scmp.lt.s32.totalorder %s23, 1
      %s422 = scalar_select %p421, %s23, 1
      %s423 = scalar_lea.vmem %s1, %s422
      %p424 = pneg %p65
      %p425 = pneg %p62
      %p426 = scmp.lt.s32.totalorder %s23, 1
      %s427 = scalar_select %p426, %s23, 1
      %s428 = smul.addr %s427, 48
      %s429 = smul.addr %s428, 8
      %s430 = scalar_lea.vmem %s2, %s429
      %p431 = pneg %p91
      %p432 = pneg %p88
      %p433 = pneg %p112
      %p434 = pneg %p109
      %p435 = pneg %p133
      %p436 = pneg %p130
      %p437 = pneg %p154
      %p438 = pneg %p151
      %p439 = pneg %p175
      %p440 = pneg %p172
      %p441 = scmp.lt.s32.totalorder %s23, 1
      %s442 = scalar_select %p441, %s23, 1
      %s443 = smul.addr %s442, 4
      %s444 = smul.addr %s443, 8
      %s445 = scalar_lea.vmem %s7, %s444
      %p446 = pneg %p201
      %p447 = pneg %p198
      %p448 = scmp.lt.s32.totalorder %s23, 1
      %s449 = scalar_select %p448, %s23, 1
      %s450 = scalar_lea.vmem %s8, %s449
      %p451 = pneg %p227
      %p452 = pneg %p224
      %p453 = scmp.lt.s32.totalorder %s23, 1
      %s454 = scalar_select %p453, %s23, 1
      %s455 = smul.addr %s454, 4
      %s456 = smul.addr %s455, 8
      %s457 = scalar_lea.vmem %s9, %s456
      %p458 = pneg %p253
      %p459 = pneg %p250
      %p460 = scmp.lt.s32.totalorder %s23, 1
      %s461 = scalar_select %p460, %s23, 1
      %s462 = smul.addr %s461, 4
      %s463 = smul.addr %s462, 8
      %s464 = scalar_lea.vmem %s10, %s463
      %p465 = pneg %p279
      %p466 = pneg %p276
      %p467 = scmp.lt.s32.totalorder %s23, 1
      %s468 = scalar_select %p467, %s23, 1
      %s469 = smul.addr %s468, 8
      %s470 = smul.addr %s469, 8
      %s471 = scalar_lea.vmem %s11, %s470
      %p472 = pneg %p305
      %p473 = pneg %p302
      %p474 = pneg %p326
      %p475 = pneg %p323
      %p476 = scmp.lt.s32.totalorder %s23, 1
      %s477 = scalar_select %p476, %s23, 1
      %s478 = scalar_lea.vmem %s1, %s477
      %p479 = scmp.lt.s32.totalorder %s23, 1
      %s480 = scalar_select %p479, %s23, 1
      %s481 = smul.addr %s480, 48
      %s482 = smul.addr %s481, 8
      %s483 = scalar_lea.vmem %s2, %s482
      %p484 = scmp.lt.s32.totalorder %s23, 1
      %s485 = scalar_select %p484, %s23, 1
      %s486 = smul.addr %s485, 4
      %s487 = smul.addr %s486, 8
      %s488 = scalar_lea.vmem %s7, %s487
      %p489 = scmp.lt.s32.totalorder %s23, 1
      %s490 = scalar_select %p489, %s23, 1
      %s491 = scalar_lea.vmem %s8, %s490
      %p492 = scmp.lt.s32.totalorder %s23, 1
      %s493 = scalar_select %p492, %s23, 1
      %s494 = smul.addr %s493, 4
      %s495 = smul.addr %s494, 8
      %s496 = scalar_lea.vmem %s9, %s495
      %p497 = scmp.lt.s32.totalorder %s23, 1
      %s498 = scalar_select %p497, %s23, 1
      %s499 = smul.addr %s498, 4
      %s500 = smul.addr %s499, 8
      %s501 = scalar_lea.vmem %s10, %s500
      %p502 = scmp.lt.s32.totalorder %s23, 1
      %s503 = scalar_select %p502, %s23, 1
      %s504 = smul.addr %s503, 8
      %s505 = smul.addr %s504, 8
      %s506 = scalar_lea.vmem %s11, %s505
      %p507 = scmp.eq.s32.totalorder %s23, 0
      // Predicated region
      $region69: #{fwd.2} parent=67 // pred_check
        %p508 = pneg %p507
      $region70: #{fwd.2} parent=67 // pred_check_branch
        %510 = sbr.rel (%p508) target = $region72
      $region71: #{fwd.2} parent=67 // pred_region
        %v511 = vld [vmem:[%s0] sm:$0xff]
        %v512 = vld [vmem:[%s0 + $0x8] sm:$0xff]
        %vm513 = vcmask 261120
        %514 = vst.msk [vmem:[%s12] sm:$0xff] %vm513, %v511
        %515 = vst.msk [vmem:[%s12 + $0x8] sm:$0xff] %vm513, %v512
      $region72: #{fwd.2} parent=67 // pred_fallthru
        _
      %v516 = vld [vmem:[%s12] sm:$0xff]
      %v517 = vld [vmem:[%s12 + $0x8] sm:$0xff]
      %v518 = vmul.f32 %v516, %v516
      %v519 = vmul.f32 %v517, %v517
      %vm520 = vcmask 261120
      %v521 = vsel %vm520, %v518, 0.0
      %522 = vadd.xlane.f32.xlu0 %v521
      %v523 = vpop.xlane.xlu0 %522
      %v524 = vsel %vm520, %v519, 0.0
      %525 = vadd.xlane.f32.xlu0 %v524
      %v526 = vpop.xlane.xlu0 %525
      %v527 = vrcp.pop 32.0
      %v528 = vmul.f32 %v523, %v527
      %v529 = vmul.f32 %v526, %v527
      %v530 = vadd.f32 %v528, 1e-06
      %v531 = vadd.f32 %v529, 1e-06
      %v532 = vrsqrt.pop %v530
      %v533 = vrsqrt.pop %v531
      %v534 = vmul.f32 %v516, %v532
      %v535 = vmul.f32 %v517, %v533
      %v536 = vld [vmem:[%s478] sm:$0x1]
      %v538 = vlaneseq
      %v539 = vshrl.u32 %v538, 7
      %v540 = vsub.s32 0, %v539
      %v541 = vrot.slane %v536, %v540
      %v543 = vmul.f32 %v534, %v541
      %v544 = vmul.f32 %v535, %v541
      %v545 = vld [vmem:[%s483] sm:$0xff]
      %v546 = vld [vmem:[%s483 + $0x8] sm:$0xff]
      %v547 = vld [vmem:[%s483 + $0x10] sm:$0xff]
      %v548 = vld [vmem:[%s483 + $0x18] sm:$0xff]
      %v549 = vld [vmem:[%s483 + $0x20] sm:$0xff]
      %v550 = vld [vmem:[%s483 + $0x28] sm:$0xff]
      %v551 = vld [vmem:[%s483 + $0x30] sm:$0xff]
      %v552 = vld [vmem:[%s483 + $0x38] sm:$0xff]
      %v553 = vld [vmem:[%s483 + $0x40] sm:$0xff]
      %v554 = vld [vmem:[%s483 + $0x48] sm:$0xff]
      %v555 = vld [vmem:[%s483 + $0x50] sm:$0xff]
      %v556 = vld [vmem:[%s483 + $0x58] sm:$0xff]
      %v557 = vld [vmem:[%s483 + $0x60] sm:$0xff]
      %v558 = vld [vmem:[%s483 + $0x68] sm:$0xff]
      %v559 = vld [vmem:[%s483 + $0x70] sm:$0xff]
      %v560 = vld [vmem:[%s483 + $0x78] sm:$0xff]
      %v561 = vld [vmem:[%s483 + $0x80] sm:$0xff]
      %v562 = vld [vmem:[%s483 + $0x88] sm:$0xff]
      %v563 = vld [vmem:[%s483 + $0x90] sm:$0xff]
      %v564 = vld [vmem:[%s483 + $0x98] sm:$0xff]
      %v565 = vld [vmem:[%s483 + $0xa0] sm:$0xff]
      %v566 = vld [vmem:[%s483 + $0xa8] sm:$0xff]
      %v567 = vld [vmem:[%s483 + $0xb0] sm:$0xff]
      %v568 = vld [vmem:[%s483 + $0xb8] sm:$0xff]
      %v569 = vld [vmem:[%s483 + $0xc0] sm:$0xff]
      %v570 = vld [vmem:[%s483 + $0xc8] sm:$0xff]
      %v571 = vld [vmem:[%s483 + $0xd0] sm:$0xff]
      %v572 = vld [vmem:[%s483 + $0xd8] sm:$0xff]
      %v573 = vld [vmem:[%s483 + $0xe0] sm:$0xff]
      %v574 = vld [vmem:[%s483 + $0xe8] sm:$0xff]
      %v575 = vld [vmem:[%s483 + $0xf0] sm:$0xff]
      %v576 = vld [vmem:[%s483 + $0xf8] sm:$0xff]
      %v577 = vld [vmem:[%s483 + $0x100] sm:$0xff]
      %v578 = vld [vmem:[%s483 + $0x108] sm:$0xff]
      %v579 = vld [vmem:[%s483 + $0x110] sm:$0xff]
      %v580 = vld [vmem:[%s483 + $0x118] sm:$0xff]
      %v581 = vld [vmem:[%s483 + $0x120] sm:$0xff]
      %v582 = vld [vmem:[%s483 + $0x128] sm:$0xff]
      %v583 = vld [vmem:[%s483 + $0x130] sm:$0xff]
      %v584 = vld [vmem:[%s483 + $0x138] sm:$0xff]
      %v585 = vld [vmem:[%s483 + $0x140] sm:$0xff]
      %v586 = vld [vmem:[%s483 + $0x148] sm:$0xff]
      %v587 = vld [vmem:[%s483 + $0x150] sm:$0xff]
      %v588 = vld [vmem:[%s483 + $0x158] sm:$0xff]
      %v589 = vld [vmem:[%s483 + $0x160] sm:$0xff]
      %v590 = vld [vmem:[%s483 + $0x168] sm:$0xff]
      %v591 = vld [vmem:[%s483 + $0x170] sm:$0xff]
      %v592 = vld [vmem:[%s483 + $0x178] sm:$0xff]
      %v594 = vsel %vm520, %v543, 0
      %v597 = vsel %vm520, %v544, 0
      %599 = vmatprep.subr.mxu0 0.0
      %600 = vmatpush1.msra.mxu0 %v545
      %601 = vmatprep.subr.mxu0 0.0
      %602 = vmatpush1.msra.mxu0 %v546
      %603 = vmatprep.subr.mxu0 0.0
      %604 = vmatpush1.msra.mxu0 %v547
      %605 = vmatprep.subr.mxu0 0.0
      %606 = vmatpush1.msra.mxu0 %v548
      %607 = vmatprep.subr.mxu0 0.0
      %608 = vmatpush1.msra.mxu0 0.0
      %609 = vmatprep.subr.mxu0 0.0
      %610 = vmatpush1.msra.mxu0 0.0
      %611 = vmatprep.subr.mxu0 0.0
      %612 = vmatpush1.msra.mxu0 0.0
      %613 = vmatprep.subr.mxu0 0.0
      %614 = vmatpush1.msra.mxu0 0.0
      %615 = vmatprep.subr.mxu0 0.0
      %616 = vmatpush1.msra.mxu0 0.0
      %617 = vmatprep.subr.mxu0 0.0
      %618 = vmatpush1.msra.mxu0 0.0
      %619 = vmatprep.subr.mxu0 0.0
      %620 = vmatpush1.msra.mxu0 0.0
      %621 = vmatprep.subr.mxu0 0.0
      %622 = vmatpush1.msra.mxu0 0.0
      %623 = vmatprep.subr.mxu0 0.0
      %624 = vmatpush1.msra.mxu0 0.0
      %625 = vmatprep.subr.mxu0 0.0
      %626 = vmatpush1.msra.mxu0 0.0
      %627 = vmatprep.subr.mxu0 0.0
      %628 = vmatpush1.msra.mxu0 0.0
      %629 = vmatprep.subr.mxu0 0.0
      %630 = vmatpush1.msra.mxu0 0.0
      %631 = vmatprep.subr.mxu0 0.0
      %632 = vmatpush1.msra.mxu0 0.0
      %633 = vmatprep.subr.mxu0 0.0
      %634 = vmatpush1.msra.mxu0 0.0
      %635 = vmatprep.subr.mxu0 0.0
      %636 = vmatpush1.msra.mxu0 0.0
      %637 = vmatprep.subr.mxu0 0.0
      %638 = vmatpush1.msra.mxu0 0.0
      %639 = vmatprep.subr.mxu0 0.0
      %640 = vmatpush1.msra.mxu0 0.0
      %641 = vmatprep.subr.mxu0 0.0
      %642 = vmatpush1.msra.mxu0 0.0
      %643 = vmatprep.subr.mxu0 0.0
      %644 = vmatpush1.msra.mxu0 0.0
      %645 = vmatprep.subr.mxu0 0.0
      %646 = vmatpush1.msra.mxu0 0.0
      %647 = vmatprep.subr.mxu0 0.0
      %648 = vmatpush1.msra.mxu0 0.0
      %649 = vmatprep.subr.mxu0 0.0
      %650 = vmatpush1.msra.mxu0 0.0
      %651 = vmatprep.subr.mxu0 0.0
      %652 = vmatpush1.msra.mxu0 0.0
      %653 = vmatprep.subr.mxu0 0.0
      %654 = vmatpush1.msra.mxu0 0.0
      %655 = vmatprep.subr.mxu0 0.0
      %656 = vmatpush1.msra.mxu0 0.0
      %657 = vmatprep.subr.mxu0 0.0
      %658 = vmatpush1.msra.mxu0 0.0
      %659 = vmatprep.subr.mxu0 0.0
      %660 = vmatpush1.msra.mxu0 0.0
      %661 = vmatprep.subr.mxu0 0.0
      %662 = vmatpush1.msra.mxu0 0.0
      %663 = vmatprep.mubr.f32.mxu0 0.0
      %664 = vmatmul.mubr.f32.gmra.mrb[0].mxu0 %v594
      %v665 = vpop.f32.mrb[0].mxu0
      %v666 = vadd.f32 0.0, %v665
      %v667 = vpop.f32.mrb[0].mxu0
      %668 = vmatprep.mubr.f32.mxu0 0.0
      %669 = vmatmul.mubr.f32.gmra.mrb[0].mxu0 %v597
      %v670 = vpop.f32.mrb[0].mxu0
      %v671 = vadd.f32 0.0, %v670
      %v672 = vpop.f32.mrb[0].mxu0
      %673 = vdwg.mxu0
      %674 = vmatprep.subr.mxu0 0.0
      %675 = vmatpush1.msra.mxu0 %v549
      %676 = vmatprep.subr.mxu0 0.0
      %677 = vmatpush1.msra.mxu0 %v550
      %678 = vmatprep.subr.mxu0 0.0
      %679 = vmatpush1.msra.mxu0 %v551
      %680 = vmatprep.subr.mxu0 0.0
      %681 = vmatpush1.msra.mxu0 %v552
      %682 = vmatprep.subr.mxu0 0.0
      %683 = vmatpush1.msra.mxu0 0.0
      %684 = vmatprep.subr.mxu0 0.0
      %685 = vmatpush1.msra.mxu0 0.0
      %686 = vmatprep.subr.mxu0 0.0
      %687 = vmatpush1.msra.mxu0 0.0
      %688 = vmatprep.subr.mxu0 0.0
      %689 = vmatpush1.msra.mxu0 0.0
      %690 = vmatprep.subr.mxu0 0.0
      %691 = vmatpush1.msra.mxu0 0.0
      %692 = vmatprep.subr.mxu0 0.0
      %693 = vmatpush1.msra.mxu0 0.0
      %694 = vmatprep.subr.mxu0 0.0
      %695 = vmatpush1.msra.mxu0 0.0
      %696 = vmatprep.subr.mxu0 0.0
      %697 = vmatpush1.msra.mxu0 0.0
      %698 = vmatprep.subr.mxu0 0.0
      %699 = vmatpush1.msra.mxu0 0.0
      %700 = vmatprep.subr.mxu0 0.0
      %701 = vmatpush1.msra.mxu0 0.0
      %702 = vmatprep.subr.mxu0 0.0
      %703 = vmatpush1.msra.mxu0 0.0
      %704 = vmatprep.subr.mxu0 0.0
      %705 = vmatpush1.msra.mxu0 0.0
      %706 = vmatprep.subr.mxu0 0.0
      %707 = vmatpush1.msra.mxu0 0.0
      %708 = vmatprep.subr.mxu0 0.0
      %709 = vmatpush1.msra.mxu0 0.0
      %710 = vmatprep.subr.mxu0 0.0
      %711 = vmatpush1.msra.mxu0 0.0
      %712 = vmatprep.subr.mxu0 0.0
      %713 = vmatpush1.msra.mxu0 0.0
      %714 = vmatprep.subr.mxu0 0.0
      %715 = vmatpush1.msra.mxu0 0.0
      %716 = vmatprep.subr.mxu0 0.0
      %717 = vmatpush1.msra.mxu0 0.0
      %718 = vmatprep.subr.mxu0 0.0
      %719 = vmatpush1.msra.mxu0 0.0
      %720 = vmatprep.subr.mxu0 0.0
      %721 = vmatpush1.msra.mxu0 0.0
      %722 = vmatprep.subr.mxu0 0.0
      %723 = vmatpush1.msra.mxu0 0.0
      %724 = vmatprep.subr.mxu0 0.0
      %725 = vmatpush1.msra.mxu0 0.0
      %726 = vmatprep.subr.mxu0 0.0
      %727 = vmatpush1.msra.mxu0 0.0
      %728 = vmatprep.subr.mxu0 0.0
      %729 = vmatpush1.msra.mxu0 0.0
      %730 = vmatprep.subr.mxu0 0.0
      %731 = vmatpush1.msra.mxu0 0.0
      %732 = vmatprep.subr.mxu0 0.0
      %733 = vmatpush1.msra.mxu0 0.0
      %734 = vmatprep.subr.mxu0 0.0
      %735 = vmatpush1.msra.mxu0 0.0
      %736 = vmatprep.subr.mxu0 0.0
      %737 = vmatpush1.msra.mxu0 0.0
      %738 = vmatprep.mubr.f32.mxu0 0.0
      %739 = vmatmul.mubr.f32.gmra.mrb[0].mxu0 %v594
      %v740 = vpop.f32.mrb[0].mxu0
      %v741 = vadd.f32 0.0, %v740
      %v742 = vpop.f32.mrb[0].mxu0
      %743 = vmatprep.mubr.f32.mxu0 0.0
      %744 = vmatmul.mubr.f32.gmra.mrb[0].mxu0 %v597
      %v745 = vpop.f32.mrb[0].mxu0
      %v746 = vadd.f32 0.0, %v745
      %v747 = vpop.f32.mrb[0].mxu0
      %748 = vdwg.mxu0
      %749 = vmatprep.subr.mxu0 0.0
      %750 = vmatpush1.msra.mxu0 %v553
      %751 = vmatprep.subr.mxu0 0.0
      %752 = vmatpush1.msra.mxu0 %v554
      %753 = vmatprep.subr.mxu0 0.0
      %754 = vmatpush1.msra.mxu0 %v555
      %755 = vmatprep.subr.mxu0 0.0
      %756 = vmatpush1.msra.mxu0 %v556
      %757 = vmatprep.subr.mxu0 0.0
      %758 = vmatpush1.msra.mxu0 0.0
      %759 = vmatprep.subr.mxu0 0.0
      %760 = vmatpush1.msra.mxu0 0.0
      %761 = vmatprep.subr.mxu0 0.0
      %762 = vmatpush1.msra.mxu0 0.0
      %763 = vmatprep.subr.mxu0 0.0
      %764 = vmatpush1.msra.mxu0 0.0
      %765 = vmatprep.subr.mxu0 0.0
      %766 = vmatpush1.msra.mxu0 0.0
      %767 = vmatprep.subr.mxu0 0.0
      %768 = vmatpush1.msra.mxu0 0.0
      %769 = vmatprep.subr.mxu0 0.0
      %770 = vmatpush1.msra.mxu0 0.0
      %771 = vmatprep.subr.mxu0 0.0
      %772 = vmatpush1.msra.mxu0 0.0
      %773 = vmatprep.subr.mxu0 0.0
      %774 = vmatpush1.msra.mxu0 0.0
      %775 = vmatprep.subr.mxu0 0.0
      %776 = vmatpush1.msra.mxu0 0.0
      %777 = vmatprep.subr.mxu0 0.0
      %778 = vmatpush1.msra.mxu0 0.0
      %779 = vmatprep.subr.mxu0 0.0
      %780 = vmatpush1.msra.mxu0 0.0
      %781 = vmatprep.subr.mxu0 0.0
      %782 = vmatpush1.msra.mxu0 0.0
      %783 = vmatprep.subr.mxu0 0.0
      %784 = vmatpush1.msra.mxu0 0.0
      %785 = vmatprep.subr.mxu0 0.0
      %786 = vmatpush1.msra.mxu0 0.0
      %787 = vmatprep.subr.mxu0 0.0
      %788 = vmatpush1.msra.mxu0 0.0
      %789 = vmatprep.subr.mxu0 0.0
      %790 = vmatpush1.msra.mxu0 0.0
      %791 = vmatprep.subr.mxu0 0.0
      %792 = vmatpush1.msra.mxu0 0.0
      %793 = vmatprep.subr.mxu0 0.0
      %794 = vmatpush1.msra.mxu0 0.0
      %795 = vmatprep.subr.mxu0 0.0
      %796 = vmatpush1.msra.mxu0 0.0
      %797 = vmatprep.subr.mxu0 0.0
      %798 = vmatpush1.msra.mxu0 0.0
      %799 = vmatprep.subr.mxu0 0.0
      %800 = vmatpush1.msra.mxu0 0.0
      %801 = vmatprep.subr.mxu0 0.0
      %802 = vmatpush1.msra.mxu0 0.0
      %803 = vmatprep.subr.mxu0 0.0
      %804 = vmatpush1.msra.mxu0 0.0
      %805 = vmatprep.subr.mxu0 0.0
      %806 = vmatpush1.msra.mxu0 0.0
      %807 = vmatprep.subr.mxu0 0.0
      %808 = vmatpush1.msra.mxu0 0.0
      %809 = vmatprep.subr.mxu0 0.0
      %810 = vmatpush1.msra.mxu0 0.0
      %811 = vmatprep.subr.mxu0 0.0
      %812 = vmatpush1.msra.mxu0 0.0
      %813 = vmatprep.mubr.f32.mxu0 0.0
      %814 = vmatmul.mubr.f32.gmra.mrb[0].mxu0 %v594
      %v815 = vpop.f32.mrb[0].mxu0
      %v816 = vadd.f32 0.0, %v815
      %v817 = vpop.f32.mrb[0].mxu0
      %818 = vmatprep.mubr.f32.mxu0 0.0
      %819 = vmatmul.mubr.f32.gmra.mrb[0].mxu0 %v597
      %v820 = vpop.f32.mrb[0].mxu0
      %v821 = vadd.f32 0.0, %v820
      %v822 = vpop.f32.mrb[0].mxu0
      %823 = vdwg.mxu0
      %824 = vmatprep.subr.mxu0 0.0
      %825 = vmatpush1.msra.mxu0 %v557
      %826 = vmatprep.subr.mxu0 0.0
      %827 = vmatpush1.msra.mxu0 %v558
      %828 = vmatprep.subr.mxu0 0.0
      %829 = vmatpush1.msra.mxu0 %v559
      %830 = vmatprep.subr.mxu0 0.0
      %831 = vmatpush1.msra.mxu0 %v560
      %832 = vmatprep.subr.mxu0 0.0
      %833 = vmatpush1.msra.mxu0 0.0
      %834 = vmatprep.subr.mxu0 0.0
      %835 = vmatpush1.msra.mxu0 0.0
      %836 = vmatprep.subr.mxu0 0.0
      %837 = vmatpush1.msra.mxu0 0.0
      %838 = vmatprep.subr.mxu0 0.0
      %839 = vmatpush1.msra.mxu0 0.0
      %840 = vmatprep.subr.mxu0 0.0
      %841 = vmatpush1.msra.mxu0 0.0
      %842 = vmatprep.subr.mxu0 0.0
      %843 = vmatpush1.msra.mxu0 0.0
      %844 = vmatprep.subr.mxu0 0.0
      %845 = vmatpush1.msra.mxu0 0.0
      %846 = vmatprep.subr.mxu0 0.0
      %847 = vmatpush1.msra.mxu0 0.0
      %848 = vmatprep.subr.mxu0 0.0
      %849 = vmatpush1.msra.mxu0 0.0
      %850 = vmatprep.subr.mxu0 0.0
      %851 = vmatpush1.msra.mxu0 0.0
      %852 = vmatprep.subr.mxu0 0.0
      %853 = vmatpush1.msra.mxu0 0.0
      %854 = vmatprep.subr.mxu0 0.0
      %855 = vmatpush1.msra.mxu0 0.0
      %856 = vmatprep.subr.mxu0 0.0
      %857 = vmatpush1.msra.mxu0 0.0
      %858 = vmatprep.subr.mxu0 0.0
      %859 = vmatpush1.msra.mxu0 0.0
      %860 = vmatprep.subr.mxu0 0.0
      %861 = vmatpush1.msra.mxu0 0.0
      %862 = vmatprep.subr.mxu0 0.0
      %863 = vmatpush1.msra.mxu0 0.0
      %864 = vmatprep.subr.mxu0 0.0
      %865 = vmatpush1.msra.mxu0 0.0
      %866 = vmatprep.subr.mxu0 0.0
      %867 = vmatpush1.msra.mxu0 0.0
      %868 = vmatprep.subr.mxu0 0.0
      %869 = vmatpush1.msra.mxu0 0.0
      %870 = vmatprep.subr.mxu0 0.0
      %871 = vmatpush1.msra.mxu0 0.0
      %872 = vmatprep.subr.mxu0 0.0
      %873 = vmatpush1.msra.mxu0 0.0
      %874 = vmatprep.subr.mxu0 0.0
      %875 = vmatpush1.msra.mxu0 0.0
      %876 = vmatprep.subr.mxu0 0.0
      %877 = vmatpush1.msra.mxu0 0.0
      %878 = vmatprep.subr.mxu0 0.0
      %879 = vmatpush1.msra.mxu0 0.0
      %880 = vmatprep.subr.mxu0 0.0
      %881 = vmatpush1.msra.mxu0 0.0
      %882 = vmatprep.subr.mxu0 0.0
      %883 = vmatpush1.msra.mxu0 0.0
      %884 = vmatprep.subr.mxu0 0.0
      %885 = vmatpush1.msra.mxu0 0.0
      %886 = vmatprep.subr.mxu0 0.0
      %887 = vmatpush1.msra.mxu0 0.0
      %888 = vmatprep.mubr.f32.mxu0 0.0
      %889 = vmatmul.mubr.f32.gmra.mrb[0].mxu0 %v594
      %v890 = vpop.f32.mrb[0].mxu0
      %v891 = vadd.f32 0.0, %v890
      %v892 = vpop.f32.mrb[0].mxu0
      %893 = vmatprep.mubr.f32.mxu0 0.0
      %894 = vmatmul.mubr.f32.gmra.mrb[0].mxu0 %v597
      %v895 = vpop.f32.mrb[0].mxu0
      %v896 = vadd.f32 0.0, %v895
      %v897 = vpop.f32.mrb[0].mxu0
      %898 = vdwg.mxu0
      %899 = vmatprep.subr.mxu0 0.0
      %900 = vmatpush1.msra.mxu0 %v561
      %901 = vmatprep.subr.mxu0 0.0
      %902 = vmatpush1.msra.mxu0 %v562
      %903 = vmatprep.subr.mxu0 0.0
      %904 = vmatpush1.msra.mxu0 %v563
      %905 = vmatprep.subr.mxu0 0.0
      %906 = vmatpush1.msra.mxu0 %v564
      %907 = vmatprep.subr.mxu0 0.0
      %908 = vmatpush1.msra.mxu0 0.0
      %909 = vmatprep.subr.mxu0 0.0
      %910 = vmatpush1.msra.mxu0 0.0
      %911 = vmatprep.subr.mxu0 0.0
      %912 = vmatpush1.msra.mxu0 0.0
      %913 = vmatprep.subr.mxu0 0.0
      %914 = vmatpush1.msra.mxu0 0.0
      %915 = vmatprep.subr.mxu0 0.0
      %916 = vmatpush1.msra.mxu0 0.0
      %917 = vmatprep.subr.mxu0 0.0
      %918 = vmatpush1.msra.mxu0 0.0
      %919 = vmatprep.subr.mxu0 0.0
      %920 = vmatpush1.msra.mxu0 0.0
      %921 = vmatprep.subr.mxu0 0.0
      %922 = vmatpush1.msra.mxu0 0.0
      %923 = vmatprep.subr.mxu0 0.0
      %924 = vmatpush1.msra.mxu0 0.0
      %925 = vmatprep.subr.mxu0 0.0
      %926 = vmatpush1.msra.mxu0 0.0
      %927 = vmatprep.subr.mxu0 0.0
      %928 = vmatpush1.msra.mxu0 0.0
      %929 = vmatprep.subr.mxu0 0.0
      %930 = vmatpush1.msra.mxu0 0.0
      %931 = vmatprep.subr.mxu0 0.0
      %932 = vmatpush1.msra.mxu0 0.0
      %933 = vmatprep.subr.mxu0 0.0
      %934 = vmatpush1.msra.mxu0 0.0
      %935 = vmatprep.subr.mxu0 0.0
      %936 = vmatpush1.msra.mxu0 0.0
      %937 = vmatprep.subr.mxu0 0.0
      %938 = vmatpush1.msra.mxu0 0.0
      %939 = vmatprep.subr.mxu0 0.0
      %940 = vmatpush1.msra.mxu0 0.0
      %941 = vmatprep.subr.mxu0 0.0
      %942 = vmatpush1.msra.mxu0 0.0
      %943 = vmatprep.subr.mxu0 0.0
      %944 = vmatpush1.msra.mxu0 0.0
      %945 = vmatprep.subr.mxu0 0.0
      %946 = vmatpush1.msra.mxu0 0.0
      %947 = vmatprep.subr.mxu0 0.0
      %948 = vmatpush1.msra.mxu0 0.0
      %949 = vmatprep.subr.mxu0 0.0
      %950 = vmatpush1.msra.mxu0 0.0
      %951 = vmatprep.subr.mxu0 0.0
      %952 = vmatpush1.msra.mxu0 0.0
      %953 = vmatprep.subr.mxu0 0.0
      %954 = vmatpush1.msra.mxu0 0.0
      %955 = vmatprep.subr.mxu0 0.0
      %956 = vmatpush1.msra.mxu0 0.0
      %957 = vmatprep.subr.mxu0 0.0
      %958 = vmatpush1.msra.mxu0 0.0
      %959 = vmatprep.subr.mxu0 0.0
      %960 = vmatpush1.msra.mxu0 0.0
      %961 = vmatprep.subr.mxu0 0.0
      %962 = vmatpush1.msra.mxu0 0.0
      %963 = vmatprep.mubr.f32.mxu0 0.0
      %964 = vmatmul.mubr.f32.gmra.mrb[0].mxu0 %v594
      %v965 = vpop.f32.mrb[0].mxu0
      %v966 = vadd.f32 0.0, %v965
      %v967 = vpop.f32.mrb[0].mxu0
      %968 = vmatprep.mubr.f32.mxu0 0.0
      %969 = vmatmul.mubr.f32.gmra.mrb[0].mxu0 %v597
      %v970 = vpop.f32.mrb[0].mxu0
      %v971 = vadd.f32 0.0, %v970
      %v972 = vpop.f32.mrb[0].mxu0
      %973 = vdwg.mxu0
      %974 = vmatprep.subr.mxu0 0.0
      %975 = vmatpush1.msra.mxu0 %v565
      %976 = vmatprep.subr.mxu0 0.0
      %977 = vmatpush1.msra.mxu0 %v566
      %978 = vmatprep.subr.mxu0 0.0
      %979 = vmatpush1.msra.mxu0 %v567
      %980 = vmatprep.subr.mxu0 0.0
      %981 = vmatpush1.msra.mxu0 %v568
      %982 = vmatprep.subr.mxu0 0.0
      %983 = vmatpush1.msra.mxu0 0.0
      %984 = vmatprep.subr.mxu0 0.0
      %985 = vmatpush1.msra.mxu0 0.0
      %986 = vmatprep.subr.mxu0 0.0
      %987 = vmatpush1.msra.mxu0 0.0
      %988 = vmatprep.subr.mxu0 0.0
      %989 = vmatpush1.msra.mxu0 0.0
      %990 = vmatprep.subr.mxu0 0.0
      %991 = vmatpush1.msra.mxu0 0.0
      %992 = vmatprep.subr.mxu0 0.0
      %993 = vmatpush1.msra.mxu0 0.0
      %994 = vmatprep.subr.mxu0 0.0
      %995 = vmatpush1.msra.mxu0 0.0
      %996 = vmatprep.subr.mxu0 0.0
      %997 = vmatpush1.msra.mxu0 0.0
      %998 = vmatprep.subr.mxu0 0.0
      %999 = vmatpush1.msra.mxu0 0.0
      %1000 = vmatprep.subr.mxu0 0.0
      %1001 = vmatpush1.msra.mxu0 0.0
      %1002 = vmatprep.subr.mxu0 0.0
      %1003 = vmatpush1.msra.mxu0 0.0
      %1004 = vmatprep.subr.mxu0 0.0
      %1005 = vmatpush1.msra.mxu0 0.0
      %1006 = vmatprep.subr.mxu0 0.0
      %1007 = vmatpush1.msra.mxu0 0.0
      %1008 = vmatprep.subr.mxu0 0.0
      %1009 = vmatpush1.msra.mxu0 0.0
      %1010 = vmatprep.subr.mxu0 0.0
      %1011 = vmatpush1.msra.mxu0 0.0
      %1012 = vmatprep.subr.mxu0 0.0
      %1013 = vmatpush1.msra.mxu0 0.0
      %1014 = vmatprep.subr.mxu0 0.0
      %1015 = vmatpush1.msra.mxu0 0.0
      %1016 = vmatprep.subr.mxu0 0.0
      %1017 = vmatpush1.msra.mxu0 0.0
      %1018 = vmatprep.subr.mxu0 0.0
      %1019 = vmatpush1.msra.mxu0 0.0
      %1020 = vmatprep.subr.mxu0 0.0
      %1021 = vmatpush1.msra.mxu0 0.0
      %1022 = vmatprep.subr.mxu0 0.0
      %1023 = vmatpush1.msra.mxu0 0.0
      %1024 = vmatprep.subr.mxu0 0.0
      %1025 = vmatpush1.msra.mxu0 0.0
      %1026 = vmatprep.subr.mxu0 0.0
      %1027 = vmatpush1.msra.mxu0 0.0
      %1028 = vmatprep.subr.mxu0 0.0
      %1029 = vmatpush1.msra.mxu0 0.0
      %1030 = vmatprep.subr.mxu0 0.0
      %1031 = vmatpush1.msra.mxu0 0.0
      %1032 = vmatprep.subr.mxu0 0.0
      %1033 = vmatpush1.msra.mxu0 0.0
      %1034 = vmatprep.subr.mxu0 0.0
      %1035 = vmatpush1.msra.mxu0 0.0
      %1036 = vmatprep.subr.mxu0 0.0
      %1037 = vmatpush1.msra.mxu0 0.0
      %1038 = vmatprep.mubr.f32.mxu0 0.0
      %1039 = vmatmul.mubr.f32.gmra.mrb[0].mxu0 %v594
      %v1040 = vpop.f32.mrb[0].mxu0
      %v1041 = vadd.f32 0.0, %v1040
      %v1042 = vpop.f32.mrb[0].mxu0
      %1043 = vmatprep.mubr.f32.mxu0 0.0
      %1044 = vmatmul.mubr.f32.gmra.mrb[0].mxu0 %v597
      %v1045 = vpop.f32.mrb[0].mxu0
      %v1046 = vadd.f32 0.0, %v1045
      %v1047 = vpop.f32.mrb[0].mxu0
      %1048 = vdwg.mxu0
      %1049 = vmatprep.subr.mxu0 0.0
      %1050 = vmatpush1.msra.mxu0 %v569
      %1051 = vmatprep.subr.mxu0 0.0
      %1052 = vmatpush1.msra.mxu0 %v570
      %1053 = vmatprep.subr.mxu0 0.0
      %1054 = vmatpush1.msra.mxu0 %v571
      %1055 = vmatprep.subr.mxu0 0.0
      %1056 = vmatpush1.msra.mxu0 %v572
      %1057 = vmatprep.subr.mxu0 0.0
      %1058 = vmatpush1.msra.mxu0 0.0
      %1059 = vmatprep.subr.mxu0 0.0
      %1060 = vmatpush1.msra.mxu0 0.0
      %1061 = vmatprep.subr.mxu0 0.0
      %1062 = vmatpush1.msra.mxu0 0.0
      %1063 = vmatprep.subr.mxu0 0.0
      %1064 = vmatpush1.msra.mxu0 0.0
      %1065 = vmatprep.subr.mxu0 0.0
      %1066 = vmatpush1.msra.mxu0 0.0
      %1067 = vmatprep.subr.mxu0 0.0
      %1068 = vmatpush1.msra.mxu0 0.0
      %1069 = vmatprep.subr.mxu0 0.0
      %1070 = vmatpush1.msra.mxu0 0.0
      %1071 = vmatprep.subr.mxu0 0.0
      %1072 = vmatpush1.msra.mxu0 0.0
      %1073 = vmatprep.subr.mxu0 0.0
      %1074 = vmatpush1.msra.mxu0 0.0
      %1075 = vmatprep.subr.mxu0 0.0
      %1076 = vmatpush1.msra.mxu0 0.0
      %1077 = vmatprep.subr.mxu0 0.0
      %1078 = vmatpush1.msra.mxu0 0.0
      %1079 = vmatprep.subr.mxu0 0.0
      %1080 = vmatpush1.msra.mxu0 0.0
      %1081 = vmatprep.subr.mxu0 0.0
      %1082 = vmatpush1.msra.mxu0 0.0
      %1083 = vmatprep.subr.mxu0 0.0
      %1084 = vmatpush1.msra.mxu0 0.0
      %1085 = vmatprep.subr.mxu0 0.0
      %1086 = vmatpush1.msra.mxu0 0.0
      %1087 = vmatprep.subr.mxu0 0.0
      %1088 = vmatpush1.msra.mxu0 0.0
      %1089 = vmatprep.subr.mxu0 0.0
      %1090 = vmatpush1.msra.mxu0 0.0
      %1091 = vmatprep.subr.mxu0 0.0
      %1092 = vmatpush1.msra.mxu0 0.0
      %1093 = vmatprep.subr.mxu0 0.0
      %1094 = vmatpush1.msra.mxu0 0.0
      %1095 = vmatprep.subr.mxu0 0.0
      %1096 = vmatpush1.msra.mxu0 0.0
      %1097 = vmatprep.subr.mxu0 0.0
      %1098 = vmatpush1.msra.mxu0 0.0
      %1099 = vmatprep.subr.mxu0 0.0
      %1100 = vmatpush1.msra.mxu0 0.0
      %1101 = vmatprep.subr.mxu0 0.0
      %1102 = vmatpush1.msra.mxu0 0.0
      %1103 = vmatprep.subr.mxu0 0.0
      %1104 = vmatpush1.msra.mxu0 0.0
      %1105 = vmatprep.subr.mxu0 0.0
      %1106 = vmatpush1.msra.mxu0 0.0
      %1107 = vmatprep.subr.mxu0 0.0
      %1108 = vmatpush1.msra.mxu0 0.0
      %1109 = vmatprep.subr.mxu0 0.0
      %1110 = vmatpush1.msra.mxu0 0.0
      %1111 = vmatprep.subr.mxu0 0.0
      %1112 = vmatpush1.msra.mxu0 0.0
      %1113 = vmatprep.mubr.f32.mxu0 0.0
      %1114 = vmatmul.mubr.f32.gmra.mrb[0].mxu0 %v594
      %v1115 = vpop.f32.mrb[0].mxu0
      %v1116 = vadd.f32 0.0, %v1115
      %v1117 = vpop.f32.mrb[0].mxu0
      %1118 = vmatprep.mubr.f32.mxu0 0.0
      %1119 = vmatmul.mubr.f32.gmra.mrb[0].mxu0 %v597
      %v1120 = vpop.f32.mrb[0].mxu0
      %v1121 = vadd.f32 0.0, %v1120
      %v1122 = vpop.f32.mrb[0].mxu0
      %1123 = vdwg.mxu0
      %1124 = vmatprep.subr.mxu0 0.0
      %1125 = vmatpush1.msra.mxu0 %v573
      %1126 = vmatprep.subr.mxu0 0.0
      %1127 = vmatpush1.msra.mxu0 %v574
      %1128 = vmatprep.subr.mxu0 0.0
      %1129 = vmatpush1.msra.mxu0 %v575
      %1130 = vmatprep.subr.mxu0 0.0
      %1131 = vmatpush1.msra.mxu0 %v576
      %1132 = vmatprep.subr.mxu0 0.0
      %1133 = vmatpush1.msra.mxu0 0.0
      %1134 = vmatprep.subr.mxu0 0.0
      %1135 = vmatpush1.msra.mxu0 0.0
      %1136 = vmatprep.subr.mxu0 0.0
      %1137 = vmatpush1.msra.mxu0 0.0
      %1138 = vmatprep.subr.mxu0 0.0
      %1139 = vmatpush1.msra.mxu0 0.0
      %1140 = vmatprep.subr.mxu0 0.0
      %1141 = vmatpush1.msra.mxu0 0.0
      %1142 = vmatprep.subr.mxu0 0.0
      %1143 = vmatpush1.msra.mxu0 0.0
      %1144 = vmatprep.subr.mxu0 0.0
      %1145 = vmatpush1.msra.mxu0 0.0
      %1146 = vmatprep.subr.mxu0 0.0
      %1147 = vmatpush1.msra.mxu0 0.0
      %1148 = vmatprep.subr.mxu0 0.0
      %1149 = vmatpush1.msra.mxu0 0.0
      %1150 = vmatprep.subr.mxu0 0.0
      %1151 = vmatpush1.msra.mxu0 0.0
      %1152 = vmatprep.subr.mxu0 0.0
      %1153 = vmatpush1.msra.mxu0 0.0
      %1154 = vmatprep.subr.mxu0 0.0
      %1155 = vmatpush1.msra.mxu0 0.0
      %1156 = vmatprep.subr.mxu0 0.0
      %1157 = vmatpush1.msra.mxu0 0.0
      %1158 = vmatprep.subr.mxu0 0.0
      %1159 = vmatpush1.msra.mxu0 0.0
      %1160 = vmatprep.subr.mxu0 0.0
      %1161 = vmatpush1.msra.mxu0 0.0
      %1162 = vmatprep.subr.mxu0 0.0
      %1163 = vmatpush1.msra.mxu0 0.0
      %1164 = vmatprep.subr.mxu0 0.0
      %1165 = vmatpush1.msra.mxu0 0.0
      %1166 = vmatprep.subr.mxu0 0.0
      %1167 = vmatpush1.msra.mxu0 0.0
      %1168 = vmatprep.subr.mxu0 0.0
      %1169 = vmatpush1.msra.mxu0 0.0
      %1170 = vmatprep.subr.mxu0 0.0
      %1171 = vmatpush1.msra.mxu0 0.0
      %1172 = vmatprep.subr.mxu0 0.0
      %1173 = vmatpush1.msra.mxu0 0.0
      %1174 = vmatprep.subr.mxu0 0.0
      %1175 = vmatpush1.msra.mxu0 0.0
      %1176 = vmatprep.subr.mxu0 0.0
      %1177 = vmatpush1.msra.mxu0 0.0
      %1178 = vmatprep.subr.mxu0 0.0
      %1179 = vmatpush1.msra.mxu0 0.0
      %1180 = vmatprep.subr.mxu0 0.0
      %1181 = vmatpush1.msra.mxu0 0.0
      %1182 = vmatprep.subr.mxu0 0.0
      %1183 = vmatpush1.msra.mxu0 0.0
      %1184 = vmatprep.subr.mxu0 0.0
      %1185 = vmatpush1.msra.mxu0 0.0
      %1186 = vmatprep.subr.mxu0 0.0
      %1187 = vmatpush1.msra.mxu0 0.0
      %1188 = vmatprep.mubr.f32.mxu0 0.0
      %1189 = vmatmul.mubr.f32.gmra.mrb[0].mxu0 %v594
      %v1190 = vpop.f32.mrb[0].mxu0
      %v1191 = vadd.f32 0.0, %v1190
      %v1192 = vpop.f32.mrb[0].mxu0
      %1193 = vmatprep.mubr.f32.mxu0 0.0
      %1194 = vmatmul.mubr.f32.gmra.mrb[0].mxu0 %v597
      %v1195 = vpop.f32.mrb[0].mxu0
      %v1196 = vadd.f32 0.0, %v1195
      %v1197 = vpop.f32.mrb[0].mxu0
      %1198 = vdwg.mxu0
      %1199 = vmatprep.subr.mxu0 0.0
      %1200 = vmatpush1.msra.mxu0 %v577
      %1201 = vmatprep.subr.mxu0 0.0
      %1202 = vmatpush1.msra.mxu0 %v578
      %1203 = vmatprep.subr.mxu0 0.0
      %1204 = vmatpush1.msra.mxu0 %v579
      %1205 = vmatprep.subr.mxu0 0.0
      %1206 = vmatpush1.msra.mxu0 %v580
      %1207 = vmatprep.subr.mxu0 0.0
      %1208 = vmatpush1.msra.mxu0 0.0
      %1209 = vmatprep.subr.mxu0 0.0
      %1210 = vmatpush1.msra.mxu0 0.0
      %1211 = vmatprep.subr.mxu0 0.0
      %1212 = vmatpush1.msra.mxu0 0.0
      %1213 = vmatprep.subr.mxu0 0.0
      %1214 = vmatpush1.msra.mxu0 0.0
      %1215 = vmatprep.subr.mxu0 0.0
      %1216 = vmatpush1.msra.mxu0 0.0
      %1217 = vmatprep.subr.mxu0 0.0
      %1218 = vmatpush1.msra.mxu0 0.0
      %1219 = vmatprep.subr.mxu0 0.0
      %1220 = vmatpush1.msra.mxu0 0.0
      %1221 = vmatprep.subr.mxu0 0.0
      %1222 = vmatpush1.msra.mxu0 0.0
      %1223 = vmatprep.subr.mxu0 0.0
      %1224 = vmatpush1.msra.mxu0 0.0
      %1225 = vmatprep.subr.mxu0 0.0
      %1226 = vmatpush1.msra.mxu0 0.0
      %1227 = vmatprep.subr.mxu0 0.0
      %1228 = vmatpush1.msra.mxu0 0.0
      %1229 = vmatprep.subr.mxu0 0.0
      %1230 = vmatpush1.msra.mxu0 0.0
      %1231 = vmatprep.subr.mxu0 0.0
      %1232 = vmatpush1.msra.mxu0 0.0
      %1233 = vmatprep.subr.mxu0 0.0
      %1234 = vmatpush1.msra.mxu0 0.0
      %1235 = vmatprep.subr.mxu0 0.0
      %1236 = vmatpush1.msra.mxu0 0.0
      %1237 = vmatprep.subr.mxu0 0.0
      %1238 = vmatpush1.msra.mxu0 0.0
      %1239 = vmatprep.subr.mxu0 0.0
      %1240 = vmatpush1.msra.mxu0 0.0
      %1241 = vmatprep.subr.mxu0 0.0
      %1242 = vmatpush1.msra.mxu0 0.0
      %1243 = vmatprep.subr.mxu0 0.0
      %1244 = vmatpush1.msra.mxu0 0.0
      %1245 = vmatprep.subr.mxu0 0.0
      %1246 = vmatpush1.msra.mxu0 0.0
      %1247 = vmatprep.subr.mxu0 0.0
      %1248 = vmatpush1.msra.mxu0 0.0
      %1249 = vmatprep.subr.mxu0 0.0
      %1250 = vmatpush1.msra.mxu0 0.0
      %1251 = vmatprep.subr.mxu0 0.0
      %1252 = vmatpush1.msra.mxu0 0.0
      %1253 = vmatprep.subr.mxu0 0.0
      %1254 = vmatpush1.msra.mxu0 0.0
      %1255 = vmatprep.subr.mxu0 0.0
      %1256 = vmatpush1.msra.mxu0 0.0
      %1257 = vmatprep.subr.mxu0 0.0
      %1258 = vmatpush1.msra.mxu0 0.0
      %1259 = vmatprep.subr.mxu0 0.0
      %1260 = vmatpush1.msra.mxu0 0.0
      %1261 = vmatprep.subr.mxu0 0.0
      %1262 = vmatpush1.msra.mxu0 0.0
      %1263 = vmatprep.mubr.f32.mxu0 0.0
      %1264 = vmatmul.mubr.f32.gmra.mrb[0].mxu0 %v594
      %v1265 = vpop.f32.mrb[0].mxu0
      %v1266 = vadd.f32 0.0, %v1265
      %v1267 = vpop.f32.mrb[0].mxu0
      %1268 = vmatprep.mubr.f32.mxu0 0.0
      %1269 = vmatmul.mubr.f32.gmra.mrb[0].mxu0 %v597
      %v1270 = vpop.f32.mrb[0].mxu0
      %v1271 = vadd.f32 0.0, %v1270
      %v1272 = vpop.f32.mrb[0].mxu0
      %1273 = vdwg.mxu0
      %1274 = vmatprep.subr.mxu0 0.0
      %1275 = vmatpush1.msra.mxu0 %v581
      %1276 = vmatprep.subr.mxu0 0.0
      %1277 = vmatpush1.msra.mxu0 %v582
      %1278 = vmatprep.subr.mxu0 0.0
      %1279 = vmatpush1.msra.mxu0 %v583
      %1280 = vmatprep.subr.mxu0 0.0
      %1281 = vmatpush1.msra.mxu0 %v584
      %1282 = vmatprep.subr.mxu0 0.0
      %1283 = vmatpush1.msra.mxu0 0.0
      %1284 = vmatprep.subr.mxu0 0.0
      %1285 = vmatpush1.msra.mxu0 0.0
      %1286 = vmatprep.subr.mxu0 0.0
      %1287 = vmatpush1.msra.mxu0 0.0
      %1288 = vmatprep.subr.mxu0 0.0
      %1289 = vmatpush1.msra.mxu0 0.0
      %1290 = vmatprep.subr.mxu0 0.0
      %1291 = vmatpush1.msra.mxu0 0.0
      %1292 = vmatprep.subr.mxu0 0.0
      %1293 = vmatpush1.msra.mxu0 0.0
      %1294 = vmatprep.subr.mxu0 0.0
      %1295 = vmatpush1.msra.mxu0 0.0
      %1296 = vmatprep.subr.mxu0 0.0
      %1297 = vmatpush1.msra.mxu0 0.0
      %1298 = vmatprep.subr.mxu0 0.0
      %1299 = vmatpush1.msra.mxu0 0.0
      %1300 = vmatprep.subr.mxu0 0.0
      %1301 = vmatpush1.msra.mxu0 0.0
      %1302 = vmatprep.subr.mxu0 0.0
      %1303 = vmatpush1.msra.mxu0 0.0
      %1304 = vmatprep.subr.mxu0 0.0
      %1305 = vmatpush1.msra.mxu0 0.0
      %1306 = vmatprep.subr.mxu0 0.0
      %1307 = vmatpush1.msra.mxu0 0.0
      %1308 = vmatprep.subr.mxu0 0.0
      %1309 = vmatpush1.msra.mxu0 0.0
      %1310 = vmatprep.subr.mxu0 0.0
      %1311 = vmatpush1.msra.mxu0 0.0
      %1312 = vmatprep.subr.mxu0 0.0
      %1313 = vmatpush1.msra.mxu0 0.0
      %1314 = vmatprep.subr.mxu0 0.0
      %1315 = vmatpush1.msra.mxu0 0.0
      %1316 = vmatprep.subr.mxu0 0.0
      %1317 = vmatpush1.msra.mxu0 0.0
      %1318 = vmatprep.subr.mxu0 0.0
      %1319 = vmatpush1.msra.mxu0 0.0
      %1320 = vmatprep.subr.mxu0 0.0
      %1321 = vmatpush1.msra.mxu0 0.0
      %1322 = vmatprep.subr.mxu0 0.0
      %1323 = vmatpush1.msra.mxu0 0.0
      %1324 = vmatprep.subr.mxu0 0.0
      %1325 = vmatpush1.msra.mxu0 0.0
      %1326 = vmatprep.subr.mxu0 0.0
      %1327 = vmatpush1.msra.mxu0 0.0
      %1328 = vmatprep.subr.mxu0 0.0
      %1329 = vmatpush1.msra.mxu0 0.0
      %1330 = vmatprep.subr.mxu0 0.0
      %1331 = vmatpush1.msra.mxu0 0.0
      %1332 = vmatprep.subr.mxu0 0.0
      %1333 = vmatpush1.msra.mxu0 0.0
      %1334 = vmatprep.subr.mxu0 0.0
      %1335 = vmatpush1.msra.mxu0 0.0
      %1336 = vmatprep.subr.mxu0 0.0
      %1337 = vmatpush1.msra.mxu0 0.0
      %1338 = vmatprep.mubr.f32.mxu0 0.0
      %1339 = vmatmul.mubr.f32.gmra.mrb[0].mxu0 %v594
      %v1340 = vpop.f32.mrb[0].mxu0
      %v1341 = vadd.f32 0.0, %v1340
      %v1342 = vpop.f32.mrb[0].mxu0
      %1343 = vmatprep.mubr.f32.mxu0 0.0
      %1344 = vmatmul.mubr.f32.gmra.mrb[0].mxu0 %v597
      %v1345 = vpop.f32.mrb[0].mxu0
      %v1346 = vadd.f32 0.0, %v1345
      %v1347 = vpop.f32.mrb[0].mxu0
      %1348 = vdwg.mxu0
      %1349 = vmatprep.subr.mxu0 0.0
      %1350 = vmatpush1.msra.mxu0 %v585
      %1351 = vmatprep.subr.mxu0 0.0
      %1352 = vmatpush1.msra.mxu0 %v586
      %1353 = vmatprep.subr.mxu0 0.0
      %1354 = vmatpush1.msra.mxu0 %v587
      %1355 = vmatprep.subr.mxu0 0.0
      %1356 = vmatpush1.msra.mxu0 %v588
      %1357 = vmatprep.subr.mxu0 0.0
      %1358 = vmatpush1.msra.mxu0 0.0
      %1359 = vmatprep.subr.mxu0 0.0
      %1360 = vmatpush1.msra.mxu0 0.0
      %1361 = vmatprep.subr.mxu0 0.0
      %1362 = vmatpush1.msra.mxu0 0.0
      %1363 = vmatprep.subr.mxu0 0.0
      %1364 = vmatpush1.msra.mxu0 0.0
      %1365 = vmatprep.subr.mxu0 0.0
      %1366 = vmatpush1.msra.mxu0 0.0
      %1367 = vmatprep.subr.mxu0 0.0
      %1368 = vmatpush1.msra.mxu0 0.0
      %1369 = vmatprep.subr.mxu0 0.0
      %1370 = vmatpush1.msra.mxu0 0.0
      %1371 = vmatprep.subr.mxu0 0.0
      %1372 = vmatpush1.msra.mxu0 0.0
      %1373 = vmatprep.subr.mxu0 0.0
      %1374 = vmatpush1.msra.mxu0 0.0
      %1375 = vmatprep.subr.mxu0 0.0
      %1376 = vmatpush1.msra.mxu0 0.0
      %1377 = vmatprep.subr.mxu0 0.0
      %1378 = vmatpush1.msra.mxu0 0.0
      %1379 = vmatprep.subr.mxu0 0.0
      %1380 = vmatpush1.msra.mxu0 0.0
      %1381 = vmatprep.subr.mxu0 0.0
      %1382 = vmatpush1.msra.mxu0 0.0
      %1383 = vmatprep.subr.mxu0 0.0
      %1384 = vmatpush1.msra.mxu0 0.0
      %1385 = vmatprep.subr.mxu0 0.0
      %1386 = vmatpush1.msra.mxu0 0.0
      %1387 = vmatprep.subr.mxu0 0.0
      %1388 = vmatpush1.msra.mxu0 0.0
      %1389 = vmatprep.subr.mxu0 0.0
      %1390 = vmatpush1.msra.mxu0 0.0
      %1391 = vmatprep.subr.mxu0 0.0
      %1392 = vmatpush1.msra.mxu0 0.0
      %1393 = vmatprep.subr.mxu0 0.0
      %1394 = vmatpush1.msra.mxu0 0.0
      %1395 = vmatprep.subr.mxu0 0.0
      %1396 = vmatpush1.msra.mxu0 0.0
      %1397 = vmatprep.subr.mxu0 0.0
      %1398 = vmatpush1.msra.mxu0 0.0
      %1399 = vmatprep.subr.mxu0 0.0
      %1400 = vmatpush1.msra.mxu0 0.0
      %1401 = vmatprep.subr.mxu0 0.0
      %1402 = vmatpush1.msra.mxu0 0.0
      %1403 = vmatprep.subr.mxu0 0.0
      %1404 = vmatpush1.msra.mxu0 0.0
      %1405 = vmatprep.subr.mxu0 0.0
      %1406 = vmatpush1.msra.mxu0 0.0
      %1407 = vmatprep.subr.mxu0 0.0
      %1408 = vmatpush1.msra.mxu0 0.0
      %1409 = vmatprep.subr.mxu0 0.0
      %1410 = vmatpush1.msra.mxu0 0.0
      %1411 = vmatprep.subr.mxu0 0.0
      %1412 = vmatpush1.msra.mxu0 0.0
      %1413 = vmatprep.mubr.f32.mxu0 0.0
      %1414 = vmatmul.mubr.f32.gmra.mrb[0].mxu0 %v594
      %v1415 = vpop.f32.mrb[0].mxu0
      %v1416 = vadd.f32 0.0, %v1415
      %v1417 = vpop.f32.mrb[0].mxu0
      %1418 = vmatprep.mubr.f32.mxu0 0.0
      %1419 = vmatmul.mubr.f32.gmra.mrb[0].mxu0 %v597
      %v1420 = vpop.f32.mrb[0].mxu0
      %v1421 = vadd.f32 0.0, %v1420
      %v1422 = vpop.f32.mrb[0].mxu0
      %1423 = vdwg.mxu0
      %1424 = vmatprep.subr.mxu0 0.0
      %1425 = vmatpush1.msra.mxu0 %v589
      %1426 = vmatprep.subr.mxu0 0.0
      %1427 = vmatpush1.msra.mxu0 %v590
      %1428 = vmatprep.subr.mxu0 0.0
      %1429 = vmatpush1.msra.mxu0 %v591
      %1430 = vmatprep.subr.mxu0 0.0
      %1431 = vmatpush1.msra.mxu0 %v592
      %1432 = vmatprep.subr.mxu0 0.0
      %1433 = vmatpush1.msra.mxu0 0.0
      %1434 = vmatprep.subr.mxu0 0.0
      %1435 = vmatpush1.msra.mxu0 0.0
      %1436 = vmatprep.subr.mxu0 0.0
      %1437 = vmatpush1.msra.mxu0 0.0
      %1438 = vmatprep.subr.mxu0 0.0
      %1439 = vmatpush1.msra.mxu0 0.0
      %1440 = vmatprep.subr.mxu0 0.0
      %1441 = vmatpush1.msra.mxu0 0.0
      %1442 = vmatprep.subr.mxu0 0.0
      %1443 = vmatpush1.msra.mxu0 0.0
      %1444 = vmatprep.subr.mxu0 0.0
      %1445 = vmatpush1.msra.mxu0 0.0
      %1446 = vmatprep.subr.mxu0 0.0
      %1447 = vmatpush1.msra.mxu0 0.0
      %1448 = vmatprep.subr.mxu0 0.0
      %1449 = vmatpush1.msra.mxu0 0.0
      %1450 = vmatprep.subr.mxu0 0.0
      %1451 = vmatpush1.msra.mxu0 0.0
      %1452 = vmatprep.subr.mxu0 0.0
      %1453 = vmatpush1.msra.mxu0 0.0
      %1454 = vmatprep.subr.mxu0 0.0
      %1455 = vmatpush1.msra.mxu0 0.0
      %1456 = vmatprep.subr.mxu0 0.0
      %1457 = vmatpush1.msra.mxu0 0.0
      %1458 = vmatprep.subr.mxu0 0.0
      %1459 = vmatpush1.msra.mxu0 0.0
      %1460 = vmatprep.subr.mxu0 0.0
      %1461 = vmatpush1.msra.mxu0 0.0
      %1462 = vmatprep.subr.mxu0 0.0
      %1463 = vmatpush1.msra.mxu0 0.0
      %1464 = vmatprep.subr.mxu0 0.0
      %1465 = vmatpush1.msra.mxu0 0.0
      %1466 = vmatprep.subr.mxu0 0.0
      %1467 = vmatpush1.msra.mxu0 0.0
      %1468 = vmatprep.subr.mxu0 0.0
      %1469 = vmatpush1.msra.mxu0 0.0
      %1470 = vmatprep.subr.mxu0 0.0
      %1471 = vmatpush1.msra.mxu0 0.0
      %1472 = vmatprep.subr.mxu0 0.0
      %1473 = vmatpush1.msra.mxu0 0.0
      %1474 = vmatprep.subr.mxu0 0.0
      %1475 = vmatpush1.msra.mxu0 0.0
      %1476 = vmatprep.subr.mxu0 0.0
      %1477 = vmatpush1.msra.mxu0 0.0
      %1478 = vmatprep.subr.mxu0 0.0
      %1479 = vmatpush1.msra.mxu0 0.0
      %1480 = vmatprep.subr.mxu0 0.0
      %1481 = vmatpush1.msra.mxu0 0.0
      %1482 = vmatprep.subr.mxu0 0.0
      %1483 = vmatpush1.msra.mxu0 0.0
      %1484 = vmatprep.subr.mxu0 0.0
      %1485 = vmatpush1.msra.mxu0 0.0
      %1486 = vmatprep.subr.mxu0 0.0
      %1487 = vmatpush1.msra.mxu0 0.0
      %1488 = vmatprep.mubr.f32.mxu0 0.0
      %1489 = vmatmul.mubr.f32.gmra.mrb[0].mxu0 %v594
      %v1490 = vpop.f32.mrb[0].mxu0
      %v1491 = vadd.f32 0.0, %v1490
      %v1492 = vpop.f32.mrb[0].mxu0
      %1493 = vmatprep.mubr.f32.mxu0 0.0
      %1494 = vmatmul.mubr.f32.gmra.mrb[0].mxu0 %v597
      %v1495 = vpop.f32.mrb[0].mxu0
      %v1496 = vadd.f32 0.0, %v1495
      %v1497 = vpop.f32.mrb[0].mxu0
      %1498 = vdwg.mxu0
      %v1499 = vld [vmem:[%s5] sm:$0xff]
      %vm1500 = vcmask 64512
      %v1502 = vsel %vm1500, %v666, 0
      %v1505 = vsel %vm1500, %v671, 0
      %v1508 = vsel %vm1500, %v741, 0
      %v1511 = vsel %vm1500, %v746, 0
      %v1514 = vsel %vm1500, %v816, 0
      %v1517 = vsel %vm1500, %v821, 0
      %v1520 = vsel %vm1500, %v891, 0
      %v1523 = vsel %vm1500, %v896, 0
      %v1526 = vsel %vm1500, %v966, 0
      %v1529 = vsel %vm1500, %v971, 0
      %v1532 = vsel %vm1500, %v1041, 0
      %v1535 = vsel %vm1500, %v1046, 0
      %v1538 = vsel %vm1500, %v1116, 0
      %v1541 = vsel %vm1500, %v1121, 0
      %v1544 = vsel %vm1500, %v1191, 0
      %v1547 = vsel %vm1500, %v1196, 0
      %1549 = vmatprep.subr.mxu0 0.0
      %1550 = vmatpush1.msra.mxu0 %v1499
      %1551 = vmatprep.subr.mxu0 0.0
      %1552 = vmatpush1.msra.mxu0 0.0
      %1553 = vmatprep.subr.mxu0 0.0
      %1554 = vmatpush1.msra.mxu0 0.0
      %1555 = vmatprep.subr.mxu0 0.0
      %1556 = vmatpush1.msra.mxu0 0.0
      %1557 = vmatprep.subr.mxu0 0.0
      %1558 = vmatpush1.msra.mxu0 0.0
      %1559 = vmatprep.subr.mxu0 0.0
      %1560 = vmatpush1.msra.mxu0 0.0
      %1561 = vmatprep.subr.mxu0 0.0
      %1562 = vmatpush1.msra.mxu0 0.0
      %1563 = vmatprep.subr.mxu0 0.0
      %1564 = vmatpush1.msra.mxu0 0.0
      %1565 = vmatprep.subr.mxu0 0.0
      %1566 = vmatpush1.msra.mxu0 0.0
      %1567 = vmatprep.subr.mxu0 0.0
      %1568 = vmatpush1.msra.mxu0 0.0
      %1569 = vmatprep.subr.mxu0 0.0
      %1570 = vmatpush1.msra.mxu0 0.0
      %1571 = vmatprep.subr.mxu0 0.0
      %1572 = vmatpush1.msra.mxu0 0.0
      %1573 = vmatprep.subr.mxu0 0.0
      %1574 = vmatpush1.msra.mxu0 0.0
      %1575 = vmatprep.subr.mxu0 0.0
      %1576 = vmatpush1.msra.mxu0 0.0
      %1577 = vmatprep.subr.mxu0 0.0
      %1578 = vmatpush1.msra.mxu0 0.0
      %1579 = vmatprep.subr.mxu0 0.0
      %1580 = vmatpush1.msra.mxu0 0.0
      %1581 = vmatprep.subr.mxu0 0.0
      %1582 = vmatpush1.msra.mxu0 0.0
      %1583 = vmatprep.subr.mxu0 0.0
      %1584 = vmatpush1.msra.mxu0 0.0
      %1585 = vmatprep.subr.mxu0 0.0
      %1586 = vmatpush1.msra.mxu0 0.0
      %1587 = vmatprep.subr.mxu0 0.0
      %1588 = vmatpush1.msra.mxu0 0.0
      %1589 = vmatprep.subr.mxu0 0.0
      %1590 = vmatpush1.msra.mxu0 0.0
      %1591 = vmatprep.subr.mxu0 0.0
      %1592 = vmatpush1.msra.mxu0 0.0
      %1593 = vmatprep.subr.mxu0 0.0
      %1594 = vmatpush1.msra.mxu0 0.0
      %1595 = vmatprep.subr.mxu0 0.0
      %1596 = vmatpush1.msra.mxu0 0.0
      %1597 = vmatprep.subr.mxu0 0.0
      %1598 = vmatpush1.msra.mxu0 0.0
      %1599 = vmatprep.subr.mxu0 0.0
      %1600 = vmatpush1.msra.mxu0 0.0
      %1601 = vmatprep.subr.mxu0 0.0
      %1602 = vmatpush1.msra.mxu0 0.0
      %1603 = vmatprep.subr.mxu0 0.0
      %1604 = vmatpush1.msra.mxu0 0.0
      %1605 = vmatprep.subr.mxu0 0.0
      %1606 = vmatpush1.msra.mxu0 0.0
      %1607 = vmatprep.subr.mxu0 0.0
      %1608 = vmatpush1.msra.mxu0 0.0
      %1609 = vmatprep.subr.mxu0 0.0
      %1610 = vmatpush1.msra.mxu0 0.0
      %1611 = vmatprep.subr.mxu0 0.0
      %1612 = vmatpush1.msra.mxu0 0.0
      %1613 = vmatprep.mubr.f32.mxu0 0.0
      %1614 = vmatmul.mubr.f32.gmra.mrb[0].mxu0 %v1502
      %v1615 = vpop.f32.mrb[0].mxu0
      %v1616 = vadd.f32 0.0, %v1615
      %v1617 = vpop.f32.mrb[0].mxu0
      %1618 = vmatprep.mubr.f32.mxu0 0.0
      %1619 = vmatmul.mubr.f32.gmra.mrb[0].mxu0 %v1505
      %v1620 = vpop.f32.mrb[0].mxu0
      %v1621 = vadd.f32 0.0, %v1620
      %v1622 = vpop.f32.mrb[0].mxu0
      %1623 = vmatprep.mubr.f32.mxu0 0.0
      %1624 = vmatmul.mubr.f32.gmra.mrb[0].mxu0 %v1508
      %v1625 = vpop.f32.mrb[0].mxu0
      %v1626 = vadd.f32 0.0, %v1625
      %v1627 = vpop.f32.mrb[0].mxu0
      %1628 = vmatprep.mubr.f32.mxu0 0.0
      %1629 = vmatmul.mubr.f32.gmra.mrb[0].mxu0 %v1511
      %v1630 = vpop.f32.mrb[0].mxu0
      %v1631 = vadd.f32 0.0, %v1630
      %v1632 = vpop.f32.mrb[0].mxu0
      %1633 = vmatprep.mubr.f32.mxu0 0.0
      %1634 = vmatmul.mubr.f32.gmra.mrb[0].mxu0 %v1514
      %v1635 = vpop.f32.mrb[0].mxu0
      %v1636 = vadd.f32 0.0, %v1635
      %v1637 = vpop.f32.mrb[0].mxu0
      %1638 = vmatprep.mubr.f32.mxu0 0.0
      %1639 = vmatmul.mubr.f32.gmra.mrb[0].mxu0 %v1517
      %v1640 = vpop.f32.mrb[0].mxu0
      %v1641 = vadd.f32 0.0, %v1640
      %v1642 = vpop.f32.mrb[0].mxu0
      %1643 = vmatprep.mubr.f32.mxu0 0.0
      %1644 = vmatmul.mubr.f32.gmra.mrb[0].mxu0 %v1520
      %v1645 = vpop.f32.mrb[0].mxu0
      %v1646 = vadd.f32 0.0, %v1645
      %v1647 = vpop.f32.mrb[0].mxu0
      %1648 = vmatprep.mubr.f32.mxu0 0.0
      %1649 = vmatmul.mubr.f32.gmra.mrb[0].mxu0 %v1523
      %v1650 = vpop.f32.mrb[0].mxu0
      %v1651 = vadd.f32 0.0, %v1650
      %v1652 = vpop.f32.mrb[0].mxu0
      %1653 = vmatprep.mubr.f32.mxu0 0.0
      %1654 = vmatmul.mubr.f32.gmra.mrb[0].mxu0 %v1526
      %v1655 = vpop.f32.mrb[0].mxu0
      %v1656 = vadd.f32 0.0, %v1655
      %v1657 = vpop.f32.mrb[0].mxu0
      %1658 = vmatprep.mubr.f32.mxu0 0.0
      %1659 = vmatmul.mubr.f32.gmra.mrb[0].mxu0 %v1529
      %v1660 = vpop.f32.mrb[0].mxu0
      %v1661 = vadd.f32 0.0, %v1660
      %v1662 = vpop.f32.mrb[0].mxu0
      %1663 = vmatprep.mubr.f32.mxu0 0.0
      %1664 = vmatmul.mubr.f32.gmra.mrb[0].mxu0 %v1532
      %v1665 = vpop.f32.mrb[0].mxu0
      %v1666 = vadd.f32 0.0, %v1665
      %v1667 = vpop.f32.mrb[0].mxu0
      %1668 = vmatprep.mubr.f32.mxu0 0.0
      %1669 = vmatmul.mubr.f32.gmra.mrb[0].mxu0 %v1535
      %v1670 = vpop.f32.mrb[0].mxu0
      %v1671 = vadd.f32 0.0, %v1670
      %v1672 = vpop.f32.mrb[0].mxu0
      %1673 = vmatprep.mubr.f32.mxu0 0.0
      %1674 = vmatmul.mubr.f32.gmra.mrb[0].mxu0 %v1538
      %v1675 = vpop.f32.mrb[0].mxu0
      %v1676 = vadd.f32 0.0, %v1675
      %v1677 = vpop.f32.mrb[0].mxu0
      %1678 = vmatprep.mubr.f32.mxu0 0.0
      %1679 = vmatmul.mubr.f32.gmra.mrb[0].mxu0 %v1541
      %v1680 = vpop.f32.mrb[0].mxu0
      %v1681 = vadd.f32 0.0, %v1680
      %v1682 = vpop.f32.mrb[0].mxu0
      %1683 = vmatprep.mubr.f32.mxu0 0.0
      %1684 = vmatmul.mubr.f32.gmra.mrb[0].mxu0 %v1544
      %v1685 = vpop.f32.mrb[0].mxu0
      %v1686 = vadd.f32 0.0, %v1685
      %v1687 = vpop.f32.mrb[0].mxu0
      %1688 = vmatprep.mubr.f32.mxu0 0.0
      %1689 = vmatmul.mubr.f32.gmra.mrb[0].mxu0 %v1547
      %v1690 = vpop.f32.mrb[0].mxu0
      %v1691 = vadd.f32 0.0, %v1690
      %v1692 = vpop.f32.mrb[0].mxu0
      %1693 = vdwg.mxu0
      %v1694 = vld [vmem:[%s3] sm:$0xff]
      %v1695 = vld [vmem:[%s3 + $0x8] sm:$0xff]
      %v1696 = vmul.f32 %v666, %v1694
      %v1697 = vmul.f32 %v671, %v1695
      %v1698 = vmul.f32 %v741, %v1694
      %v1699 = vmul.f32 %v746, %v1695
      %v1700 = vmul.f32 %v816, %v1694
      %v1701 = vmul.f32 %v821, %v1695
      %v1702 = vmul.f32 %v891, %v1694
      %v1703 = vmul.f32 %v896, %v1695
      %v1704 = vmul.f32 %v966, %v1694
      %v1705 = vmul.f32 %v971, %v1695
      %v1706 = vmul.f32 %v1041, %v1694
      %v1707 = vmul.f32 %v1046, %v1695
      %v1708 = vmul.f32 %v1116, %v1694
      %v1709 = vmul.f32 %v1121, %v1695
      %v1710 = vmul.f32 %v1191, %v1694
      %v1711 = vmul.f32 %v1196, %v1695
      %v1712 = vld [vmem:[%s4] sm:$0xff]
      %v1713 = vld [vmem:[%s4 + $0x8] sm:$0xff]
      %v1714 = vmul.f32 %v1616, %v1712
      %v1715 = vmul.f32 %v1621, %v1713
      %v1716 = vmul.f32 %v1626, %v1712
      %v1717 = vmul.f32 %v1631, %v1713
      %v1718 = vmul.f32 %v1636, %v1712
      %v1719 = vmul.f32 %v1641, %v1713
      %v1720 = vmul.f32 %v1646, %v1712
      %v1721 = vmul.f32 %v1651, %v1713
      %v1722 = vmul.f32 %v1656, %v1712
      %v1723 = vmul.f32 %v1661, %v1713
      %v1724 = vmul.f32 %v1666, %v1712
      %v1725 = vmul.f32 %v1671, %v1713
      %v1726 = vmul.f32 %v1676, %v1712
      %v1727 = vmul.f32 %v1681, %v1713
      %v1728 = vmul.f32 %v1686, %v1712
      %v1729 = vmul.f32 %v1691, %v1713
      %v1730 = vadd.f32 %v1696, %v1714
      %v1731 = vadd.f32 %v1697, %v1715
      %v1732 = vadd.f32 %v1698, %v1716
      %v1733 = vadd.f32 %v1699, %v1717
      %v1734 = vadd.f32 %v1700, %v1718
      %v1735 = vadd.f32 %v1701, %v1719
      %v1736 = vadd.f32 %v1702, %v1720
      %v1737 = vadd.f32 %v1703, %v1721
      %v1738 = vadd.f32 %v1704, %v1722
      %v1739 = vadd.f32 %v1705, %v1723
      %v1740 = vadd.f32 %v1706, %v1724
      %v1741 = vadd.f32 %v1707, %v1725
      %v1742 = vadd.f32 %v1708, %v1726
      %v1743 = vadd.f32 %v1709, %v1727
      %v1744 = vadd.f32 %v1710, %v1728
      %v1745 = vadd.f32 %v1711, %v1729
      %v1746 = vld [vmem:[%s6] sm:$0xff]
      %v1747 = vld [vmem:[%s6 + $0x8] sm:$0xff]
      %v1748 = vld [vmem:[%s6 + $0x10] sm:$0xff]
      %v1749 = vld [vmem:[%s6 + $0x18] sm:$0xff]
      %v1750 = vld [vmem:[%s6 + $0x20] sm:$0xff]
      %v1751 = vld [vmem:[%s6 + $0x28] sm:$0xff]
      %v1752 = vld [vmem:[%s6 + $0x30] sm:$0xff]
      %v1753 = vld [vmem:[%s6 + $0x38] sm:$0xff]
      %v1755 = vsel %vm1500, %v1730, 0
      %v1758 = vsel %vm1500, %v1738, 0
      %1760 = vmatprep.subr.mxu0 0.0
      %1761 = vmatpush1.xpose.msra.mxu0 %v1758
      %1762 = vmatprep.subr.mxu0 0.0
      %1763 = vmatpush1.xpose.msra.mxu0 0.0
      %1764 = vmatprep.subr.mxu0 0.0
      %1765 = vmatpush1.xpose.msra.mxu0 0.0
      %1766 = vmatprep.subr.mxu0 0.0
      %1767 = vmatpush1.xpose.msra.mxu0 0.0
      %1768 = vmatprep.subr.mxu0 0.0
      %1769 = vmatpush1.xpose.msra.mxu0 0.0
      %1770 = vmatprep.subr.mxu0 0.0
      %1771 = vmatpush1.xpose.msra.mxu0 0.0
      %1772 = vmatprep.subr.mxu0 0.0
      %1773 = vmatpush1.xpose.msra.mxu0 0.0
      %1774 = vmatprep.subr.mxu0 0.0
      %1775 = vmatpush1.xpose.msra.mxu0 0.0
      %1776 = vmatprep.subr.mxu0 0.0
      %1777 = vmatpush1.xpose.msra.mxu0 0.0
      %1778 = vmatprep.subr.mxu0 0.0
      %1779 = vmatpush1.xpose.msra.mxu0 0.0
      %1780 = vmatprep.subr.mxu0 0.0
      %1781 = vmatpush1.xpose.msra.mxu0 0.0
      %1782 = vmatprep.subr.mxu0 0.0
      %1783 = vmatpush1.xpose.msra.mxu0 0.0
      %1784 = vmatprep.subr.mxu0 0.0
      %1785 = vmatpush1.xpose.msra.mxu0 0.0
      %1786 = vmatprep.subr.mxu0 0.0
      %1787 = vmatpush1.xpose.msra.mxu0 0.0
      %1788 = vmatprep.subr.mxu0 0.0
      %1789 = vmatpush1.xpose.msra.mxu0 0.0
      %1790 = vmatprep.subr.mxu0 0.0
      %1791 = vmatpush1.xpose.msra.mxu0 0.0
      %1792 = vmatprep.subr.mxu0 0.0
      %1793 = vmatpush1.xpose.msra.mxu0 0.0
      %1794 = vmatprep.subr.mxu0 0.0
      %1795 = vmatpush1.xpose.msra.mxu0 0.0
      %1796 = vmatprep.subr.mxu0 0.0
      %1797 = vmatpush1.xpose.msra.mxu0 0.0
      %1798 = vmatprep.subr.mxu0 0.0
      %1799 = vmatpush1.xpose.msra.mxu0 0.0
      %1800 = vmatprep.subr.mxu0 0.0
      %1801 = vmatpush1.xpose.msra.mxu0 0.0
      %1802 = vmatprep.subr.mxu0 0.0
      %1803 = vmatpush1.xpose.msra.mxu0 0.0
      %1804 = vmatprep.subr.mxu0 0.0
      %1805 = vmatpush1.xpose.msra.mxu0 0.0
      %1806 = vmatprep.subr.mxu0 0.0
      %1807 = vmatpush1.xpose.msra.mxu0 0.0
      %1808 = vmatprep.subr.mxu0 0.0
      %1809 = vmatpush1.xpose.msra.mxu0 0.0
      %1810 = vmatprep.subr.mxu0 0.0
      %1811 = vmatpush1.xpose.msra.mxu0 0.0
      %1812 = vmatprep.subr.mxu0 0.0
      %1813 = vmatpush1.xpose.msra.mxu0 0.0
      %1814 = vmatprep.subr.mxu0 0.0
      %1815 = vmatpush1.xpose.msra.mxu0 0.0
      %1816 = vmatprep.subr.mxu0 0.0
      %1817 = vmatpush1.xpose.msra.mxu0 0.0
      %1818 = vmatprep.subr.mxu0 0.0
      %1819 = vmatpush1.xpose.msra.mxu0 0.0
      %1820 = vmatprep.subr.mxu0 0.0
      %1821 = vmatpush1.xpose.msra.mxu0 0.0
      %1822 = vmatprep.subr.mxu0 0.0
      %1823 = vmatpush1.xpose.msra.mxu0 0.0
      %1824 = vmatprep.mubr.f32.mxu0 0.0
      %1825 = vmatmul.mubr.f32.gmra.mrb[0].mxu0 %v1755
      %v1826 = vpop.f32.mrb[0].mxu0
      %v1827 = vadd.f32 %v1746, %v1826
      %v1828 = vpop.f32.mrb[0].mxu0
      %1829 = vdwg.mxu0
      %v1831 = vsel %vm1500, %v1731, 0
      %v1834 = vsel %vm1500, %v1739, 0
      %1836 = vmatprep.subr.mxu0 0.0
      %1837 = vmatpush1.xpose.msra.mxu0 %v1834
      %1838 = vmatprep.subr.mxu0 0.0
      %1839 = vmatpush1.xpose.msra.mxu0 0.0
      %1840 = vmatprep.subr.mxu0 0.0
      %1841 = vmatpush1.xpose.msra.mxu0 0.0
      %1842 = vmatprep.subr.mxu0 0.0
      %1843 = vmatpush1.xpose.msra.mxu0 0.0
      %1844 = vmatprep.subr.mxu0 0.0
      %1845 = vmatpush1.xpose.msra.mxu0 0.0
      %1846 = vmatprep.subr.mxu0 0.0
      %1847 = vmatpush1.xpose.msra.mxu0 0.0
      %1848 = vmatprep.subr.mxu0 0.0
      %1849 = vmatpush1.xpose.msra.mxu0 0.0
      %1850 = vmatprep.subr.mxu0 0.0
      %1851 = vmatpush1.xpose.msra.mxu0 0.0
      %1852 = vmatprep.subr.mxu0 0.0
      %1853 = vmatpush1.xpose.msra.mxu0 0.0
      %1854 = vmatprep.subr.mxu0 0.0
      %1855 = vmatpush1.xpose.msra.mxu0 0.0
      %1856 = vmatprep.subr.mxu0 0.0
      %1857 = vmatpush1.xpose.msra.mxu0 0.0
      %1858 = vmatprep.subr.mxu0 0.0
      %1859 = vmatpush1.xpose.msra.mxu0 0.0
      %1860 = vmatprep.subr.mxu0 0.0
      %1861 = vmatpush1.xpose.msra.mxu0 0.0
      %1862 = vmatprep.subr.mxu0 0.0
      %1863 = vmatpush1.xpose.msra.mxu0 0.0
      %1864 = vmatprep.subr.mxu0 0.0
      %1865 = vmatpush1.xpose.msra.mxu0 0.0
      %1866 = vmatprep.subr.mxu0 0.0
      %1867 = vmatpush1.xpose.msra.mxu0 0.0
      %1868 = vmatprep.subr.mxu0 0.0
      %1869 = vmatpush1.xpose.msra.mxu0 0.0
      %1870 = vmatprep.subr.mxu0 0.0
      %1871 = vmatpush1.xpose.msra.mxu0 0.0
      %1872 = vmatprep.subr.mxu0 0.0
      %1873 = vmatpush1.xpose.msra.mxu0 0.0
      %1874 = vmatprep.subr.mxu0 0.0
      %1875 = vmatpush1.xpose.msra.mxu0 0.0
      %1876 = vmatprep.subr.mxu0 0.0
      %1877 = vmatpush1.xpose.msra.mxu0 0.0
      %1878 = vmatprep.subr.mxu0 0.0
      %1879 = vmatpush1.xpose.msra.mxu0 0.0
      %1880 = vmatprep.subr.mxu0 0.0
      %1881 = vmatpush1.xpose.msra.mxu0 0.0
      %1882 = vmatprep.subr.mxu0 0.0
      %1883 = vmatpush1.xpose.msra.mxu0 0.0
      %1884 = vmatprep.subr.mxu0 0.0
      %1885 = vmatpush1.xpose.msra.mxu0 0.0
      %1886 = vmatprep.subr.mxu0 0.0
      %1887 = vmatpush1.xpose.msra.mxu0 0.0
      %1888 = vmatprep.subr.mxu0 0.0
      %1889 = vmatpush1.xpose.msra.mxu0 0.0
      %1890 = vmatprep.subr.mxu0 0.0
      %1891 = vmatpush1.xpose.msra.mxu0 0.0
      %1892 = vmatprep.subr.mxu0 0.0
      %1893 = vmatpush1.xpose.msra.mxu0 0.0
      %1894 = vmatprep.subr.mxu0 0.0
      %1895 = vmatpush1.xpose.msra.mxu0 0.0
      %1896 = vmatprep.subr.mxu0 0.0
      %1897 = vmatpush1.xpose.msra.mxu0 0.0
      %1898 = vmatprep.subr.mxu0 0.0
      %1899 = vmatpush1.xpose.msra.mxu0 0.0
      %1900 = vmatprep.mubr.f32.mxu0 0.0
      %1901 = vmatmul.mubr.f32.gmra.mrb[0].mxu0 %v1831
      %v1902 = vpop.f32.mrb[0].mxu0
      %v1903 = vadd.f32 %v1747, %v1902
      %v1904 = vpop.f32.mrb[0].mxu0
      %1905 = vdwg.mxu0
      %v1907 = vsel %vm1500, %v1732, 0
      %v1910 = vsel %vm1500, %v1740, 0
      %1912 = vmatprep.subr.mxu0 0.0
      %1913 = vmatpush1.xpose.msra.mxu0 %v1910
      %1914 = vmatprep.subr.mxu0 0.0
      %1915 = vmatpush1.xpose.msra.mxu0 0.0
      %1916 = vmatprep.subr.mxu0 0.0
      %1917 = vmatpush1.xpose.msra.mxu0 0.0
      %1918 = vmatprep.subr.mxu0 0.0
      %1919 = vmatpush1.xpose.msra.mxu0 0.0
      %1920 = vmatprep.subr.mxu0 0.0
      %1921 = vmatpush1.xpose.msra.mxu0 0.0
      %1922 = vmatprep.subr.mxu0 0.0
      %1923 = vmatpush1.xpose.msra.mxu0 0.0
      %1924 = vmatprep.subr.mxu0 0.0
      %1925 = vmatpush1.xpose.msra.mxu0 0.0
      %1926 = vmatprep.subr.mxu0 0.0
      %1927 = vmatpush1.xpose.msra.mxu0 0.0
      %1928 = vmatprep.subr.mxu0 0.0
      %1929 = vmatpush1.xpose.msra.mxu0 0.0
      %1930 = vmatprep.subr.mxu0 0.0
      %1931 = vmatpush1.xpose.msra.mxu0 0.0
      %1932 = vmatprep.subr.mxu0 0.0
      %1933 = vmatpush1.xpose.msra.mxu0 0.0
      %1934 = vmatprep.subr.mxu0 0.0
      %1935 = vmatpush1.xpose.msra.mxu0 0.0
      %1936 = vmatprep.subr.mxu0 0.0
      %1937 = vmatpush1.xpose.msra.mxu0 0.0
      %1938 = vmatprep.subr.mxu0 0.0
      %1939 = vmatpush1.xpose.msra.mxu0 0.0
      %1940 = vmatprep.subr.mxu0 0.0
      %1941 = vmatpush1.xpose.msra.mxu0 0.0
      %1942 = vmatprep.subr.mxu0 0.0
      %1943 = vmatpush1.xpose.msra.mxu0 0.0
      %1944 = vmatprep.subr.mxu0 0.0
      %1945 = vmatpush1.xpose.msra.mxu0 0.0
      %1946 = vmatprep.subr.mxu0 0.0
      %1947 = vmatpush1.xpose.msra.mxu0 0.0
      %1948 = vmatprep.subr.mxu0 0.0
      %1949 = vmatpush1.xpose.msra.mxu0 0.0
      %1950 = vmatprep.subr.mxu0 0.0
      %1951 = vmatpush1.xpose.msra.mxu0 0.0
      %1952 = vmatprep.subr.mxu0 0.0
      %1953 = vmatpush1.xpose.msra.mxu0 0.0
      %1954 = vmatprep.subr.mxu0 0.0
      %1955 = vmatpush1.xpose.msra.mxu0 0.0
      %1956 = vmatprep.subr.mxu0 0.0
      %1957 = vmatpush1.xpose.msra.mxu0 0.0
      %1958 = vmatprep.subr.mxu0 0.0
      %1959 = vmatpush1.xpose.msra.mxu0 0.0
      %1960 = vmatprep.subr.mxu0 0.0
      %1961 = vmatpush1.xpose.msra.mxu0 0.0
      %1962 = vmatprep.subr.mxu0 0.0
      %1963 = vmatpush1.xpose.msra.mxu0 0.0
      %1964 = vmatprep.subr.mxu0 0.0
      %1965 = vmatpush1.xpose.msra.mxu0 0.0
      %1966 = vmatprep.subr.mxu0 0.0
      %1967 = vmatpush1.xpose.msra.mxu0 0.0
      %1968 = vmatprep.subr.mxu0 0.0
      %1969 = vmatpush1.xpose.msra.mxu0 0.0
      %1970 = vmatprep.subr.mxu0 0.0
      %1971 = vmatpush1.xpose.msra.mxu0 0.0
      %1972 = vmatprep.subr.mxu0 0.0
      %1973 = vmatpush1.xpose.msra.mxu0 0.0
      %1974 = vmatprep.subr.mxu0 0.0
      %1975 = vmatpush1.xpose.msra.mxu0 0.0
      %1976 = vmatprep.mubr.f32.mxu0 0.0
      %1977 = vmatmul.mubr.f32.gmra.mrb[0].mxu0 %v1907
      %v1978 = vpop.f32.mrb[0].mxu0
      %v1979 = vadd.f32 %v1748, %v1978
      %v1980 = vpop.f32.mrb[0].mxu0
      %1981 = vdwg.mxu0
      %v1983 = vsel %vm1500, %v1733, 0
      %v1986 = vsel %vm1500, %v1741, 0
      %1988 = vmatprep.subr.mxu0 0.0
      %1989 = vmatpush1.xpose.msra.mxu0 %v1986
      %1990 = vmatprep.subr.mxu0 0.0
      %1991 = vmatpush1.xpose.msra.mxu0 0.0
      %1992 = vmatprep.subr.mxu0 0.0
      %1993 = vmatpush1.xpose.msra.mxu0 0.0
      %1994 = vmatprep.subr.mxu0 0.0
      %1995 = vmatpush1.xpose.msra.mxu0 0.0
      %1996 = vmatprep.subr.mxu0 0.0
      %1997 = vmatpush1.xpose.msra.mxu0 0.0
      %1998 = vmatprep.subr.mxu0 0.0
      %1999 = vmatpush1.xpose.msra.mxu0 0.0
      %2000 = vmatprep.subr.mxu0 0.0
      %2001 = vmatpush1.xpose.msra.mxu0 0.0
      %2002 = vmatprep.subr.mxu0 0.0
      %2003 = vmatpush1.xpose.msra.mxu0 0.0
      %2004 = vmatprep.subr.mxu0 0.0
      %2005 = vmatpush1.xpose.msra.mxu0 0.0
      %2006 = vmatprep.subr.mxu0 0.0
      %2007 = vmatpush1.xpose.msra.mxu0 0.0
      %2008 = vmatprep.subr.mxu0 0.0
      %2009 = vmatpush1.xpose.msra.mxu0 0.0
      %2010 = vmatprep.subr.mxu0 0.0
      %2011 = vmatpush1.xpose.msra.mxu0 0.0
      %2012 = vmatprep.subr.mxu0 0.0
      %2013 = vmatpush1.xpose.msra.mxu0 0.0
      %2014 = vmatprep.subr.mxu0 0.0
      %2015 = vmatpush1.xpose.msra.mxu0 0.0
      %2016 = vmatprep.subr.mxu0 0.0
      %2017 = vmatpush1.xpose.msra.mxu0 0.0
      %2018 = vmatprep.subr.mxu0 0.0
      %2019 = vmatpush1.xpose.msra.mxu0 0.0
      %2020 = vmatprep.subr.mxu0 0.0
      %2021 = vmatpush1.xpose.msra.mxu0 0.0
      %2022 = vmatprep.subr.mxu0 0.0
      %2023 = vmatpush1.xpose.msra.mxu0 0.0
      %2024 = vmatprep.subr.mxu0 0.0
      %2025 = vmatpush1.xpose.msra.mxu0 0.0
      %2026 = vmatprep.subr.mxu0 0.0
      %2027 = vmatpush1.xpose.msra.mxu0 0.0
      %2028 = vmatprep.subr.mxu0 0.0
      %2029 = vmatpush1.xpose.msra.mxu0 0.0
      %2030 = vmatprep.subr.mxu0 0.0
      %2031 = vmatpush1.xpose.msra.mxu0 0.0
      %2032 = vmatprep.subr.mxu0 0.0
      %2033 = vmatpush1.xpose.msra.mxu0 0.0
      %2034 = vmatprep.subr.mxu0 0.0
      %2035 = vmatpush1.xpose.msra.mxu0 0.0
      %2036 = vmatprep.subr.mxu0 0.0
      %2037 = vmatpush1.xpose.msra.mxu0 0.0
      %2038 = vmatprep.subr.mxu0 0.0
      %2039 = vmatpush1.xpose.msra.mxu0 0.0
      %2040 = vmatprep.subr.mxu0 0.0
      %2041 = vmatpush1.xpose.msra.mxu0 0.0
      %2042 = vmatprep.subr.mxu0 0.0
      %2043 = vmatpush1.xpose.msra.mxu0 0.0
      %2044 = vmatprep.subr.mxu0 0.0
      %2045 = vmatpush1.xpose.msra.mxu0 0.0
      %2046 = vmatprep.subr.mxu0 0.0
      %2047 = vmatpush1.xpose.msra.mxu0 0.0
      %2048 = vmatprep.subr.mxu0 0.0
      %2049 = vmatpush1.xpose.msra.mxu0 0.0
      %2050 = vmatprep.subr.mxu0 0.0
      %2051 = vmatpush1.xpose.msra.mxu0 0.0
      %2052 = vmatprep.mubr.f32.mxu0 0.0
      %2053 = vmatmul.mubr.f32.gmra.mrb[0].mxu0 %v1983
      %v2054 = vpop.f32.mrb[0].mxu0
      %v2055 = vadd.f32 %v1749, %v2054
      %v2056 = vpop.f32.mrb[0].mxu0
      %2057 = vdwg.mxu0
      %v2059 = vsel %vm1500, %v1734, 0
      %v2062 = vsel %vm1500, %v1742, 0
      %2064 = vmatprep.subr.mxu0 0.0
      %2065 = vmatpush1.xpose.msra.mxu0 %v2062
      %2066 = vmatprep.subr.mxu0 0.0
      %2067 = vmatpush1.xpose.msra.mxu0 0.0
      %2068 = vmatprep.subr.mxu0 0.0
      %2069 = vmatpush1.xpose.msra.mxu0 0.0
      %2070 = vmatprep.subr.mxu0 0.0
      %2071 = vmatpush1.xpose.msra.mxu0 0.0
      %2072 = vmatprep.subr.mxu0 0.0
      %2073 = vmatpush1.xpose.msra.mxu0 0.0
      %2074 = vmatprep.subr.mxu0 0.0
      %2075 = vmatpush1.xpose.msra.mxu0 0.0
      %2076 = vmatprep.subr.mxu0 0.0
      %2077 = vmatpush1.xpose.msra.mxu0 0.0
      %2078 = vmatprep.subr.mxu0 0.0
      %2079 = vmatpush1.xpose.msra.mxu0 0.0
      %2080 = vmatprep.subr.mxu0 0.0
      %2081 = vmatpush1.xpose.msra.mxu0 0.0
      %2082 = vmatprep.subr.mxu0 0.0
      %2083 = vmatpush1.xpose.msra.mxu0 0.0
      %2084 = vmatprep.subr.mxu0 0.0
      %2085 = vmatpush1.xpose.msra.mxu0 0.0
      %2086 = vmatprep.subr.mxu0 0.0
      %2087 = vmatpush1.xpose.msra.mxu0 0.0
      %2088 = vmatprep.subr.mxu0 0.0
      %2089 = vmatpush1.xpose.msra.mxu0 0.0
      %2090 = vmatprep.subr.mxu0 0.0
      %2091 = vmatpush1.xpose.msra.mxu0 0.0
      %2092 = vmatprep.subr.mxu0 0.0
      %2093 = vmatpush1.xpose.msra.mxu0 0.0
      %2094 = vmatprep.subr.mxu0 0.0
      %2095 = vmatpush1.xpose.msra.mxu0 0.0
      %2096 = vmatprep.subr.mxu0 0.0
      %2097 = vmatpush1.xpose.msra.mxu0 0.0
      %2098 = vmatprep.subr.mxu0 0.0
      %2099 = vmatpush1.xpose.msra.mxu0 0.0
      %2100 = vmatprep.subr.mxu0 0.0
      %2101 = vmatpush1.xpose.msra.mxu0 0.0
      %2102 = vmatprep.subr.mxu0 0.0
      %2103 = vmatpush1.xpose.msra.mxu0 0.0
      %2104 = vmatprep.subr.mxu0 0.0
      %2105 = vmatpush1.xpose.msra.mxu0 0.0
      %2106 = vmatprep.subr.mxu0 0.0
      %2107 = vmatpush1.xpose.msra.mxu0 0.0
      %2108 = vmatprep.subr.mxu0 0.0
      %2109 = vmatpush1.xpose.msra.mxu0 0.0
      %2110 = vmatprep.subr.mxu0 0.0
      %2111 = vmatpush1.xpose.msra.mxu0 0.0
      %2112 = vmatprep.subr.mxu0 0.0
      %2113 = vmatpush1.xpose.msra.mxu0 0.0
      %2114 = vmatprep.subr.mxu0 0.0
      %2115 = vmatpush1.xpose.msra.mxu0 0.0
      %2116 = vmatprep.subr.mxu0 0.0
      %2117 = vmatpush1.xpose.msra.mxu0 0.0
      %2118 = vmatprep.subr.mxu0 0.0
      %2119 = vmatpush1.xpose.msra.mxu0 0.0
      %2120 = vmatprep.subr.mxu0 0.0
      %2121 = vmatpush1.xpose.msra.mxu0 0.0
      %2122 = vmatprep.subr.mxu0 0.0
      %2123 = vmatpush1.xpose.msra.mxu0 0.0
      %2124 = vmatprep.subr.mxu0 0.0
      %2125 = vmatpush1.xpose.msra.mxu0 0.0
      %2126 = vmatprep.subr.mxu0 0.0
      %2127 = vmatpush1.xpose.msra.mxu0 0.0
      %2128 = vmatprep.mubr.f32.mxu0 0.0
      %2129 = vmatmul.mubr.f32.gmra.mrb[0].mxu0 %v2059
      %v2130 = vpop.f32.mrb[0].mxu0
      %v2131 = vadd.f32 %v1750, %v2130
      %v2132 = vpop.f32.mrb[0].mxu0
      %2133 = vdwg.mxu0
      %v2135 = vsel %vm1500, %v1735, 0
      %v2138 = vsel %vm1500, %v1743, 0
      %2140 = vmatprep.subr.mxu0 0.0
      %2141 = vmatpush1.xpose.msra.mxu0 %v2138
      %2142 = vmatprep.subr.mxu0 0.0
      %2143 = vmatpush1.xpose.msra.mxu0 0.0
      %2144 = vmatprep.subr.mxu0 0.0
      %2145 = vmatpush1.xpose.msra.mxu0 0.0
      %2146 = vmatprep.subr.mxu0 0.0
      %2147 = vmatpush1.xpose.msra.mxu0 0.0
      %2148 = vmatprep.subr.mxu0 0.0
      %2149 = vmatpush1.xpose.msra.mxu0 0.0
      %2150 = vmatprep.subr.mxu0 0.0
      %2151 = vmatpush1.xpose.msra.mxu0 0.0
      %2152 = vmatprep.subr.mxu0 0.0
      %2153 = vmatpush1.xpose.msra.mxu0 0.0
      %2154 = vmatprep.subr.mxu0 0.0
      %2155 = vmatpush1.xpose.msra.mxu0 0.0
      %2156 = vmatprep.subr.mxu0 0.0
      %2157 = vmatpush1.xpose.msra.mxu0 0.0
      %2158 = vmatprep.subr.mxu0 0.0
      %2159 = vmatpush1.xpose.msra.mxu0 0.0
      %2160 = vmatprep.subr.mxu0 0.0
      %2161 = vmatpush1.xpose.msra.mxu0 0.0
      %2162 = vmatprep.subr.mxu0 0.0
      %2163 = vmatpush1.xpose.msra.mxu0 0.0
      %2164 = vmatprep.subr.mxu0 0.0
      %2165 = vmatpush1.xpose.msra.mxu0 0.0
      %2166 = vmatprep.subr.mxu0 0.0
      %2167 = vmatpush1.xpose.msra.mxu0 0.0
      %2168 = vmatprep.subr.mxu0 0.0
      %2169 = vmatpush1.xpose.msra.mxu0 0.0
      %2170 = vmatprep.subr.mxu0 0.0
      %2171 = vmatpush1.xpose.msra.mxu0 0.0
      %2172 = vmatprep.subr.mxu0 0.0
      %2173 = vmatpush1.xpose.msra.mxu0 0.0
      %2174 = vmatprep.subr.mxu0 0.0
      %2175 = vmatpush1.xpose.msra.mxu0 0.0
      %2176 = vmatprep.subr.mxu0 0.0
      %2177 = vmatpush1.xpose.msra.mxu0 0.0
      %2178 = vmatprep.subr.mxu0 0.0
      %2179 = vmatpush1.xpose.msra.mxu0 0.0
      %2180 = vmatprep.subr.mxu0 0.0
      %2181 = vmatpush1.xpose.msra.mxu0 0.0
      %2182 = vmatprep.subr.mxu0 0.0
      %2183 = vmatpush1.xpose.msra.mxu0 0.0
      %2184 = vmatprep.subr.mxu0 0.0
      %2185 = vmatpush1.xpose.msra.mxu0 0.0
      %2186 = vmatprep.subr.mxu0 0.0
      %2187 = vmatpush1.xpose.msra.mxu0 0.0
      %2188 = vmatprep.subr.mxu0 0.0
      %2189 = vmatpush1.xpose.msra.mxu0 0.0
      %2190 = vmatprep.subr.mxu0 0.0
      %2191 = vmatpush1.xpose.msra.mxu0 0.0
      %2192 = vmatprep.subr.mxu0 0.0
      %2193 = vmatpush1.xpose.msra.mxu0 0.0
      %2194 = vmatprep.subr.mxu0 0.0
      %2195 = vmatpush1.xpose.msra.mxu0 0.0
      %2196 = vmatprep.subr.mxu0 0.0
      %2197 = vmatpush1.xpose.msra.mxu0 0.0
      %2198 = vmatprep.subr.mxu0 0.0
      %2199 = vmatpush1.xpose.msra.mxu0 0.0
      %2200 = vmatprep.subr.mxu0 0.0
      %2201 = vmatpush1.xpose.msra.mxu0 0.0
      %2202 = vmatprep.subr.mxu0 0.0
      %2203 = vmatpush1.xpose.msra.mxu0 0.0
      %2204 = vmatprep.mubr.f32.mxu0 0.0
      %2205 = vmatmul.mubr.f32.gmra.mrb[0].mxu0 %v2135
      %v2206 = vpop.f32.mrb[0].mxu0
      %v2207 = vadd.f32 %v1751, %v2206
      %v2208 = vpop.f32.mrb[0].mxu0
      %2209 = vdwg.mxu0
      %v2211 = vsel %vm1500, %v1736, 0
      %v2214 = vsel %vm1500, %v1744, 0
      %2216 = vmatprep.subr.mxu0 0.0
      %2217 = vmatpush1.xpose.msra.mxu0 %v2214
      %2218 = vmatprep.subr.mxu0 0.0
      %2219 = vmatpush1.xpose.msra.mxu0 0.0
      %2220 = vmatprep.subr.mxu0 0.0
      %2221 = vmatpush1.xpose.msra.mxu0 0.0
      %2222 = vmatprep.subr.mxu0 0.0
      %2223 = vmatpush1.xpose.msra.mxu0 0.0
      %2224 = vmatprep.subr.mxu0 0.0
      %2225 = vmatpush1.xpose.msra.mxu0 0.0
      %2226 = vmatprep.subr.mxu0 0.0
      %2227 = vmatpush1.xpose.msra.mxu0 0.0
      %2228 = vmatprep.subr.mxu0 0.0
      %2229 = vmatpush1.xpose.msra.mxu0 0.0
      %2230 = vmatprep.subr.mxu0 0.0
      %2231 = vmatpush1.xpose.msra.mxu0 0.0
      %2232 = vmatprep.subr.mxu0 0.0
      %2233 = vmatpush1.xpose.msra.mxu0 0.0
      %2234 = vmatprep.subr.mxu0 0.0
      %2235 = vmatpush1.xpose.msra.mxu0 0.0
      %2236 = vmatprep.subr.mxu0 0.0
      %2237 = vmatpush1.xpose.msra.mxu0 0.0
      %2238 = vmatprep.subr.mxu0 0.0
      %2239 = vmatpush1.xpose.msra.mxu0 0.0
      %2240 = vmatprep.subr.mxu0 0.0
      %2241 = vmatpush1.xpose.msra.mxu0 0.0
      %2242 = vmatprep.subr.mxu0 0.0
      %2243 = vmatpush1.xpose.msra.mxu0 0.0
      %2244 = vmatprep.subr.mxu0 0.0
      %2245 = vmatpush1.xpose.msra.mxu0 0.0
      %2246 = vmatprep.subr.mxu0 0.0
      %2247 = vmatpush1.xpose.msra.mxu0 0.0
      %2248 = vmatprep.subr.mxu0 0.0
      %2249 = vmatpush1.xpose.msra.mxu0 0.0
      %2250 = vmatprep.subr.mxu0 0.0
      %2251 = vmatpush1.xpose.msra.mxu0 0.0
      %2252 = vmatprep.subr.mxu0 0.0
      %2253 = vmatpush1.xpose.msra.mxu0 0.0
      %2254 = vmatprep.subr.mxu0 0.0
      %2255 = vmatpush1.xpose.msra.mxu0 0.0
      %2256 = vmatprep.subr.mxu0 0.0
      %2257 = vmatpush1.xpose.msra.mxu0 0.0
      %2258 = vmatprep.subr.mxu0 0.0
      %2259 = vmatpush1.xpose.msra.mxu0 0.0
      %2260 = vmatprep.subr.mxu0 0.0
      %2261 = vmatpush1.xpose.msra.mxu0 0.0
      %2262 = vmatprep.subr.mxu0 0.0
      %2263 = vmatpush1.xpose.msra.mxu0 0.0
      %2264 = vmatprep.subr.mxu0 0.0
      %2265 = vmatpush1.xpose.msra.mxu0 0.0
      %2266 = vmatprep.subr.mxu0 0.0
      %2267 = vmatpush1.xpose.msra.mxu0 0.0
      %2268 = vmatprep.subr.mxu0 0.0
      %2269 = vmatpush1.xpose.msra.mxu0 0.0
      %2270 = vmatprep.subr.mxu0 0.0
      %2271 = vmatpush1.xpose.msra.mxu0 0.0
      %2272 = vmatprep.subr.mxu0 0.0
      %2273 = vmatpush1.xpose.msra.mxu0 0.0
      %2274 = vmatprep.subr.mxu0 0.0
      %2275 = vmatpush1.xpose.msra.mxu0 0.0
      %2276 = vmatprep.subr.mxu0 0.0
      %2277 = vmatpush1.xpose.msra.mxu0 0.0
      %2278 = vmatprep.subr.mxu0 0.0
      %2279 = vmatpush1.xpose.msra.mxu0 0.0
      %2280 = vmatprep.mubr.f32.mxu0 0.0
      %2281 = vmatmul.mubr.f32.gmra.mrb[0].mxu0 %v2211
      %v2282 = vpop.f32.mrb[0].mxu0
      %v2283 = vadd.f32 %v1752, %v2282
      %v2284 = vpop.f32.mrb[0].mxu0
      %2285 = vdwg.mxu0
      %v2287 = vsel %vm1500, %v1737, 0
      %v2290 = vsel %vm1500, %v1745, 0
      %2292 = vmatprep.subr.mxu0 0.0
      %2293 = vmatpush1.xpose.msra.mxu0 %v2290
      %2294 = vmatprep.subr.mxu0 0.0
      %2295 = vmatpush1.xpose.msra.mxu0 0.0
      %2296 = vmatprep.subr.mxu0 0.0
      %2297 = vmatpush1.xpose.msra.mxu0 0.0
      %2298 = vmatprep.subr.mxu0 0.0
      %2299 = vmatpush1.xpose.msra.mxu0 0.0
      %2300 = vmatprep.subr.mxu0 0.0
      %2301 = vmatpush1.xpose.msra.mxu0 0.0
      %2302 = vmatprep.subr.mxu0 0.0
      %2303 = vmatpush1.xpose.msra.mxu0 0.0
      %2304 = vmatprep.subr.mxu0 0.0
      %2305 = vmatpush1.xpose.msra.mxu0 0.0
      %2306 = vmatprep.subr.mxu0 0.0
      %2307 = vmatpush1.xpose.msra.mxu0 0.0
      %2308 = vmatprep.subr.mxu0 0.0
      %2309 = vmatpush1.xpose.msra.mxu0 0.0
      %2310 = vmatprep.subr.mxu0 0.0
      %2311 = vmatpush1.xpose.msra.mxu0 0.0
      %2312 = vmatprep.subr.mxu0 0.0
      %2313 = vmatpush1.xpose.msra.mxu0 0.0
      %2314 = vmatprep.subr.mxu0 0.0
      %2315 = vmatpush1.xpose.msra.mxu0 0.0
      %2316 = vmatprep.subr.mxu0 0.0
      %2317 = vmatpush1.xpose.msra.mxu0 0.0
      %2318 = vmatprep.subr.mxu0 0.0
      %2319 = vmatpush1.xpose.msra.mxu0 0.0
      %2320 = vmatprep.subr.mxu0 0.0
      %2321 = vmatpush1.xpose.msra.mxu0 0.0
      %2322 = vmatprep.subr.mxu0 0.0
      %2323 = vmatpush1.xpose.msra.mxu0 0.0
      %2324 = vmatprep.subr.mxu0 0.0
      %2325 = vmatpush1.xpose.msra.mxu0 0.0
      %2326 = vmatprep.subr.mxu0 0.0
      %2327 = vmatpush1.xpose.msra.mxu0 0.0
      %2328 = vmatprep.subr.mxu0 0.0
      %2329 = vmatpush1.xpose.msra.mxu0 0.0
      %2330 = vmatprep.subr.mxu0 0.0
      %2331 = vmatpush1.xpose.msra.mxu0 0.0
      %2332 = vmatprep.subr.mxu0 0.0
      %2333 = vmatpush1.xpose.msra.mxu0 0.0
      %2334 = vmatprep.subr.mxu0 0.0
      %2335 = vmatpush1.xpose.msra.mxu0 0.0
      %2336 = vmatprep.subr.mxu0 0.0
      %2337 = vmatpush1.xpose.msra.mxu0 0.0
      %2338 = vmatprep.subr.mxu0 0.0
      %2339 = vmatpush1.xpose.msra.mxu0 0.0
      %2340 = vmatprep.subr.mxu0 0.0
      %2341 = vmatpush1.xpose.msra.mxu0 0.0
      %2342 = vmatprep.subr.mxu0 0.0
      %2343 = vmatpush1.xpose.msra.mxu0 0.0
      %2344 = vmatprep.subr.mxu0 0.0
      %2345 = vmatpush1.xpose.msra.mxu0 0.0
      %2346 = vmatprep.subr.mxu0 0.0
      %2347 = vmatpush1.xpose.msra.mxu0 0.0
      %2348 = vmatprep.subr.mxu0 0.0
      %2349 = vmatpush1.xpose.msra.mxu0 0.0
      %2350 = vmatprep.subr.mxu0 0.0
      %2351 = vmatpush1.xpose.msra.mxu0 0.0
      %2352 = vmatprep.subr.mxu0 0.0
      %2353 = vmatpush1.xpose.msra.mxu0 0.0
      %2354 = vmatprep.subr.mxu0 0.0
      %2355 = vmatpush1.xpose.msra.mxu0 0.0
      %2356 = vmatprep.mubr.f32.mxu0 0.0
      %2357 = vmatmul.mubr.f32.gmra.mrb[0].mxu0 %v2287
      %v2358 = vpop.f32.mrb[0].mxu0
      %v2359 = vadd.f32 %v1753, %v2358
      %v2360 = vpop.f32.mrb[0].mxu0
      %2361 = vdwg.mxu0
      %v2362 = vsel %vm1500, %v1827, -inf
      %2363 = vmax.xlane.f32.xlu0 %v2362
      %v2364 = vpop.xlane.xlu0 %2363
      %v2365 = vsel %vm1500, %v1903, -inf
      %2366 = vmax.xlane.f32.xlu0 %v2365
      %v2367 = vpop.xlane.xlu0 %2366
      %v2368 = vsel %vm1500, %v1979, -inf
      %2369 = vmax.xlane.f32.xlu0 %v2368
      %v2370 = vpop.xlane.xlu0 %2369
      %v2371 = vsel %vm1500, %v2055, -inf
      %2372 = vmax.xlane.f32.xlu0 %v2371
      %v2373 = vpop.xlane.xlu0 %2372
      %v2374 = vsel %vm1500, %v2131, -inf
      %2375 = vmax.xlane.f32.xlu0 %v2374
      %v2376 = vpop.xlane.xlu0 %2375
      %v2377 = vsel %vm1500, %v2207, -inf
      %2378 = vmax.xlane.f32.xlu0 %v2377
      %v2379 = vpop.xlane.xlu0 %2378
      %v2380 = vsel %vm1500, %v2283, -inf
      %2381 = vmax.xlane.f32.xlu0 %v2380
      %v2382 = vpop.xlane.xlu0 %2381
      %v2383 = vsel %vm1500, %v2359, -inf
      %2384 = vmax.xlane.f32.xlu0 %v2383
      %v2385 = vpop.xlane.xlu0 %2384
      %v2386 = vsub.f32 %v1827, %v2364
      %v2387 = vsub.f32 %v1903, %v2367
      %v2388 = vsub.f32 %v1979, %v2370
      %v2389 = vsub.f32 %v2055, %v2373
      %v2390 = vsub.f32 %v2131, %v2376
      %v2391 = vsub.f32 %v2207, %v2379
      %v2392 = vsub.f32 %v2283, %v2382
      %v2393 = vsub.f32 %v2359, %v2385
      %v2394 = vmul.f32 %v2386, 1.442695
      %v2395 = vpow.pop %v2394
      %v2396 = vmul.f32 %v2387, 1.442695
      %v2397 = vpow.pop %v2396
      %v2398 = vmul.f32 %v2388, 1.442695
      %v2399 = vpow.pop %v2398
      %v2400 = vmul.f32 %v2389, 1.442695
      %v2401 = vpow.pop %v2400
      %v2402 = vmul.f32 %v2390, 1.442695
      %v2403 = vpow.pop %v2402
      %v2404 = vmul.f32 %v2391, 1.442695
      %v2405 = vpow.pop %v2404
      %v2406 = vmul.f32 %v2392, 1.442695
      %v2407 = vpow.pop %v2406
      %v2408 = vmul.f32 %v2393, 1.442695
      %v2409 = vpow.pop %v2408
      %v2410 = vsel %vm1500, %v2395, 0.0
      %2411 = vadd.xlane.f32.xlu0 %v2410
      %v2412 = vpop.xlane.xlu0 %2411
      %v2413 = vsel %vm1500, %v2397, 0.0
      %2414 = vadd.xlane.f32.xlu0 %v2413
      %v2415 = vpop.xlane.xlu0 %2414
      %v2416 = vsel %vm1500, %v2399, 0.0
      %2417 = vadd.xlane.f32.xlu0 %v2416
      %v2418 = vpop.xlane.xlu0 %2417
      %v2419 = vsel %vm1500, %v2401, 0.0
      %2420 = vadd.xlane.f32.xlu0 %v2419
      %v2421 = vpop.xlane.xlu0 %2420
      %v2422 = vsel %vm1500, %v2403, 0.0
      %2423 = vadd.xlane.f32.xlu0 %v2422
      %v2424 = vpop.xlane.xlu0 %2423
      %v2425 = vsel %vm1500, %v2405, 0.0
      %2426 = vadd.xlane.f32.xlu0 %v2425
      %v2427 = vpop.xlane.xlu0 %2426
      %v2428 = vsel %vm1500, %v2407, 0.0
      %2429 = vadd.xlane.f32.xlu0 %v2428
      %v2430 = vpop.xlane.xlu0 %2429
      %v2431 = vsel %vm1500, %v2409, 0.0
      %2432 = vadd.xlane.f32.xlu0 %v2431
      %v2433 = vpop.xlane.xlu0 %2432
      %v2434 = vrcp.pop %v2412
      %v2435 = vrcp.pop %v2415
      %v2436 = vrcp.pop %v2418
      %v2437 = vrcp.pop %v2421
      %v2438 = vrcp.pop %v2424
      %v2439 = vrcp.pop %v2427
      %v2440 = vrcp.pop %v2430
      %v2441 = vrcp.pop %v2433
      %v2442 = vmul.f32 %v2395, %v2434
      %v2443 = vmul.f32 %v2397, %v2435
      %v2444 = vmul.f32 %v2399, %v2436
      %v2445 = vmul.f32 %v2401, %v2437
      %v2446 = vmul.f32 %v2403, %v2438
      %v2447 = vmul.f32 %v2405, %v2439
      %v2448 = vmul.f32 %v2407, %v2440
      %v2449 = vmul.f32 %v2409, %v2441
      %v2451 = vsel %vm1500, %v2442, 0
      %2453 = vmatprep.subr.mxu0 0.0
      %2454 = vmatpush1.msra.mxu0 %v1266
      %2455 = vmatprep.subr.mxu0 0.0
      %2456 = vmatpush1.msra.mxu0 0.0
      %2457 = vmatprep.subr.mxu0 0.0
      %2458 = vmatpush1.msra.mxu0 0.0
      %2459 = vmatprep.subr.mxu0 0.0
      %2460 = vmatpush1.msra.mxu0 0.0
      %2461 = vmatprep.subr.mxu0 0.0
      %2462 = vmatpush1.msra.mxu0 0.0
      %2463 = vmatprep.subr.mxu0 0.0
      %2464 = vmatpush1.msra.mxu0 0.0
      %2465 = vmatprep.subr.mxu0 0.0
      %2466 = vmatpush1.msra.mxu0 0.0
      %2467 = vmatprep.subr.mxu0 0.0
      %2468 = vmatpush1.msra.mxu0 0.0
      %2469 = vmatprep.subr.mxu0 0.0
      %2470 = vmatpush1.msra.mxu0 0.0
      %2471 = vmatprep.subr.mxu0 0.0
      %2472 = vmatpush1.msra.mxu0 0.0
      %2473 = vmatprep.subr.mxu0 0.0
      %2474 = vmatpush1.msra.mxu0 0.0
      %2475 = vmatprep.subr.mxu0 0.0
      %2476 = vmatpush1.msra.mxu0 0.0
      %2477 = vmatprep.subr.mxu0 0.0
      %2478 = vmatpush1.msra.mxu0 0.0
      %2479 = vmatprep.subr.mxu0 0.0
      %2480 = vmatpush1.msra.mxu0 0.0
      %2481 = vmatprep.subr.mxu0 0.0
      %2482 = vmatpush1.msra.mxu0 0.0
      %2483 = vmatprep.subr.mxu0 0.0
      %2484 = vmatpush1.msra.mxu0 0.0
      %2485 = vmatprep.subr.mxu0 0.0
      %2486 = vmatpush1.msra.mxu0 0.0
      %2487 = vmatprep.subr.mxu0 0.0
      %2488 = vmatpush1.msra.mxu0 0.0
      %2489 = vmatprep.subr.mxu0 0.0
      %2490 = vmatpush1.msra.mxu0 0.0
      %2491 = vmatprep.subr.mxu0 0.0
      %2492 = vmatpush1.msra.mxu0 0.0
      %2493 = vmatprep.subr.mxu0 0.0
      %2494 = vmatpush1.msra.mxu0 0.0
      %2495 = vmatprep.subr.mxu0 0.0
      %2496 = vmatpush1.msra.mxu0 0.0
      %2497 = vmatprep.subr.mxu0 0.0
      %2498 = vmatpush1.msra.mxu0 0.0
      %2499 = vmatprep.subr.mxu0 0.0
      %2500 = vmatpush1.msra.mxu0 0.0
      %2501 = vmatprep.subr.mxu0 0.0
      %2502 = vmatpush1.msra.mxu0 0.0
      %2503 = vmatprep.subr.mxu0 0.0
      %2504 = vmatpush1.msra.mxu0 0.0
      %2505 = vmatprep.subr.mxu0 0.0
      %2506 = vmatpush1.msra.mxu0 0.0
      %2507 = vmatprep.subr.mxu0 0.0
      %2508 = vmatpush1.msra.mxu0 0.0
      %2509 = vmatprep.subr.mxu0 0.0
      %2510 = vmatpush1.msra.mxu0 0.0
      %2511 = vmatprep.subr.mxu0 0.0
      %2512 = vmatpush1.msra.mxu0 0.0
      %2513 = vmatprep.subr.mxu0 0.0
      %2514 = vmatpush1.msra.mxu0 0.0
      %2515 = vmatprep.subr.mxu0 0.0
      %2516 = vmatpush1.msra.mxu0 0.0
      %2517 = vmatprep.mubr.f32.mxu0 0.0
      %2518 = vmatmul.mubr.f32.gmra.mrb[0].mxu0 %v2451
      %v2519 = vpop.f32.mrb[0].mxu0
      %v2520 = vadd.f32 0.0, %v2519
      %v2521 = vpop.f32.mrb[0].mxu0
      %2522 = vdwg.mxu0
      %v2524 = vsel %vm1500, %v2443, 0
      %2526 = vmatprep.subr.mxu0 0.0
      %2527 = vmatpush1.msra.mxu0 %v1271
      %2528 = vmatprep.subr.mxu0 0.0
      %2529 = vmatpush1.msra.mxu0 0.0
      %2530 = vmatprep.subr.mxu0 0.0
      %2531 = vmatpush1.msra.mxu0 0.0
      %2532 = vmatprep.subr.mxu0 0.0
      %2533 = vmatpush1.msra.mxu0 0.0
      %2534 = vmatprep.subr.mxu0 0.0
      %2535 = vmatpush1.msra.mxu0 0.0
      %2536 = vmatprep.subr.mxu0 0.0
      %2537 = vmatpush1.msra.mxu0 0.0
      %2538 = vmatprep.subr.mxu0 0.0
      %2539 = vmatpush1.msra.mxu0 0.0
      %2540 = vmatprep.subr.mxu0 0.0
      %2541 = vmatpush1.msra.mxu0 0.0
      %2542 = vmatprep.subr.mxu0 0.0
      %2543 = vmatpush1.msra.mxu0 0.0
      %2544 = vmatprep.subr.mxu0 0.0
      %2545 = vmatpush1.msra.mxu0 0.0
      %2546 = vmatprep.subr.mxu0 0.0
      %2547 = vmatpush1.msra.mxu0 0.0
      %2548 = vmatprep.subr.mxu0 0.0
      %2549 = vmatpush1.msra.mxu0 0.0
      %2550 = vmatprep.subr.mxu0 0.0
      %2551 = vmatpush1.msra.mxu0 0.0
      %2552 = vmatprep.subr.mxu0 0.0
      %2553 = vmatpush1.msra.mxu0 0.0
      %2554 = vmatprep.subr.mxu0 0.0
      %2555 = vmatpush1.msra.mxu0 0.0
      %2556 = vmatprep.subr.mxu0 0.0
      %2557 = vmatpush1.msra.mxu0 0.0
      %2558 = vmatprep.subr.mxu0 0.0
      %2559 = vmatpush1.msra.mxu0 0.0
      %2560 = vmatprep.subr.mxu0 0.0
      %2561 = vmatpush1.msra.mxu0 0.0
      %2562 = vmatprep.subr.mxu0 0.0
      %2563 = vmatpush1.msra.mxu0 0.0
      %2564 = vmatprep.subr.mxu0 0.0
      %2565 = vmatpush1.msra.mxu0 0.0
      %2566 = vmatprep.subr.mxu0 0.0
      %2567 = vmatpush1.msra.mxu0 0.0
      %2568 = vmatprep.subr.mxu0 0.0
      %2569 = vmatpush1.msra.mxu0 0.0
      %2570 = vmatprep.subr.mxu0 0.0
      %2571 = vmatpush1.msra.mxu0 0.0
      %2572 = vmatprep.subr.mxu0 0.0
      %2573 = vmatpush1.msra.mxu0 0.0
      %2574 = vmatprep.subr.mxu0 0.0
      %2575 = vmatpush1.msra.mxu0 0.0
      %2576 = vmatprep.subr.mxu0 0.0
      %2577 = vmatpush1.msra.mxu0 0.0
      %2578 = vmatprep.subr.mxu0 0.0
      %2579 = vmatpush1.msra.mxu0 0.0
      %2580 = vmatprep.subr.mxu0 0.0
      %2581 = vmatpush1.msra.mxu0 0.0
      %2582 = vmatprep.subr.mxu0 0.0
      %2583 = vmatpush1.msra.mxu0 0.0
      %2584 = vmatprep.subr.mxu0 0.0
      %2585 = vmatpush1.msra.mxu0 0.0
      %2586 = vmatprep.subr.mxu0 0.0
      %2587 = vmatpush1.msra.mxu0 0.0
      %2588 = vmatprep.subr.mxu0 0.0
      %2589 = vmatpush1.msra.mxu0 0.0
      %2590 = vmatprep.mubr.f32.mxu0 0.0
      %2591 = vmatmul.mubr.f32.gmra.mrb[0].mxu0 %v2524
      %v2592 = vpop.f32.mrb[0].mxu0
      %v2593 = vadd.f32 0.0, %v2592
      %v2594 = vpop.f32.mrb[0].mxu0
      %2595 = vdwg.mxu0
      %v2597 = vsel %vm1500, %v2444, 0
      %2599 = vmatprep.subr.mxu0 0.0
      %2600 = vmatpush1.msra.mxu0 %v1341
      %2601 = vmatprep.subr.mxu0 0.0
      %2602 = vmatpush1.msra.mxu0 0.0
      %2603 = vmatprep.subr.mxu0 0.0
      %2604 = vmatpush1.msra.mxu0 0.0
      %2605 = vmatprep.subr.mxu0 0.0
      %2606 = vmatpush1.msra.mxu0 0.0
      %2607 = vmatprep.subr.mxu0 0.0
      %2608 = vmatpush1.msra.mxu0 0.0
      %2609 = vmatprep.subr.mxu0 0.0
      %2610 = vmatpush1.msra.mxu0 0.0
      %2611 = vmatprep.subr.mxu0 0.0
      %2612 = vmatpush1.msra.mxu0 0.0
      %2613 = vmatprep.subr.mxu0 0.0
      %2614 = vmatpush1.msra.mxu0 0.0
      %2615 = vmatprep.subr.mxu0 0.0
      %2616 = vmatpush1.msra.mxu0 0.0
      %2617 = vmatprep.subr.mxu0 0.0
      %2618 = vmatpush1.msra.mxu0 0.0
      %2619 = vmatprep.subr.mxu0 0.0
      %2620 = vmatpush1.msra.mxu0 0.0
      %2621 = vmatprep.subr.mxu0 0.0
      %2622 = vmatpush1.msra.mxu0 0.0
      %2623 = vmatprep.subr.mxu0 0.0
      %2624 = vmatpush1.msra.mxu0 0.0
      %2625 = vmatprep.subr.mxu0 0.0
      %2626 = vmatpush1.msra.mxu0 0.0
      %2627 = vmatprep.subr.mxu0 0.0
      %2628 = vmatpush1.msra.mxu0 0.0
      %2629 = vmatprep.subr.mxu0 0.0
      %2630 = vmatpush1.msra.mxu0 0.0
      %2631 = vmatprep.subr.mxu0 0.0
      %2632 = vmatpush1.msra.mxu0 0.0
      %2633 = vmatprep.subr.mxu0 0.0
      %2634 = vmatpush1.msra.mxu0 0.0
      %2635 = vmatprep.subr.mxu0 0.0
      %2636 = vmatpush1.msra.mxu0 0.0
      %2637 = vmatprep.subr.mxu0 0.0
      %2638 = vmatpush1.msra.mxu0 0.0
      %2639 = vmatprep.subr.mxu0 0.0
      %2640 = vmatpush1.msra.mxu0 0.0
      %2641 = vmatprep.subr.mxu0 0.0
      %2642 = vmatpush1.msra.mxu0 0.0
      %2643 = vmatprep.subr.mxu0 0.0
      %2644 = vmatpush1.msra.mxu0 0.0
      %2645 = vmatprep.subr.mxu0 0.0
      %2646 = vmatpush1.msra.mxu0 0.0
      %2647 = vmatprep.subr.mxu0 0.0
      %2648 = vmatpush1.msra.mxu0 0.0
      %2649 = vmatprep.subr.mxu0 0.0
      %2650 = vmatpush1.msra.mxu0 0.0
      %2651 = vmatprep.subr.mxu0 0.0
      %2652 = vmatpush1.msra.mxu0 0.0
      %2653 = vmatprep.subr.mxu0 0.0
      %2654 = vmatpush1.msra.mxu0 0.0
      %2655 = vmatprep.subr.mxu0 0.0
      %2656 = vmatpush1.msra.mxu0 0.0
      %2657 = vmatprep.subr.mxu0 0.0
      %2658 = vmatpush1.msra.mxu0 0.0
      %2659 = vmatprep.subr.mxu0 0.0
      %2660 = vmatpush1.msra.mxu0 0.0
      %2661 = vmatprep.subr.mxu0 0.0
      %2662 = vmatpush1.msra.mxu0 0.0
      %2663 = vmatprep.mubr.f32.mxu0 0.0
      %2664 = vmatmul.mubr.f32.gmra.mrb[0].mxu0 %v2597
      %v2665 = vpop.f32.mrb[0].mxu0
      %v2666 = vadd.f32 0.0, %v2665
      %v2667 = vpop.f32.mrb[0].mxu0
      %2668 = vdwg.mxu0
      %v2670 = vsel %vm1500, %v2445, 0
      %2672 = vmatprep.subr.mxu0 0.0
      %2673 = vmatpush1.msra.mxu0 %v1346
      %2674 = vmatprep.subr.mxu0 0.0
      %2675 = vmatpush1.msra.mxu0 0.0
      %2676 = vmatprep.subr.mxu0 0.0
      %2677 = vmatpush1.msra.mxu0 0.0
      %2678 = vmatprep.subr.mxu0 0.0
      %2679 = vmatpush1.msra.mxu0 0.0
      %2680 = vmatprep.subr.mxu0 0.0
      %2681 = vmatpush1.msra.mxu0 0.0
      %2682 = vmatprep.subr.mxu0 0.0
      %2683 = vmatpush1.msra.mxu0 0.0
      %2684 = vmatprep.subr.mxu0 0.0
      %2685 = vmatpush1.msra.mxu0 0.0
      %2686 = vmatprep.subr.mxu0 0.0
      %2687 = vmatpush1.msra.mxu0 0.0
      %2688 = vmatprep.subr.mxu0 0.0
      %2689 = vmatpush1.msra.mxu0 0.0
      %2690 = vmatprep.subr.mxu0 0.0
      %2691 = vmatpush1.msra.mxu0 0.0
      %2692 = vmatprep.subr.mxu0 0.0
      %2693 = vmatpush1.msra.mxu0 0.0
      %2694 = vmatprep.subr.mxu0 0.0
      %2695 = vmatpush1.msra.mxu0 0.0
      %2696 = vmatprep.subr.mxu0 0.0
      %2697 = vmatpush1.msra.mxu0 0.0
      %2698 = vmatprep.subr.mxu0 0.0
      %2699 = vmatpush1.msra.mxu0 0.0
      %2700 = vmatprep.subr.mxu0 0.0
      %2701 = vmatpush1.msra.mxu0 0.0
      %2702 = vmatprep.subr.mxu0 0.0
      %2703 = vmatpush1.msra.mxu0 0.0
      %2704 = vmatprep.subr.mxu0 0.0
      %2705 = vmatpush1.msra.mxu0 0.0
      %2706 = vmatprep.subr.mxu0 0.0
      %2707 = vmatpush1.msra.mxu0 0.0
      %2708 = vmatprep.subr.mxu0 0.0
      %2709 = vmatpush1.msra.mxu0 0.0
      %2710 = vmatprep.subr.mxu0 0.0
      %2711 = vmatpush1.msra.mxu0 0.0
      %2712 = vmatprep.subr.mxu0 0.0
      %2713 = vmatpush1.msra.mxu0 0.0
      %2714 = vmatprep.subr.mxu0 0.0
      %2715 = vmatpush1.msra.mxu0 0.0
      %2716 = vmatprep.subr.mxu0 0.0
      %2717 = vmatpush1.msra.mxu0 0.0
      %2718 = vmatprep.subr.mxu0 0.0
      %2719 = vmatpush1.msra.mxu0 0.0
      %2720 = vmatprep.subr.mxu0 0.0
      %2721 = vmatpush1.msra.mxu0 0.0
      %2722 = vmatprep.subr.mxu0 0.0
      %2723 = vmatpush1.msra.mxu0 0.0
      %2724 = vmatprep.subr.mxu0 0.0
      %2725 = vmatpush1.msra.mxu0 0.0
      %2726 = vmatprep.subr.mxu0 0.0
      %2727 = vmatpush1.msra.mxu0 0.0
      %2728 = vmatprep.subr.mxu0 0.0
      %2729 = vmatpush1.msra.mxu0 0.0
      %2730 = vmatprep.subr.mxu0 0.0
      %2731 = vmatpush1.msra.mxu0 0.0
      %2732 = vmatprep.subr.mxu0 0.0
      %2733 = vmatpush1.msra.mxu0 0.0
      %2734 = vmatprep.subr.mxu0 0.0
      %2735 = vmatpush1.msra.mxu0 0.0
      %2736 = vmatprep.mubr.f32.mxu0 0.0
      %2737 = vmatmul.mubr.f32.gmra.mrb[0].mxu0 %v2670
      %v2738 = vpop.f32.mrb[0].mxu0
      %v2739 = vadd.f32 0.0, %v2738
      %v2740 = vpop.f32.mrb[0].mxu0
      %2741 = vdwg.mxu0
      %v2743 = vsel %vm1500, %v2446, 0
      %2745 = vmatprep.subr.mxu0 0.0
      %2746 = vmatpush1.msra.mxu0 %v1416
      %2747 = vmatprep.subr.mxu0 0.0
      %2748 = vmatpush1.msra.mxu0 0.0
      %2749 = vmatprep.subr.mxu0 0.0
      %2750 = vmatpush1.msra.mxu0 0.0
      %2751 = vmatprep.subr.mxu0 0.0
      %2752 = vmatpush1.msra.mxu0 0.0
      %2753 = vmatprep.subr.mxu0 0.0
      %2754 = vmatpush1.msra.mxu0 0.0
      %2755 = vmatprep.subr.mxu0 0.0
      %2756 = vmatpush1.msra.mxu0 0.0
      %2757 = vmatprep.subr.mxu0 0.0
      %2758 = vmatpush1.msra.mxu0 0.0
      %2759 = vmatprep.subr.mxu0 0.0
      %2760 = vmatpush1.msra.mxu0 0.0
      %2761 = vmatprep.subr.mxu0 0.0
      %2762 = vmatpush1.msra.mxu0 0.0
      %2763 = vmatprep.subr.mxu0 0.0
      %2764 = vmatpush1.msra.mxu0 0.0
      %2765 = vmatprep.subr.mxu0 0.0
      %2766 = vmatpush1.msra.mxu0 0.0
      %2767 = vmatprep.subr.mxu0 0.0
      %2768 = vmatpush1.msra.mxu0 0.0
      %2769 = vmatprep.subr.mxu0 0.0
      %2770 = vmatpush1.msra.mxu0 0.0
      %2771 = vmatprep.subr.mxu0 0.0
      %2772 = vmatpush1.msra.mxu0 0.0
      %2773 = vmatprep.subr.mxu0 0.0
      %2774 = vmatpush1.msra.mxu0 0.0
      %2775 = vmatprep.subr.mxu0 0.0
      %2776 = vmatpush1.msra.mxu0 0.0
      %2777 = vmatprep.subr.mxu0 0.0
      %2778 = vmatpush1.msra.mxu0 0.0
      %2779 = vmatprep.subr.mxu0 0.0
      %2780 = vmatpush1.msra.mxu0 0.0
      %2781 = vmatprep.subr.mxu0 0.0
      %2782 = vmatpush1.msra.mxu0 0.0
      %2783 = vmatprep.subr.mxu0 0.0
      %2784 = vmatpush1.msra.mxu0 0.0
      %2785 = vmatprep.subr.mxu0 0.0
      %2786 = vmatpush1.msra.mxu0 0.0
      %2787 = vmatprep.subr.mxu0 0.0
      %2788 = vmatpush1.msra.mxu0 0.0
      %2789 = vmatprep.subr.mxu0 0.0
      %2790 = vmatpush1.msra.mxu0 0.0
      %2791 = vmatprep.subr.mxu0 0.0
      %2792 = vmatpush1.msra.mxu0 0.0
      %2793 = vmatprep.subr.mxu0 0.0
      %2794 = vmatpush1.msra.mxu0 0.0
      %2795 = vmatprep.subr.mxu0 0.0
      %2796 = vmatpush1.msra.mxu0 0.0
      %2797 = vmatprep.subr.mxu0 0.0
      %2798 = vmatpush1.msra.mxu0 0.0
      %2799 = vmatprep.subr.mxu0 0.0
      %2800 = vmatpush1.msra.mxu0 0.0
      %2801 = vmatprep.subr.mxu0 0.0
      %2802 = vmatpush1.msra.mxu0 0.0
      %2803 = vmatprep.subr.mxu0 0.0
      %2804 = vmatpush1.msra.mxu0 0.0
      %2805 = vmatprep.subr.mxu0 0.0
      %2806 = vmatpush1.msra.mxu0 0.0
      %2807 = vmatprep.subr.mxu0 0.0
      %2808 = vmatpush1.msra.mxu0 0.0
      %2809 = vmatprep.mubr.f32.mxu0 0.0
      %2810 = vmatmul.mubr.f32.gmra.mrb[0].mxu0 %v2743
      %v2811 = vpop.f32.mrb[0].mxu0
      %v2812 = vadd.f32 0.0, %v2811
      %v2813 = vpop.f32.mrb[0].mxu0
      %2814 = vdwg.mxu0
      %v2816 = vsel %vm1500, %v2447, 0
      %2818 = vmatprep.subr.mxu0 0.0
      %2819 = vmatpush1.msra.mxu0 %v1421
      %2820 = vmatprep.subr.mxu0 0.0
      %2821 = vmatpush1.msra.mxu0 0.0
      %2822 = vmatprep.subr.mxu0 0.0
      %2823 = vmatpush1.msra.mxu0 0.0
      %2824 = vmatprep.subr.mxu0 0.0
      %2825 = vmatpush1.msra.mxu0 0.0
      %2826 = vmatprep.subr.mxu0 0.0
      %2827 = vmatpush1.msra.mxu0 0.0
      %2828 = vmatprep.subr.mxu0 0.0
      %2829 = vmatpush1.msra.mxu0 0.0
      %2830 = vmatprep.subr.mxu0 0.0
      %2831 = vmatpush1.msra.mxu0 0.0
      %2832 = vmatprep.subr.mxu0 0.0
      %2833 = vmatpush1.msra.mxu0 0.0
      %2834 = vmatprep.subr.mxu0 0.0
      %2835 = vmatpush1.msra.mxu0 0.0
      %2836 = vmatprep.subr.mxu0 0.0
      %2837 = vmatpush1.msra.mxu0 0.0
      %2838 = vmatprep.subr.mxu0 0.0
      %2839 = vmatpush1.msra.mxu0 0.0
      %2840 = vmatprep.subr.mxu0 0.0
      %2841 = vmatpush1.msra.mxu0 0.0
      %2842 = vmatprep.subr.mxu0 0.0
      %2843 = vmatpush1.msra.mxu0 0.0
      %2844 = vmatprep.subr.mxu0 0.0
      %2845 = vmatpush1.msra.mxu0 0.0
      %2846 = vmatprep.subr.mxu0 0.0
      %2847 = vmatpush1.msra.mxu0 0.0
      %2848 = vmatprep.subr.mxu0 0.0
      %2849 = vmatpush1.msra.mxu0 0.0
      %2850 = vmatprep.subr.mxu0 0.0
      %2851 = vmatpush1.msra.mxu0 0.0
      %2852 = vmatprep.subr.mxu0 0.0
      %2853 = vmatpush1.msra.mxu0 0.0
      %2854 = vmatprep.subr.mxu0 0.0
      %2855 = vmatpush1.msra.mxu0 0.0
      %2856 = vmatprep.subr.mxu0 0.0
      %2857 = vmatpush1.msra.mxu0 0.0
      %2858 = vmatprep.subr.mxu0 0.0
      %2859 = vmatpush1.msra.mxu0 0.0
      %2860 = vmatprep.subr.mxu0 0.0
      %2861 = vmatpush1.msra.mxu0 0.0
      %2862 = vmatprep.subr.mxu0 0.0
      %2863 = vmatpush1.msra.mxu0 0.0
      %2864 = vmatprep.subr.mxu0 0.0
      %2865 = vmatpush1.msra.mxu0 0.0
      %2866 = vmatprep.subr.mxu0 0.0
      %2867 = vmatpush1.msra.mxu0 0.0
      %2868 = vmatprep.subr.mxu0 0.0
      %2869 = vmatpush1.msra.mxu0 0.0
      %2870 = vmatprep.subr.mxu0 0.0
      %2871 = vmatpush1.msra.mxu0 0.0
      %2872 = vmatprep.subr.mxu0 0.0
      %2873 = vmatpush1.msra.mxu0 0.0
      %2874 = vmatprep.subr.mxu0 0.0
      %2875 = vmatpush1.msra.mxu0 0.0
      %2876 = vmatprep.subr.mxu0 0.0
      %2877 = vmatpush1.msra.mxu0 0.0
      %2878 = vmatprep.subr.mxu0 0.0
      %2879 = vmatpush1.msra.mxu0 0.0
      %2880 = vmatprep.subr.mxu0 0.0
      %2881 = vmatpush1.msra.mxu0 0.0
      %2882 = vmatprep.mubr.f32.mxu0 0.0
      %2883 = vmatmul.mubr.f32.gmra.mrb[0].mxu0 %v2816
      %v2884 = vpop.f32.mrb[0].mxu0
      %v2885 = vadd.f32 0.0, %v2884
      %v2886 = vpop.f32.mrb[0].mxu0
      %2887 = vdwg.mxu0
      %v2889 = vsel %vm1500, %v2448, 0
      %2891 = vmatprep.subr.mxu0 0.0
      %2892 = vmatpush1.msra.mxu0 %v1491
      %2893 = vmatprep.subr.mxu0 0.0
      %2894 = vmatpush1.msra.mxu0 0.0
      %2895 = vmatprep.subr.mxu0 0.0
      %2896 = vmatpush1.msra.mxu0 0.0
      %2897 = vmatprep.subr.mxu0 0.0
      %2898 = vmatpush1.msra.mxu0 0.0
      %2899 = vmatprep.subr.mxu0 0.0
      %2900 = vmatpush1.msra.mxu0 0.0
      %2901 = vmatprep.subr.mxu0 0.0
      %2902 = vmatpush1.msra.mxu0 0.0
      %2903 = vmatprep.subr.mxu0 0.0
      %2904 = vmatpush1.msra.mxu0 0.0
      %2905 = vmatprep.subr.mxu0 0.0
      %2906 = vmatpush1.msra.mxu0 0.0
      %2907 = vmatprep.subr.mxu0 0.0
      %2908 = vmatpush1.msra.mxu0 0.0
      %2909 = vmatprep.subr.mxu0 0.0
      %2910 = vmatpush1.msra.mxu0 0.0
      %2911 = vmatprep.subr.mxu0 0.0
      %2912 = vmatpush1.msra.mxu0 0.0
      %2913 = vmatprep.subr.mxu0 0.0
      %2914 = vmatpush1.msra.mxu0 0.0
      %2915 = vmatprep.subr.mxu0 0.0
      %2916 = vmatpush1.msra.mxu0 0.0
      %2917 = vmatprep.subr.mxu0 0.0
      %2918 = vmatpush1.msra.mxu0 0.0
      %2919 = vmatprep.subr.mxu0 0.0
      %2920 = vmatpush1.msra.mxu0 0.0
      %2921 = vmatprep.subr.mxu0 0.0
      %2922 = vmatpush1.msra.mxu0 0.0
      %2923 = vmatprep.subr.mxu0 0.0
      %2924 = vmatpush1.msra.mxu0 0.0
      %2925 = vmatprep.subr.mxu0 0.0
      %2926 = vmatpush1.msra.mxu0 0.0
      %2927 = vmatprep.subr.mxu0 0.0
      %2928 = vmatpush1.msra.mxu0 0.0
      %2929 = vmatprep.subr.mxu0 0.0
      %2930 = vmatpush1.msra.mxu0 0.0
      %2931 = vmatprep.subr.mxu0 0.0
      %2932 = vmatpush1.msra.mxu0 0.0
      %2933 = vmatprep.subr.mxu0 0.0
      %2934 = vmatpush1.msra.mxu0 0.0
      %2935 = vmatprep.subr.mxu0 0.0
      %2936 = vmatpush1.msra.mxu0 0.0
      %2937 = vmatprep.subr.mxu0 0.0
      %2938 = vmatpush1.msra.mxu0 0.0
      %2939 = vmatprep.subr.mxu0 0.0
      %2940 = vmatpush1.msra.mxu0 0.0
      %2941 = vmatprep.subr.mxu0 0.0
      %2942 = vmatpush1.msra.mxu0 0.0
      %2943 = vmatprep.subr.mxu0 0.0
      %2944 = vmatpush1.msra.mxu0 0.0
      %2945 = vmatprep.subr.mxu0 0.0
      %2946 = vmatpush1.msra.mxu0 0.0
      %2947 = vmatprep.subr.mxu0 0.0
      %2948 = vmatpush1.msra.mxu0 0.0
      %2949 = vmatprep.subr.mxu0 0.0
      %2950 = vmatpush1.msra.mxu0 0.0
      %2951 = vmatprep.subr.mxu0 0.0
      %2952 = vmatpush1.msra.mxu0 0.0
      %2953 = vmatprep.subr.mxu0 0.0
      %2954 = vmatpush1.msra.mxu0 0.0
      %2955 = vmatprep.mubr.f32.mxu0 0.0
      %2956 = vmatmul.mubr.f32.gmra.mrb[0].mxu0 %v2889
      %v2957 = vpop.f32.mrb[0].mxu0
      %v2958 = vadd.f32 0.0, %v2957
      %v2959 = vpop.f32.mrb[0].mxu0
      %2960 = vdwg.mxu0
      %v2962 = vsel %vm1500, %v2449, 0
      %2964 = vmatprep.subr.mxu0 0.0
      %2965 = vmatpush1.msra.mxu0 %v1496
      %2966 = vmatprep.subr.mxu0 0.0
      %2967 = vmatpush1.msra.mxu0 0.0
      %2968 = vmatprep.subr.mxu0 0.0
      %2969 = vmatpush1.msra.mxu0 0.0
      %2970 = vmatprep.subr.mxu0 0.0
      %2971 = vmatpush1.msra.mxu0 0.0
      %2972 = vmatprep.subr.mxu0 0.0
      %2973 = vmatpush1.msra.mxu0 0.0
      %2974 = vmatprep.subr.mxu0 0.0
      %2975 = vmatpush1.msra.mxu0 0.0
      %2976 = vmatprep.subr.mxu0 0.0
      %2977 = vmatpush1.msra.mxu0 0.0
      %2978 = vmatprep.subr.mxu0 0.0
      %2979 = vmatpush1.msra.mxu0 0.0
      %2980 = vmatprep.subr.mxu0 0.0
      %2981 = vmatpush1.msra.mxu0 0.0
      %2982 = vmatprep.subr.mxu0 0.0
      %2983 = vmatpush1.msra.mxu0 0.0
      %2984 = vmatprep.subr.mxu0 0.0
      %2985 = vmatpush1.msra.mxu0 0.0
      %2986 = vmatprep.subr.mxu0 0.0
      %2987 = vmatpush1.msra.mxu0 0.0
      %2988 = vmatprep.subr.mxu0 0.0
      %2989 = vmatpush1.msra.mxu0 0.0
      %2990 = vmatprep.subr.mxu0 0.0
      %2991 = vmatpush1.msra.mxu0 0.0
      %2992 = vmatprep.subr.mxu0 0.0
      %2993 = vmatpush1.msra.mxu0 0.0
      %2994 = vmatprep.subr.mxu0 0.0
      %2995 = vmatpush1.msra.mxu0 0.0
      %2996 = vmatprep.subr.mxu0 0.0
      %2997 = vmatpush1.msra.mxu0 0.0
      %2998 = vmatprep.subr.mxu0 0.0
      %2999 = vmatpush1.msra.mxu0 0.0
      %3000 = vmatprep.subr.mxu0 0.0
      %3001 = vmatpush1.msra.mxu0 0.0
      %3002 = vmatprep.subr.mxu0 0.0
      %3003 = vmatpush1.msra.mxu0 0.0
      %3004 = vmatprep.subr.mxu0 0.0
      %3005 = vmatpush1.msra.mxu0 0.0
      %3006 = vmatprep.subr.mxu0 0.0
      %3007 = vmatpush1.msra.mxu0 0.0
      %3008 = vmatprep.subr.mxu0 0.0
      %3009 = vmatpush1.msra.mxu0 0.0
      %3010 = vmatprep.subr.mxu0 0.0
      %3011 = vmatpush1.msra.mxu0 0.0
      %3012 = vmatprep.subr.mxu0 0.0
      %3013 = vmatpush1.msra.mxu0 0.0
      %3014 = vmatprep.subr.mxu0 0.0
      %3015 = vmatpush1.msra.mxu0 0.0
      %3016 = vmatprep.subr.mxu0 0.0
      %3017 = vmatpush1.msra.mxu0 0.0
      %3018 = vmatprep.subr.mxu0 0.0
      %3019 = vmatpush1.msra.mxu0 0.0
      %3020 = vmatprep.subr.mxu0 0.0
      %3021 = vmatpush1.msra.mxu0 0.0
      %3022 = vmatprep.subr.mxu0 0.0
      %3023 = vmatpush1.msra.mxu0 0.0
      %3024 = vmatprep.subr.mxu0 0.0
      %3025 = vmatpush1.msra.mxu0 0.0
      %3026 = vmatprep.subr.mxu0 0.0
      %3027 = vmatpush1.msra.mxu0 0.0
      %3028 = vmatprep.mubr.f32.mxu0 0.0
      %3029 = vmatmul.mubr.f32.gmra.mrb[0].mxu0 %v2962
      %v3030 = vpop.f32.mrb[0].mxu0
      %v3031 = vadd.f32 0.0, %v3030
      %v3032 = vpop.f32.mrb[0].mxu0
      %3033 = vdwg.mxu0
      %v3034 = vld [vmem:[%s488] sm:$0xff]
      %v3035 = vld [vmem:[%s488 + $0x8] sm:$0xff]
      %v3036 = vld [vmem:[%s488 + $0x10] sm:$0xff]
      %v3037 = vld [vmem:[%s488 + $0x18] sm:$0xff]
      %v3039 = vsel %vm1500, %v2520, 0
      %v3042 = vsel %vm1500, %v2593, 0
      %3044 = vmatprep.subr.mxu0 0.0
      %3045 = vmatpush1.msra.mxu0 %v3034
      %3046 = vmatprep.subr.mxu0 0.0
      %3047 = vmatpush1.msra.mxu0 0.0
      %3048 = vmatprep.subr.mxu0 0.0
      %3049 = vmatpush1.msra.mxu0 0.0
      %3050 = vmatprep.subr.mxu0 0.0
      %3051 = vmatpush1.msra.mxu0 0.0
      %3052 = vmatprep.subr.mxu0 0.0
      %3053 = vmatpush1.msra.mxu0 0.0
      %3054 = vmatprep.subr.mxu0 0.0
      %3055 = vmatpush1.msra.mxu0 0.0
      %3056 = vmatprep.subr.mxu0 0.0
      %3057 = vmatpush1.msra.mxu0 0.0
      %3058 = vmatprep.subr.mxu0 0.0
      %3059 = vmatpush1.msra.mxu0 0.0
      %3060 = vmatprep.subr.mxu0 0.0
      %3061 = vmatpush1.msra.mxu0 0.0
      %3062 = vmatprep.subr.mxu0 0.0
      %3063 = vmatpush1.msra.mxu0 0.0
      %3064 = vmatprep.subr.mxu0 0.0
      %3065 = vmatpush1.msra.mxu0 0.0
      %3066 = vmatprep.subr.mxu0 0.0
      %3067 = vmatpush1.msra.mxu0 0.0
      %3068 = vmatprep.subr.mxu0 0.0
      %3069 = vmatpush1.msra.mxu0 0.0
      %3070 = vmatprep.subr.mxu0 0.0
      %3071 = vmatpush1.msra.mxu0 0.0
      %3072 = vmatprep.subr.mxu0 0.0
      %3073 = vmatpush1.msra.mxu0 0.0
      %3074 = vmatprep.subr.mxu0 0.0
      %3075 = vmatpush1.msra.mxu0 0.0
      %3076 = vmatprep.subr.mxu0 0.0
      %3077 = vmatpush1.msra.mxu0 0.0
      %3078 = vmatprep.subr.mxu0 0.0
      %3079 = vmatpush1.msra.mxu0 0.0
      %3080 = vmatprep.subr.mxu0 0.0
      %3081 = vmatpush1.msra.mxu0 0.0
      %3082 = vmatprep.subr.mxu0 0.0
      %3083 = vmatpush1.msra.mxu0 0.0
      %3084 = vmatprep.subr.mxu0 0.0
      %3085 = vmatpush1.msra.mxu0 0.0
      %3086 = vmatprep.subr.mxu0 0.0
      %3087 = vmatpush1.msra.mxu0 0.0
      %3088 = vmatprep.subr.mxu0 0.0
      %3089 = vmatpush1.msra.mxu0 0.0
      %3090 = vmatprep.subr.mxu0 0.0
      %3091 = vmatpush1.msra.mxu0 0.0
      %3092 = vmatprep.subr.mxu0 0.0
      %3093 = vmatpush1.msra.mxu0 0.0
      %3094 = vmatprep.subr.mxu0 0.0
      %3095 = vmatpush1.msra.mxu0 0.0
      %3096 = vmatprep.subr.mxu0 0.0
      %3097 = vmatpush1.msra.mxu0 0.0
      %3098 = vmatprep.subr.mxu0 0.0
      %3099 = vmatpush1.msra.mxu0 0.0
      %3100 = vmatprep.subr.mxu0 0.0
      %3101 = vmatpush1.msra.mxu0 0.0
      %3102 = vmatprep.subr.mxu0 0.0
      %3103 = vmatpush1.msra.mxu0 0.0
      %3104 = vmatprep.subr.mxu0 0.0
      %3105 = vmatpush1.msra.mxu0 0.0
      %3106 = vmatprep.subr.mxu0 0.0
      %3107 = vmatpush1.msra.mxu0 0.0
      %3108 = vmatprep.mubr.f32.mxu0 0.0
      %3109 = vmatmul.mubr.f32.gmra.mrb[0].mxu0 %v3039
      %v3110 = vpop.f32.mrb[0].mxu0
      %v3111 = vadd.f32 0.0, %v3110
      %v3112 = vpop.f32.mrb[0].mxu0
      %3113 = vmatprep.mubr.f32.mxu0 0.0
      %3114 = vmatmul.mubr.f32.gmra.mrb[0].mxu0 %v3042
      %v3115 = vpop.f32.mrb[0].mxu0
      %v3116 = vadd.f32 0.0, %v3115
      %v3117 = vpop.f32.mrb[0].mxu0
      %3118 = vdwg.mxu0
      %v3120 = vsel %vm1500, %v2666, 0
      %v3123 = vsel %vm1500, %v2739, 0
      %3125 = vmatprep.subr.mxu0 0.0
      %3126 = vmatpush1.msra.mxu0 %v3035
      %3127 = vmatprep.subr.mxu0 0.0
      %3128 = vmatpush1.msra.mxu0 0.0
      %3129 = vmatprep.subr.mxu0 0.0
      %3130 = vmatpush1.msra.mxu0 0.0
      %3131 = vmatprep.subr.mxu0 0.0
      %3132 = vmatpush1.msra.mxu0 0.0
      %3133 = vmatprep.subr.mxu0 0.0
      %3134 = vmatpush1.msra.mxu0 0.0
      %3135 = vmatprep.subr.mxu0 0.0
      %3136 = vmatpush1.msra.mxu0 0.0
      %3137 = vmatprep.subr.mxu0 0.0
      %3138 = vmatpush1.msra.mxu0 0.0
      %3139 = vmatprep.subr.mxu0 0.0
      %3140 = vmatpush1.msra.mxu0 0.0
      %3141 = vmatprep.subr.mxu0 0.0
      %3142 = vmatpush1.msra.mxu0 0.0
      %3143 = vmatprep.subr.mxu0 0.0
      %3144 = vmatpush1.msra.mxu0 0.0
      %3145 = vmatprep.subr.mxu0 0.0
      %3146 = vmatpush1.msra.mxu0 0.0
      %3147 = vmatprep.subr.mxu0 0.0
      %3148 = vmatpush1.msra.mxu0 0.0
      %3149 = vmatprep.subr.mxu0 0.0
      %3150 = vmatpush1.msra.mxu0 0.0
      %3151 = vmatprep.subr.mxu0 0.0
      %3152 = vmatpush1.msra.mxu0 0.0
      %3153 = vmatprep.subr.mxu0 0.0
      %3154 = vmatpush1.msra.mxu0 0.0
      %3155 = vmatprep.subr.mxu0 0.0
      %3156 = vmatpush1.msra.mxu0 0.0
      %3157 = vmatprep.subr.mxu0 0.0
      %3158 = vmatpush1.msra.mxu0 0.0
      %3159 = vmatprep.subr.mxu0 0.0
      %3160 = vmatpush1.msra.mxu0 0.0
      %3161 = vmatprep.subr.mxu0 0.0
      %3162 = vmatpush1.msra.mxu0 0.0
      %3163 = vmatprep.subr.mxu0 0.0
      %3164 = vmatpush1.msra.mxu0 0.0
      %3165 = vmatprep.subr.mxu0 0.0
      %3166 = vmatpush1.msra.mxu0 0.0
      %3167 = vmatprep.subr.mxu0 0.0
      %3168 = vmatpush1.msra.mxu0 0.0
      %3169 = vmatprep.subr.mxu0 0.0
      %3170 = vmatpush1.msra.mxu0 0.0
      %3171 = vmatprep.subr.mxu0 0.0
      %3172 = vmatpush1.msra.mxu0 0.0
      %3173 = vmatprep.subr.mxu0 0.0
      %3174 = vmatpush1.msra.mxu0 0.0
      %3175 = vmatprep.subr.mxu0 0.0
      %3176 = vmatpush1.msra.mxu0 0.0
      %3177 = vmatprep.subr.mxu0 0.0
      %3178 = vmatpush1.msra.mxu0 0.0
      %3179 = vmatprep.subr.mxu0 0.0
      %3180 = vmatpush1.msra.mxu0 0.0
      %3181 = vmatprep.subr.mxu0 0.0
      %3182 = vmatpush1.msra.mxu0 0.0
      %3183 = vmatprep.subr.mxu0 0.0
      %3184 = vmatpush1.msra.mxu0 0.0
      %3185 = vmatprep.subr.mxu0 0.0
      %3186 = vmatpush1.msra.mxu0 0.0
      %3187 = vmatprep.subr.mxu0 0.0
      %3188 = vmatpush1.msra.mxu0 0.0
      %3189 = vmatprep.mubr.f32.mxu0 0.0
      %3190 = vmatmul.mubr.f32.gmra.mrb[0].mxu0 %v3120
      %v3191 = vpop.f32.mrb[0].mxu0
      %v3192 = vadd.f32 0.0, %v3191
      %v3193 = vpop.f32.mrb[0].mxu0
      %3194 = vmatprep.mubr.f32.mxu0 0.0
      %3195 = vmatmul.mubr.f32.gmra.mrb[0].mxu0 %v3123
      %v3196 = vpop.f32.mrb[0].mxu0
      %v3197 = vadd.f32 0.0, %v3196
      %v3198 = vpop.f32.mrb[0].mxu0
      %3199 = vdwg.mxu0
      %v3201 = vsel %vm1500, %v2812, 0
      %v3204 = vsel %vm1500, %v2885, 0
      %3206 = vmatprep.subr.mxu0 0.0
      %3207 = vmatpush1.msra.mxu0 %v3036
      %3208 = vmatprep.subr.mxu0 0.0
      %3209 = vmatpush1.msra.mxu0 0.0
      %3210 = vmatprep.subr.mxu0 0.0
      %3211 = vmatpush1.msra.mxu0 0.0
      %3212 = vmatprep.subr.mxu0 0.0
      %3213 = vmatpush1.msra.mxu0 0.0
      %3214 = vmatprep.subr.mxu0 0.0
      %3215 = vmatpush1.msra.mxu0 0.0
      %3216 = vmatprep.subr.mxu0 0.0
      %3217 = vmatpush1.msra.mxu0 0.0
      %3218 = vmatprep.subr.mxu0 0.0
      %3219 = vmatpush1.msra.mxu0 0.0
      %3220 = vmatprep.subr.mxu0 0.0
      %3221 = vmatpush1.msra.mxu0 0.0
      %3222 = vmatprep.subr.mxu0 0.0
      %3223 = vmatpush1.msra.mxu0 0.0
      %3224 = vmatprep.subr.mxu0 0.0
      %3225 = vmatpush1.msra.mxu0 0.0
      %3226 = vmatprep.subr.mxu0 0.0
      %3227 = vmatpush1.msra.mxu0 0.0
      %3228 = vmatprep.subr.mxu0 0.0
      %3229 = vmatpush1.msra.mxu0 0.0
      %3230 = vmatprep.subr.mxu0 0.0
      %3231 = vmatpush1.msra.mxu0 0.0
      %3232 = vmatprep.subr.mxu0 0.0
      %3233 = vmatpush1.msra.mxu0 0.0
      %3234 = vmatprep.subr.mxu0 0.0
      %3235 = vmatpush1.msra.mxu0 0.0
      %3236 = vmatprep.subr.mxu0 0.0
      %3237 = vmatpush1.msra.mxu0 0.0
      %3238 = vmatprep.subr.mxu0 0.0
      %3239 = vmatpush1.msra.mxu0 0.0
      %3240 = vmatprep.subr.mxu0 0.0
      %3241 = vmatpush1.msra.mxu0 0.0
      %3242 = vmatprep.subr.mxu0 0.0
      %3243 = vmatpush1.msra.mxu0 0.0
      %3244 = vmatprep.subr.mxu0 0.0
      %3245 = vmatpush1.msra.mxu0 0.0
      %3246 = vmatprep.subr.mxu0 0.0
      %3247 = vmatpush1.msra.mxu0 0.0
      %3248 = vmatprep.subr.mxu0 0.0
      %3249 = vmatpush1.msra.mxu0 0.0
      %3250 = vmatprep.subr.mxu0 0.0
      %3251 = vmatpush1.msra.mxu0 0.0
      %3252 = vmatprep.subr.mxu0 0.0
      %3253 = vmatpush1.msra.mxu0 0.0
      %3254 = vmatprep.subr.mxu0 0.0
      %3255 = vmatpush1.msra.mxu0 0.0
      %3256 = vmatprep.subr.mxu0 0.0
      %3257 = vmatpush1.msra.mxu0 0.0
      %3258 = vmatprep.subr.mxu0 0.0
      %3259 = vmatpush1.msra.mxu0 0.0
      %3260 = vmatprep.subr.mxu0 0.0
      %3261 = vmatpush1.msra.mxu0 0.0
      %3262 = vmatprep.subr.mxu0 0.0
      %3263 = vmatpush1.msra.mxu0 0.0
      %3264 = vmatprep.subr.mxu0 0.0
      %3265 = vmatpush1.msra.mxu0 0.0
      %3266 = vmatprep.subr.mxu0 0.0
      %3267 = vmatpush1.msra.mxu0 0.0
      %3268 = vmatprep.subr.mxu0 0.0
      %3269 = vmatpush1.msra.mxu0 0.0
      %3270 = vmatprep.mubr.f32.mxu0 0.0
      %3271 = vmatmul.mubr.f32.gmra.mrb[0].mxu0 %v3201
      %v3272 = vpop.f32.mrb[0].mxu0
      %v3273 = vadd.f32 0.0, %v3272
      %v3274 = vpop.f32.mrb[0].mxu0
      %3275 = vmatprep.mubr.f32.mxu0 0.0
      %3276 = vmatmul.mubr.f32.gmra.mrb[0].mxu0 %v3204
      %v3277 = vpop.f32.mrb[0].mxu0
      %v3278 = vadd.f32 0.0, %v3277
      %v3279 = vpop.f32.mrb[0].mxu0
      %3280 = vdwg.mxu0
      %v3282 = vsel %vm1500, %v2958, 0
      %v3285 = vsel %vm1500, %v3031, 0
      %3287 = vmatprep.subr.mxu0 0.0
      %3288 = vmatpush1.msra.mxu0 %v3037
      %3289 = vmatprep.subr.mxu0 0.0
      %3290 = vmatpush1.msra.mxu0 0.0
      %3291 = vmatprep.subr.mxu0 0.0
      %3292 = vmatpush1.msra.mxu0 0.0
      %3293 = vmatprep.subr.mxu0 0.0
      %3294 = vmatpush1.msra.mxu0 0.0
      %3295 = vmatprep.subr.mxu0 0.0
      %3296 = vmatpush1.msra.mxu0 0.0
      %3297 = vmatprep.subr.mxu0 0.0
      %3298 = vmatpush1.msra.mxu0 0.0
      %3299 = vmatprep.subr.mxu0 0.0
      %3300 = vmatpush1.msra.mxu0 0.0
      %3301 = vmatprep.subr.mxu0 0.0
      %3302 = vmatpush1.msra.mxu0 0.0
      %3303 = vmatprep.subr.mxu0 0.0
      %3304 = vmatpush1.msra.mxu0 0.0
      %3305 = vmatprep.subr.mxu0 0.0
      %3306 = vmatpush1.msra.mxu0 0.0
      %3307 = vmatprep.subr.mxu0 0.0
      %3308 = vmatpush1.msra.mxu0 0.0
      %3309 = vmatprep.subr.mxu0 0.0
      %3310 = vmatpush1.msra.mxu0 0.0
      %3311 = vmatprep.subr.mxu0 0.0
      %3312 = vmatpush1.msra.mxu0 0.0
      %3313 = vmatprep.subr.mxu0 0.0
      %3314 = vmatpush1.msra.mxu0 0.0
      %3315 = vmatprep.subr.mxu0 0.0
      %3316 = vmatpush1.msra.mxu0 0.0
      %3317 = vmatprep.subr.mxu0 0.0
      %3318 = vmatpush1.msra.mxu0 0.0
      %3319 = vmatprep.subr.mxu0 0.0
      %3320 = vmatpush1.msra.mxu0 0.0
      %3321 = vmatprep.subr.mxu0 0.0
      %3322 = vmatpush1.msra.mxu0 0.0
      %3323 = vmatprep.subr.mxu0 0.0
      %3324 = vmatpush1.msra.mxu0 0.0
      %3325 = vmatprep.subr.mxu0 0.0
      %3326 = vmatpush1.msra.mxu0 0.0
      %3327 = vmatprep.subr.mxu0 0.0
      %3328 = vmatpush1.msra.mxu0 0.0
      %3329 = vmatprep.subr.mxu0 0.0
      %3330 = vmatpush1.msra.mxu0 0.0
      %3331 = vmatprep.subr.mxu0 0.0
      %3332 = vmatpush1.msra.mxu0 0.0
      %3333 = vmatprep.subr.mxu0 0.0
      %3334 = vmatpush1.msra.mxu0 0.0
      %3335 = vmatprep.subr.mxu0 0.0
      %3336 = vmatpush1.msra.mxu0 0.0
      %3337 = vmatprep.subr.mxu0 0.0
      %3338 = vmatpush1.msra.mxu0 0.0
      %3339 = vmatprep.subr.mxu0 0.0
      %3340 = vmatpush1.msra.mxu0 0.0
      %3341 = vmatprep.subr.mxu0 0.0
      %3342 = vmatpush1.msra.mxu0 0.0
      %3343 = vmatprep.subr.mxu0 0.0
      %3344 = vmatpush1.msra.mxu0 0.0
      %3345 = vmatprep.subr.mxu0 0.0
      %3346 = vmatpush1.msra.mxu0 0.0
      %3347 = vmatprep.subr.mxu0 0.0
      %3348 = vmatpush1.msra.mxu0 0.0
      %3349 = vmatprep.subr.mxu0 0.0
      %3350 = vmatpush1.msra.mxu0 0.0
      %3351 = vmatprep.mubr.f32.mxu0 0.0
      %3352 = vmatmul.mubr.f32.gmra.mrb[0].mxu0 %v3282
      %v3353 = vpop.f32.mrb[0].mxu0
      %v3354 = vadd.f32 0.0, %v3353
      %v3355 = vpop.f32.mrb[0].mxu0
      %3356 = vmatprep.mubr.f32.mxu0 0.0
      %3357 = vmatmul.mubr.f32.gmra.mrb[0].mxu0 %v3285
      %v3358 = vpop.f32.mrb[0].mxu0
      %v3359 = vadd.f32 0.0, %v3358
      %v3360 = vpop.f32.mrb[0].mxu0
      %3361 = vdwg.mxu0
      %v3362 = vsel %vm520, %v3111, 0.0
      %v3363 = vsel %vm520, %v3192, 0.0
      %v3364 = vadd.f32 %v3362, %v3363
      %v3365 = vsel %vm520, %v3273, 0.0
      %v3366 = vadd.f32 %v3364, %v3365
      %v3367 = vsel %vm520, %v3354, 0.0
      %v3368 = vadd.f32 %v3366, %v3367
      %v3369 = vsel %vm520, %v3116, 0.0
      %v3370 = vsel %vm520, %v3197, 0.0
      %v3371 = vadd.f32 %v3369, %v3370
      %v3372 = vsel %vm520, %v3278, 0.0
      %v3373 = vadd.f32 %v3371, %v3372
      %v3374 = vsel %vm520, %v3359, 0.0
      %v3375 = vadd.f32 %v3373, %v3374
      %v3376 = vadd.f32 %v516, %v3368
      %v3377 = vadd.f32 %v517, %v3375
      %v3378 = vmul.f32 %v3376, %v3376
      %v3379 = vmul.f32 %v3377, %v3377
      %v3380 = vsel %vm520, %v3378, 0.0
      %3381 = vadd.xlane.f32.xlu0 %v3380
      %v3382 = vpop.xlane.xlu0 %3381
      %v3383 = vsel %vm520, %v3379, 0.0
      %3384 = vadd.xlane.f32.xlu0 %v3383
      %v3385 = vpop.xlane.xlu0 %3384
      %v3386 = vmul.f32 %v3382, %v527
      %v3387 = vmul.f32 %v3385, %v527
      %v3388 = vadd.f32 %v3386, 1e-06
      %v3389 = vadd.f32 %v3387, 1e-06
      %v3390 = vrsqrt.pop %v3388
      %v3391 = vrsqrt.pop %v3389
      %v3392 = vmul.f32 %v3376, %v3390
      %v3393 = vmul.f32 %v3377, %v3391
      %v3394 = vld [vmem:[%s491] sm:$0x1]
      %v3396 = vlaneseq
      %v3397 = vshrl.u32 %v3396, 7
      %v3398 = vsub.s32 0, %v3397
      %v3399 = vrot.slane %v3394, %v3398
      %v3401 = vmul.f32 %v3392, %v3399
      %v3402 = vmul.f32 %v3393, %v3399
      %v3403 = vld [vmem:[%s496] sm:$0xff]
      %v3404 = vld [vmem:[%s496 + $0x8] sm:$0xff]
      %v3405 = vld [vmem:[%s496 + $0x10] sm:$0xff]
      %v3406 = vld [vmem:[%s496 + $0x18] sm:$0xff]
      %v3408 = vsel %vm520, %v3401, 0
      %v3411 = vsel %vm520, %v3402, 0
      %3413 = vmatprep.subr.mxu0 0.0
      %3414 = vmatpush1.msra.mxu0 %v3403
      %3415 = vmatprep.subr.mxu0 0.0
      %3416 = vmatpush1.msra.mxu0 %v3404
      %3417 = vmatprep.subr.mxu0 0.0
      %3418 = vmatpush1.msra.mxu0 %v3405
      %3419 = vmatprep.subr.mxu0 0.0
      %3420 = vmatpush1.msra.mxu0 %v3406
      %3421 = vmatprep.subr.mxu0 0.0
      %3422 = vmatpush1.msra.mxu0 0.0
      %3423 = vmatprep.subr.mxu0 0.0
      %3424 = vmatpush1.msra.mxu0 0.0
      %3425 = vmatprep.subr.mxu0 0.0
      %3426 = vmatpush1.msra.mxu0 0.0
      %3427 = vmatprep.subr.mxu0 0.0
      %3428 = vmatpush1.msra.mxu0 0.0
      %3429 = vmatprep.subr.mxu0 0.0
      %3430 = vmatpush1.msra.mxu0 0.0
      %3431 = vmatprep.subr.mxu0 0.0
      %3432 = vmatpush1.msra.mxu0 0.0
      %3433 = vmatprep.subr.mxu0 0.0
      %3434 = vmatpush1.msra.mxu0 0.0
      %3435 = vmatprep.subr.mxu0 0.0
      %3436 = vmatpush1.msra.mxu0 0.0
      %3437 = vmatprep.subr.mxu0 0.0
      %3438 = vmatpush1.msra.mxu0 0.0
      %3439 = vmatprep.subr.mxu0 0.0
      %3440 = vmatpush1.msra.mxu0 0.0
      %3441 = vmatprep.subr.mxu0 0.0
      %3442 = vmatpush1.msra.mxu0 0.0
      %3443 = vmatprep.subr.mxu0 0.0
      %3444 = vmatpush1.msra.mxu0 0.0
      %3445 = vmatprep.subr.mxu0 0.0
      %3446 = vmatpush1.msra.mxu0 0.0
      %3447 = vmatprep.subr.mxu0 0.0
      %3448 = vmatpush1.msra.mxu0 0.0
      %3449 = vmatprep.subr.mxu0 0.0
      %3450 = vmatpush1.msra.mxu0 0.0
      %3451 = vmatprep.subr.mxu0 0.0
      %3452 = vmatpush1.msra.mxu0 0.0
      %3453 = vmatprep.subr.mxu0 0.0
      %3454 = vmatpush1.msra.mxu0 0.0
      %3455 = vmatprep.subr.mxu0 0.0
      %3456 = vmatpush1.msra.mxu0 0.0
      %3457 = vmatprep.subr.mxu0 0.0
      %3458 = vmatpush1.msra.mxu0 0.0
      %3459 = vmatprep.subr.mxu0 0.0
      %3460 = vmatpush1.msra.mxu0 0.0
      %3461 = vmatprep.subr.mxu0 0.0
      %3462 = vmatpush1.msra.mxu0 0.0
      %3463 = vmatprep.subr.mxu0 0.0
      %3464 = vmatpush1.msra.mxu0 0.0
      %3465 = vmatprep.subr.mxu0 0.0
      %3466 = vmatpush1.msra.mxu0 0.0
      %3467 = vmatprep.subr.mxu0 0.0
      %3468 = vmatpush1.msra.mxu0 0.0
      %3469 = vmatprep.subr.mxu0 0.0
      %3470 = vmatpush1.msra.mxu0 0.0
      %3471 = vmatprep.subr.mxu0 0.0
      %3472 = vmatpush1.msra.mxu0 0.0
      %3473 = vmatprep.subr.mxu0 0.0
      %3474 = vmatpush1.msra.mxu0 0.0
      %3475 = vmatprep.subr.mxu0 0.0
      %3476 = vmatpush1.msra.mxu0 0.0
      %3477 = vmatprep.mubr.f32.mxu0 0.0
      %3478 = vmatmul.mubr.f32.gmra.mrb[0].mxu0 %v3408
      %v3479 = vpop.f32.mrb[0].mxu0
      %v3480 = vadd.f32 0.0, %v3479
      %v3481 = vpop.f32.mrb[0].mxu0
      %3482 = vmatprep.mubr.f32.mxu0 0.0
      %3483 = vmatmul.mubr.f32.gmra.mrb[0].mxu0 %v3411
      %v3484 = vpop.f32.mrb[0].mxu0
      %v3485 = vadd.f32 0.0, %v3484
      %v3486 = vpop.f32.mrb[0].mxu0
      %3487 = vdwg.mxu0
      %v3488 = vmul.f32 %v3480, %v3480
      %v3489 = vmul.f32 %v3485, %v3485
      %v3490 = vmul.f32 %v3480, %v3488
      %v3491 = vmul.f32 %v3485, %v3489
      %v3492 = vmul.f32 %v3490, 0.044715
      %v3493 = vmul.f32 %v3491, 0.044715
      %v3494 = vadd.f32 %v3480, %v3492
      %v3495 = vadd.f32 %v3485, %v3493
      %v3496 = vmul.f32 %v3494, 0.7978846
      %v3497 = vmul.f32 %v3495, 0.7978846
      %v3498 = vtanh.pop %v3496
      %v3499 = vtanh.pop %v3497
      %v3500 = vadd.f32 %v3498, 1.0
      %v3501 = vadd.f32 %v3499, 1.0
      %v3502 = vmul.f32 %v3500, 0.5
      %v3503 = vmul.f32 %v3501, 0.5
      %v3504 = vmul.f32 %v3480, %v3502
      %v3505 = vmul.f32 %v3485, %v3503
      %v3506 = vld [vmem:[%s501] sm:$0xff]
      %v3507 = vld [vmem:[%s501 + $0x8] sm:$0xff]
      %v3508 = vld [vmem:[%s501 + $0x10] sm:$0xff]
      %v3509 = vld [vmem:[%s501 + $0x18] sm:$0xff]
      %3510 = vmatprep.subr.mxu0 0.0
      %3511 = vmatpush1.msra.mxu0 %v3506
      %3512 = vmatprep.subr.mxu0 0.0
      %3513 = vmatpush1.msra.mxu0 %v3507
      %3514 = vmatprep.subr.mxu0 0.0
      %3515 = vmatpush1.msra.mxu0 %v3508
      %3516 = vmatprep.subr.mxu0 0.0
      %3517 = vmatpush1.msra.mxu0 %v3509
      %3518 = vmatprep.subr.mxu0 0.0
      %3519 = vmatpush1.msra.mxu0 0.0
      %3520 = vmatprep.subr.mxu0 0.0
      %3521 = vmatpush1.msra.mxu0 0.0
      %3522 = vmatprep.subr.mxu0 0.0
      %3523 = vmatpush1.msra.mxu0 0.0
      %3524 = vmatprep.subr.mxu0 0.0
      %3525 = vmatpush1.msra.mxu0 0.0
      %3526 = vmatprep.subr.mxu0 0.0
      %3527 = vmatpush1.msra.mxu0 0.0
      %3528 = vmatprep.subr.mxu0 0.0
      %3529 = vmatpush1.msra.mxu0 0.0
      %3530 = vmatprep.subr.mxu0 0.0
      %3531 = vmatpush1.msra.mxu0 0.0
      %3532 = vmatprep.subr.mxu0 0.0
      %3533 = vmatpush1.msra.mxu0 0.0
      %3534 = vmatprep.subr.mxu0 0.0
      %3535 = vmatpush1.msra.mxu0 0.0
      %3536 = vmatprep.subr.mxu0 0.0
      %3537 = vmatpush1.msra.mxu0 0.0
      %3538 = vmatprep.subr.mxu0 0.0
      %3539 = vmatpush1.msra.mxu0 0.0
      %3540 = vmatprep.subr.mxu0 0.0
      %3541 = vmatpush1.msra.mxu0 0.0
      %3542 = vmatprep.subr.mxu0 0.0
      %3543 = vmatpush1.msra.mxu0 0.0
      %3544 = vmatprep.subr.mxu0 0.0
      %3545 = vmatpush1.msra.mxu0 0.0
      %3546 = vmatprep.subr.mxu0 0.0
      %3547 = vmatpush1.msra.mxu0 0.0
      %3548 = vmatprep.subr.mxu0 0.0
      %3549 = vmatpush1.msra.mxu0 0.0
      %3550 = vmatprep.subr.mxu0 0.0
      %3551 = vmatpush1.msra.mxu0 0.0
      %3552 = vmatprep.subr.mxu0 0.0
      %3553 = vmatpush1.msra.mxu0 0.0
      %3554 = vmatprep.subr.mxu0 0.0
      %3555 = vmatpush1.msra.mxu0 0.0
      %3556 = vmatprep.subr.mxu0 0.0
      %3557 = vmatpush1.msra.mxu0 0.0
      %3558 = vmatprep.subr.mxu0 0.0
      %3559 = vmatpush1.msra.mxu0 0.0
      %3560 = vmatprep.subr.mxu0 0.0
      %3561 = vmatpush1.msra.mxu0 0.0
      %3562 = vmatprep.subr.mxu0 0.0
      %3563 = vmatpush1.msra.mxu0 0.0
      %3564 = vmatprep.subr.mxu0 0.0
      %3565 = vmatpush1.msra.mxu0 0.0
      %3566 = vmatprep.subr.mxu0 0.0
      %3567 = vmatpush1.msra.mxu0 0.0
      %3568 = vmatprep.subr.mxu0 0.0
      %3569 = vmatpush1.msra.mxu0 0.0
      %3570 = vmatprep.subr.mxu0 0.0
      %3571 = vmatpush1.msra.mxu0 0.0
      %3572 = vmatprep.subr.mxu0 0.0
      %3573 = vmatpush1.msra.mxu0 0.0
      %3574 = vmatprep.mubr.f32.mxu0 0.0
      %3575 = vmatmul.mubr.f32.gmra.mrb[0].mxu0 %v3408
      %v3576 = vpop.f32.mrb[0].mxu0
      %v3577 = vadd.f32 0.0, %v3576
      %v3578 = vpop.f32.mrb[0].mxu0
      %3579 = vmatprep.mubr.f32.mxu0 0.0
      %3580 = vmatmul.mubr.f32.gmra.mrb[0].mxu0 %v3411
      %v3581 = vpop.f32.mrb[0].mxu0
      %v3582 = vadd.f32 0.0, %v3581
      %v3583 = vpop.f32.mrb[0].mxu0
      %3584 = vdwg.mxu0
      %v3585 = vmul.f32 %v3504, %v3577
      %v3586 = vmul.f32 %v3505, %v3582
      %v3587 = vld [vmem:[%s506] sm:$0xff]
      %v3588 = vld [vmem:[%s506 + $0x8] sm:$0xff]
      %v3589 = vld [vmem:[%s506 + $0x10] sm:$0xff]
      %v3590 = vld [vmem:[%s506 + $0x18] sm:$0xff]
      %v3591 = vld [vmem:[%s506 + $0x20] sm:$0xff]
      %v3592 = vld [vmem:[%s506 + $0x28] sm:$0xff]
      %v3593 = vld [vmem:[%s506 + $0x30] sm:$0xff]
      %v3594 = vld [vmem:[%s506 + $0x38] sm:$0xff]
      %vm3595 = vcmask 523264
      %v3597 = vsel %vm3595, %v3585, 0
      %v3600 = vsel %vm3595, %v3586, 0
      %3602 = vmatprep.subr.mxu0 0.0
      %3603 = vmatpush1.msra.mxu0 %v3587
      %3604 = vmatprep.subr.mxu0 0.0
      %3605 = vmatpush1.msra.mxu0 %v3588
      %3606 = vmatprep.subr.mxu0 0.0
      %3607 = vmatpush1.msra.mxu0 %v3589
      %3608 = vmatprep.subr.mxu0 0.0
      %3609 = vmatpush1.msra.mxu0 %v3590
      %3610 = vmatprep.subr.mxu0 0.0
      %3611 = vmatpush1.msra.mxu0 %v3591
      %3612 = vmatprep.subr.mxu0 0.0
      %3613 = vmatpush1.msra.mxu0 %v3592
      %3614 = vmatprep.subr.mxu0 0.0
      %3615 = vmatpush1.msra.mxu0 %v3593
      %3616 = vmatprep.subr.mxu0 0.0
      %3617 = vmatpush1.msra.mxu0 %v3594
      %3618 = vmatprep.subr.mxu0 0.0
      %3619 = vmatpush1.msra.mxu0 0.0
      %3620 = vmatprep.subr.mxu0 0.0
      %3621 = vmatpush1.msra.mxu0 0.0
      %3622 = vmatprep.subr.mxu0 0.0
      %3623 = vmatpush1.msra.mxu0 0.0
      %3624 = vmatprep.subr.mxu0 0.0
      %3625 = vmatpush1.msra.mxu0 0.0
      %3626 = vmatprep.subr.mxu0 0.0
      %3627 = vmatpush1.msra.mxu0 0.0
      %3628 = vmatprep.subr.mxu0 0.0
      %3629 = vmatpush1.msra.mxu0 0.0
      %3630 = vmatprep.subr.mxu0 0.0
      %3631 = vmatpush1.msra.mxu0 0.0
      %3632 = vmatprep.subr.mxu0 0.0
      %3633 = vmatpush1.msra.mxu0 0.0
      %3634 = vmatprep.subr.mxu0 0.0
      %3635 = vmatpush1.msra.mxu0 0.0
      %3636 = vmatprep.subr.mxu0 0.0
      %3637 = vmatpush1.msra.mxu0 0.0
      %3638 = vmatprep.subr.mxu0 0.0
      %3639 = vmatpush1.msra.mxu0 0.0
      %3640 = vmatprep.subr.mxu0 0.0
      %3641 = vmatpush1.msra.mxu0 0.0
      %3642 = vmatprep.subr.mxu0 0.0
      %3643 = vmatpush1.msra.mxu0 0.0
      %3644 = vmatprep.subr.mxu0 0.0
      %3645 = vmatpush1.msra.mxu0 0.0
      %3646 = vmatprep.subr.mxu0 0.0
      %3647 = vmatpush1.msra.mxu0 0.0
      %3648 = vmatprep.subr.mxu0 0.0
      %3649 = vmatpush1.msra.mxu0 0.0
      %3650 = vmatprep.subr.mxu0 0.0
      %3651 = vmatpush1.msra.mxu0 0.0
      %3652 = vmatprep.subr.mxu0 0.0
      %3653 = vmatpush1.msra.mxu0 0.0
      %3654 = vmatprep.subr.mxu0 0.0
      %3655 = vmatpush1.msra.mxu0 0.0
      %3656 = vmatprep.subr.mxu0 0.0
      %3657 = vmatpush1.msra.mxu0 0.0
      %3658 = vmatprep.subr.mxu0 0.0
      %3659 = vmatpush1.msra.mxu0 0.0
      %3660 = vmatprep.subr.mxu0 0.0
      %3661 = vmatpush1.msra.mxu0 0.0
      %3662 = vmatprep.subr.mxu0 0.0
      %3663 = vmatpush1.msra.mxu0 0.0
      %3664 = vmatprep.subr.mxu0 0.0
      %3665 = vmatpush1.msra.mxu0 0.0
      %3666 = vmatprep.mubr.f32.mxu0 0.0
      %3667 = vmatmul.mubr.f32.gmra.mrb[0].mxu0 %v3597
      %v3668 = vpop.f32.mrb[0].mxu0
      %v3669 = vadd.f32 0.0, %v3668
      %v3670 = vpop.f32.mrb[0].mxu0
      %3671 = vmatprep.mubr.f32.mxu0 0.0
      %3672 = vmatmul.mubr.f32.gmra.mrb[0].mxu0 %v3600
      %v3673 = vpop.f32.mrb[0].mxu0
      %v3674 = vadd.f32 0.0, %v3673
      %v3675 = vpop.f32.mrb[0].mxu0
      %3676 = vdwg.mxu0
      %v3677 = vadd.f32 %v3376, %v3669
      %v3678 = vadd.f32 %v3377, %v3674
      %3679 = vst.msk [vmem:[%s12] sm:$0xff] %vm520, %v3677
      %3680 = vst.msk [vmem:[%s12 + $0x8] sm:$0xff] %vm520, %v3678
      // Predicated region
      $region73: #{fwd.2} parent=67 // pred_check
        %p3681 = pneg %p323
      $region74: #{fwd.2} parent=67 // pred_check_branch
        %3683 = sbr.rel (%p3681) target = $region76
      $region75: #{fwd.2} parent=67 // pred_region
        _
      $region76: #{fwd.2} parent=67 // pred_fallthru
        _
      // Predicated region
      $region77: #{fwd.2} parent=67 // pred_check
        %p3684 = pneg %p323
      $region78: #{fwd.2} parent=67 // pred_check_branch
        %3686 = sbr.rel (%p3684) target = $region80
      $region79: #{fwd.2} parent=67 // pred_region
        _
      $region80: #{fwd.2} parent=67 // pred_fallthru
        _
    $region68: #{fwd.2} parent=5 // pred_fallthru
      _
    %p3687 = scmp.le.s32.totalorder 2, %s18
    // Predicated region
    $region81: #{fwd.2} parent=5 // pred_check
      %p3688 = pneg %p3687
    $region82: #{fwd.2} parent=5 // pred_check_branch
      %3690 = sbr.rel (%p3688) target = $region84
    $region83: #{fwd.2} parent=5 // pred_region
      %s3691 = ssub.s32 %s18, 2
    $region84: #{fwd.2} parent=5 // pred_fallthru
      _
  $region6: #{fwd.2} parent=0 // loop_footer
    %s22 = sadd.s32 1, %s18
  $region7: #{fwd.2} parent=0 // loop_footer_branch
    %17 = sbr.rel target = $region3
  $region8: #{fwd.2} parent=0 // loop_exit
    _

</llo_original>
